<compile_context>
chip_gen: v7x
topology: tpu7x:2x2x1
jax: 0.10.0
libtpu: 0.0.40
codegen_flags: <defaults>
</compile_context>

<pallas_src>
import functools
import math

import jax
import jax.numpy as jnp
from jax.experimental import pallas as pl
from jax.experimental.pallas import tpu as pltpu


# ----------------------------------------------------------------------------
# Kernel 1: ONI weight orthogonalization (z -> orthonormalized weight), all f32.
# ----------------------------------------------------------------------------
_CONTRACT_DIM1 = (((1,), (1,)), ((), ()))   # A (m,k) x B (n,k) -> A @ B.T, no transpose op


def oni_weight_pallas(z, j, g, *, oni_itr=5, scaling=True):
    """weight = oni(z @ j) * g * sqrt(2); one tiny VMEM-resident kernel."""
    out_c, in_dim = z.shape
    sqrt2 = math.sqrt(2.0)

    def kernel(z_ref, j_ref, g_ref, w_ref):
        zc = jnp.dot(z_ref[...], j_ref[...], preferred_element_type=jnp.float32)
        # v = zc * rsqrt(||zc @ zc^T||_F)   (zc @ zc^T via dot_general, no .T)
        zzT = jax.lax.dot_general(zc, zc, _CONTRACT_DIM1,
                                  preferred_element_type=jnp.float32)
        v = zc * jax.lax.rsqrt(jnp.sqrt(jnp.sum(zzT * zzT)))
        s = jax.lax.dot_general(v, v, _CONTRACT_DIM1,
                                preferred_element_type=jnp.float32)
        n = s.shape[0]
        rows = jax.lax.broadcasted_iota(jnp.int32, (n, n), 0)
        cols = jax.lax.broadcasted_iota(jnp.int32, (n, n), 1)
        eye = jnp.where(rows == cols, 1.0, 0.0).astype(jnp.float32)
        b = (eye * 3.0 - s) * 0.5
        # Newton-Schulz iterations (keep in f32; bf16 can fail to converge).
        for _ in range(1, oni_itr):
            bb = jnp.dot(b, b, preferred_element_type=jnp.float32)
            bs = jnp.dot(b, s, preferred_element_type=jnp.float32)
            b = 1.5 * b - 0.5 * jnp.dot(bb, bs, preferred_element_type=jnp.float32)
        # b is symmetric (a polynomial of the symmetric s), so b.T @ v == b @ v.
        w = jnp.dot(b, v, preferred_element_type=jnp.float32)
        w = w * g_ref[...]                       # per-output-channel gain (out_c, 1)
        if scaling:
            w = w * jnp.float32(sqrt2)
        w_ref[...] = w.astype(w_ref.dtype)

    return pl.pallas_call(
        kernel,
        out_shape=jax.ShapeDtypeStruct((out_c, in_dim), jnp.float32),
        in_specs=[pl.BlockSpec(memory_space=pltpu.MemorySpace.VMEM)] * 3,
        out_specs=pl.BlockSpec(memory_space=pltpu.MemorySpace.VMEM),
    )(z.astype(jnp.float32), j.astype(jnp.float32), g.astype(jnp.float32))


# ----------------------------------------------------------------------------
# Kernel 2: NCHW conv via in-kernel padding + im2col + one deep MXU matmul.
# ----------------------------------------------------------------------------
def conv2d_im2col_pallas(x, w_im2col, bias, *, kernel_size, stride, padding,
                         compute_dtype=jnp.float32):
    N, C_in, H, W = x.shape
    C_out, in_dim = w_im2col.shape
    K = kernel_size
    assert in_dim == C_in * K * K
    H_pad, W_pad = H + 2 * padding, W + 2 * padding
    H_out = (H_pad - K) // stride + 1
    W_out = (W_pad - K) // stride + 1
    HW = H_out * W_out
    row_span = (H_out - 1) * stride + 1
    col_span = (W_out - 1) * stride + 1

    w_c = w_im2col.astype(compute_dtype)             # tiny (C_out, in_dim)
    b2 = bias.reshape(C_out, 1).astype(jnp.float32)  # broadcasts over HW lanes

    def kernel(x_ref, w_ref, b_ref, o_ref, xpad_ref):
        if padding > 0:
            # In-kernel zero padding (replaces a wrapper-side jnp.pad HBM pass).
            xpad_ref[...] = jnp.zeros((C_in, H_pad, W_pad), jnp.float32)
            xpad_ref[:, padding:padding + H, padding:padding + W] = x_ref[0]
            xv = xpad_ref[...]
        else:
            xv = x_ref[0]
        # im2col patch matrix, rows ordered (kh, kw, c) to match the permuted weight.
        pieces = []
        for kh in range(K):
            for kw in range(K):
                p = xv[:, kh:kh + row_span:stride, kw:kw + col_span:stride]
                pieces.append(p.reshape(C_in, HW))
        patches = jnp.concatenate(pieces, axis=0).astype(compute_dtype)
        # Single (C_in*K*K)-deep contraction on the MXU, f32 accumulation.
        # Result (C_out, HW) is lane-dense and already NCHW layout.
        acc = jnp.dot(w_ref[...], patches, preferred_element_type=jnp.float32)
        acc = acc + b_ref[...]
        o_ref[0] = acc.astype(o_ref.dtype)

    # TODO(synk): for very large H*W, add an H_out-tile grid axis with halo DMA
    # (pl.ANY input + pltpu.make_async_copy) plus vmem_limit_bytes so blocks fit
    # v7x's 64 MiB VMEM and both of its TensorCores get work.
    out_flat = pl.pallas_call(
        kernel,
        grid=(N,),
        in_specs=[
            pl.BlockSpec((1, C_in, H, W), lambda n: (n, 0, 0, 0)),
            pl.BlockSpec((C_out, in_dim), lambda n: (0, 0)),
            pl.BlockSpec((C_out, 1), lambda n: (0, 0)),
        ],
        out_specs=pl.BlockSpec((1, C_out, HW), lambda n: (n, 0, 0)),
        out_shape=jax.ShapeDtypeStruct((N, C_out, HW), jnp.float32),
        scratch_shapes=[pltpu.VMEM((C_in, H_pad, W_pad), jnp.float32)],
        compiler_params=pltpu.CompilerParams(dimension_semantics=("parallel",)),
    )(x.astype(jnp.float32), w_c, b2)

    # Free, metadata-only reshape: (N, C_out, H_out*W_out) is already NCHW layout.
    return out_flat.reshape(N, C_out, H_out, W_out)


# ----------------------------------------------------------------------------
# Full Conv2d_ONI forward
# ----------------------------------------------------------------------------
def conv2d_oni_forward(x, z, j, g, bias, *, in_c, kernel_size, stride, padding,
                       oni_itr=5, scaling=True, compute_dtype=jnp.float32):
    K = kernel_size
    out_c = z.shape[0]
    if oni_itr >= 1:
        weight = oni_weight_pallas(z, j, g, oni_itr=oni_itr, scaling=scaling)
    else:
        weight = z
    # Reorder the tiny (out_c, in_c*K*K) weight from PyTorch's (c, kh, kw) column
    # order into the kernel's im2col (kh, kw, c) order. ~1 KB: negligible (not an
    # activation-sized HBM pass).
    w_im2col = (weight.reshape(out_c, in_c, K, K)
                      .transpose(0, 2, 3, 1)
                      .reshape(out_c, in_c * K * K))
    return conv2d_im2col_pallas(x, w_im2col, bias, kernel_size=K, stride=stride,
                                padding=padding, compute_dtype=compute_dtype)


# ----------------------------------------------------------------------------
# Pure-JAX reference (for correctness check)
# ----------------------------------------------------------------------------
def reference_forward(x, z, j, g, bias, *, in_c, kernel_size, stride, padding,
                      oni_itr=5, scaling=True):
    hp = jax.lax.Precision.HIGHEST
    zc = jnp.dot(z, j, precision=hp)
    v = zc * jax.lax.rsqrt(jnp.linalg.norm(jnp.dot(zc, zc.T, precision=hp)))
    s = jnp.dot(v, v.T, precision=hp)
    b = (jnp.eye(s.shape[0], dtype=jnp.float32) * 3.0 - s) * 0.5
    for _ in range(1, oni_itr):
        b = 1.5 * b - 0.5 * jnp.dot(jnp.dot(b, b, precision=hp),
                                    jnp.dot(b, s, precision=hp), precision=hp)
    w = jnp.dot(b.T, v, precision=hp) * g
    if scaling:
        w = w * math.sqrt(2.0)
    wk = w.reshape(-1, in_c, kernel_size, kernel_size)
    out = jax.lax.conv_general_dilated(
        x, wk, (stride, stride), [(padding, padding), (padding, padding)],
        dimension_numbers=("NCHW", "OIHW", "NCHW"), precision=hp)
    return out + bias.reshape(1, -1, 1, 1)


if __name__ == "__main__":
    # Module hyper-params (small, consistent with Conv2d_ONI(__init__)):
    N, C_in, H, W = 2, 4, 16, 16
    C_out, K, stride, padding = 8, 3, 1, 1
    oni_itr, scaling = 5, True
    in_dim = C_in * K * K  # 36

    key = jax.random.PRNGKey(0)
    kz, kx = jax.random.split(key)

    # Deterministic parameter init mirroring __init__:
    a = jax.random.normal(kz, (in_dim, C_out), dtype=jnp.float32)
    q, _ = jnp.linalg.qr(a)
    z = q.T                                           # (C_out, in_dim), orthonormal rows
    bias = jnp.zeros((C_out,), dtype=jnp.float32)     # zeros, as in __init__
    g = jnp.ones((C_out, 1), dtype=jnp.float32)       # ones, as in __init__
    j = (jnp.eye(in_dim, dtype=jnp.float32)
         - jnp.ones((in_dim, in_dim), dtype=jnp.float32) / in_dim)  # centering buffer

    x = jax.random.normal(kx, (N, C_in, H, W), dtype=jnp.float32)

    fwd = jax.jit(functools.partial(
        conv2d_oni_forward, in_c=C_in, kernel_size=K, stride=stride,
        padding=padding, oni_itr=oni_itr, scaling=scaling))
    out = jax.block_until_ready(fwd(x, z, j, g, bias))

    ref = jax.block_until_ready(reference_forward(
        x, z, j, g, bias, in_c=C_in, kernel_size=K, stride=stride,
        padding=padding, oni_itr=oni_itr, scaling=scaling))

    assert out.shape == (N, C_out, H, W), out.shape
    assert jnp.allclose(out, ref, atol=5e-3, rtol=5e-3), (
        float(jnp.max(jnp.abs(out - ref))))

    # Optional bf16-in / f32-accumulate conv path (v6e/v5e MXU throughput, half the
    # VMEM bytes); validated at a bf16-appropriate tolerance. ONI stays f32.
    fwd_bf16 = jax.jit(functools.partial(
        conv2d_oni_forward, in_c=C_in, kernel_size=K, stride=stride,
        padding=padding, oni_itr=oni_itr, scaling=scaling,
        compute_dtype=jnp.bfloat16))
    out_bf16 = jax.block_until_ready(fwd_bf16(x, z, j, g, bias))
    assert jnp.allclose(out_bf16, ref, atol=2e-2, rtol=2e-2), (
        float(jnp.max(jnp.abs(out_bf16 - ref))))

    print("KERNEL_OK")
</pallas_src>

<mosaic_0001>
module attributes {stable_mosaic.version = 11 : i64} {
  func.func @kernel(%arg0: memref<8x36xf32, #tpu.memory_space<vmem>>, %arg1: memref<36x36xf32, #tpu.memory_space<vmem>>, %arg2: memref<8x1xf32, #tpu.memory_space<vmem>>, %arg3: memref<8x36xf32, #tpu.memory_space<vmem>>) attributes {dimension_semantics = [], scalar_prefetch = 0 : i64, scratch_operands = 0 : i64, tpu.core_type = #tpu.core_type<tc>} {
    %c0 = arith.constant 0 : index
    %c0_0 = arith.constant 0 : index
    %0 = vector.load %arg0[%c0, %c0_0] : memref<8x36xf32, #tpu.memory_space<vmem>>, vector<8x36xf32>
    %c0_1 = arith.constant 0 : index
    %c0_2 = arith.constant 0 : index
    %1 = vector.load %arg1[%c0_1, %c0_2] : memref<36x36xf32, #tpu.memory_space<vmem>>, vector<36x36xf32>
    %cst = arith.constant dense<0.000000e+00> : vector<8x36xf32>
    %2 = tpu.matmul %0, %1, %cst {dimension_numbers = #tpu.dot_dimension_numbers<[1], [0], [0], [1], [0, 0, 1, 1], [], []>} : vector<8x36xf32>, vector<36x36xf32>, vector<8x36xf32> -> vector<8x36xf32>
    %cst_3 = arith.constant dense<0.000000e+00> : vector<8x8xf32>
    %3 = tpu.matmul %2, %2, %cst_3 {dimension_numbers = #tpu.dot_dimension_numbers<[1], [1], [0], [0], [0, 0, 1, 0], [], []>} : vector<8x36xf32>, vector<8x36xf32>, vector<8x8xf32> -> vector<8x8xf32>
    %4 = arith.mulf %3, %3 : vector<8x8xf32>
    %5 = vector.shape_cast %4 : vector<8x8xf32> to vector<1x8x8xf32>
    %cst_4 = arith.constant dense<0.000000e+00> : vector<1xf32>
    %6 = vector.multi_reduction <add>, %5, %cst_4 [1, 2] : vector<1x8x8xf32> to vector<1xf32>
    %7 = vector.shape_cast %6 : vector<1xf32> to vector<1x1x1xf32>
    %8 = vector.extract %7[0, 0, 0] : f32 from vector<1x1x1xf32>
    %9 = math.sqrt %8 : f32
    %10 = math.rsqrt %9 : f32
    %11 = vector.broadcast %10 : f32 to vector<8x36xf32>
    %12 = arith.mulf %2, %11 : vector<8x36xf32>
    %cst_5 = arith.constant dense<0.000000e+00> : vector<8x8xf32>
    %13 = tpu.matmul %12, %12, %cst_5 {dimension_numbers = #tpu.dot_dimension_numbers<[1], [1], [0], [0], [0, 0, 1, 0], [], []>} : vector<8x36xf32>, vector<8x36xf32>, vector<8x8xf32> -> vector<8x8xf32>
    %14 = tpu.iota {dimensions = array<i32: 0>} : vector<8x8xi32>
    %15 = tpu.iota {dimensions = array<i32: 1>} : vector<8x8xi32>
    %16 = arith.cmpi eq, %14, %15 : vector<8x8xi32>
    %cst_6 = arith.constant 1.000000e+00 : f32
    %cst_7 = arith.constant 0.000000e+00 : f32
    %17 = vector.broadcast %cst_6 : f32 to vector<8x8xf32>
    %18 = vector.broadcast %cst_7 : f32 to vector<8x8xf32>
    %19 = arith.select %16, %17, %18 : vector<8x8xi1>, vector<8x8xf32>
    %cst_8 = arith.constant 3.000000e+00 : f32
    %20 = vector.broadcast %cst_8 : f32 to vector<8x8xf32>
    %21 = arith.mulf %19, %20 : vector<8x8xf32>
    %22 = arith.subf %21, %13 : vector<8x8xf32>
    %cst_9 = arith.constant 5.000000e-01 : f32
    %23 = vector.broadcast %cst_9 : f32 to vector<8x8xf32>
    %24 = arith.mulf %22, %23 : vector<8x8xf32>
    %cst_10 = arith.constant dense<0.000000e+00> : vector<8x8xf32>
    %25 = tpu.matmul %24, %24, %cst_10 {dimension_numbers = #tpu.dot_dimension_numbers<[1], [0], [0], [1], [0, 0, 1, 1], [], []>} : vector<8x8xf32>, vector<8x8xf32>, vector<8x8xf32> -> vector<8x8xf32>
    %cst_11 = arith.constant dense<0.000000e+00> : vector<8x8xf32>
    %26 = tpu.matmul %24, %13, %cst_11 {dimension_numbers = #tpu.dot_dimension_numbers<[1], [0], [0], [1], [0, 0, 1, 1], [], []>} : vector<8x8xf32>, vector<8x8xf32>, vector<8x8xf32> -> vector<8x8xf32>
    %cst_12 = arith.constant 1.500000e+00 : f32
    %27 = vector.broadcast %cst_12 : f32 to vector<8x8xf32>
    %28 = arith.mulf %27, %24 : vector<8x8xf32>
    %cst_13 = arith.constant dense<0.000000e+00> : vector<8x8xf32>
    %29 = tpu.matmul %25, %26, %cst_13 {dimension_numbers = #tpu.dot_dimension_numbers<[1], [0], [0], [1], [0, 0, 1, 1], [], []>} : vector<8x8xf32>, vector<8x8xf32>, vector<8x8xf32> -> vector<8x8xf32>
    %cst_14 = arith.constant 5.000000e-01 : f32
    %30 = vector.broadcast %cst_14 : f32 to vector<8x8xf32>
    %31 = arith.mulf %30, %29 : vector<8x8xf32>
    %32 = arith.subf %28, %31 : vector<8x8xf32>
    %cst_15 = arith.constant dense<0.000000e+00> : vector<8x8xf32>
    %33 = tpu.matmul %32, %32, %cst_15 {dimension_numbers = #tpu.dot_dimension_numbers<[1], [0], [0], [1], [0, 0, 1, 1], [], []>} : vector<8x8xf32>, vector<8x8xf32>, vector<8x8xf32> -> vector<8x8xf32>
    %cst_16 = arith.constant dense<0.000000e+00> : vector<8x8xf32>
    %34 = tpu.matmul %32, %13, %cst_16 {dimension_numbers = #tpu.dot_dimension_numbers<[1], [0], [0], [1], [0, 0, 1, 1], [], []>} : vector<8x8xf32>, vector<8x8xf32>, vector<8x8xf32> -> vector<8x8xf32>
    %cst_17 = arith.constant 1.500000e+00 : f32
    %35 = vector.broadcast %cst_17 : f32 to vector<8x8xf32>
    %36 = arith.mulf %35, %32 : vector<8x8xf32>
    %cst_18 = arith.constant dense<0.000000e+00> : vector<8x8xf32>
    %37 = tpu.matmul %33, %34, %cst_18 {dimension_numbers = #tpu.dot_dimension_numbers<[1], [0], [0], [1], [0, 0, 1, 1], [], []>} : vector<8x8xf32>, vector<8x8xf32>, vector<8x8xf32> -> vector<8x8xf32>
    %cst_19 = arith.constant 5.000000e-01 : f32
    %38 = vector.broadcast %cst_19 : f32 to vector<8x8xf32>
    %39 = arith.mulf %38, %37 : vector<8x8xf32>
    %40 = arith.subf %36, %39 : vector<8x8xf32>
    %cst_20 = arith.constant dense<0.000000e+00> : vector<8x8xf32>
    %41 = tpu.matmul %40, %40, %cst_20 {dimension_numbers = #tpu.dot_dimension_numbers<[1], [0], [0], [1], [0, 0, 1, 1], [], []>} : vector<8x8xf32>, vector<8x8xf32>, vector<8x8xf32> -> vector<8x8xf32>
    %cst_21 = arith.constant dense<0.000000e+00> : vector<8x8xf32>
    %42 = tpu.matmul %40, %13, %cst_21 {dimension_numbers = #tpu.dot_dimension_numbers<[1], [0], [0], [1], [0, 0, 1, 1], [], []>} : vector<8x8xf32>, vector<8x8xf32>, vector<8x8xf32> -> vector<8x8xf32>
    %cst_22 = arith.constant 1.500000e+00 : f32
    %43 = vector.broadcast %cst_22 : f32 to vector<8x8xf32>
    %44 = arith.mulf %43, %40 : vector<8x8xf32>
    %cst_23 = arith.constant dense<0.000000e+00> : vector<8x8xf32>
    %45 = tpu.matmul %41, %42, %cst_23 {dimension_numbers = #tpu.dot_dimension_numbers<[1], [0], [0], [1], [0, 0, 1, 1], [], []>} : vector<8x8xf32>, vector<8x8xf32>, vector<8x8xf32> -> vector<8x8xf32>
    %cst_24 = arith.constant 5.000000e-01 : f32
    %46 = vector.broadcast %cst_24 : f32 to vector<8x8xf32>
    %47 = arith.mulf %46, %45 : vector<8x8xf32>
    %48 = arith.subf %44, %47 : vector<8x8xf32>
    %cst_25 = arith.constant dense<0.000000e+00> : vector<8x8xf32>
    %49 = tpu.matmul %48, %48, %cst_25 {dimension_numbers = #tpu.dot_dimension_numbers<[1], [0], [0], [1], [0, 0, 1, 1], [], []>} : vector<8x8xf32>, vector<8x8xf32>, vector<8x8xf32> -> vector<8x8xf32>
    %cst_26 = arith.constant dense<0.000000e+00> : vector<8x8xf32>
    %50 = tpu.matmul %48, %13, %cst_26 {dimension_numbers = #tpu.dot_dimension_numbers<[1], [0], [0], [1], [0, 0, 1, 1], [], []>} : vector<8x8xf32>, vector<8x8xf32>, vector<8x8xf32> -> vector<8x8xf32>
    %cst_27 = arith.constant 1.500000e+00 : f32
    %51 = vector.broadcast %cst_27 : f32 to vector<8x8xf32>
    %52 = arith.mulf %51, %48 : vector<8x8xf32>
    %cst_28 = arith.constant dense<0.000000e+00> : vector<8x8xf32>
    %53 = tpu.matmul %49, %50, %cst_28 {dimension_numbers = #tpu.dot_dimension_numbers<[1], [0], [0], [1], [0, 0, 1, 1], [], []>} : vector<8x8xf32>, vector<8x8xf32>, vector<8x8xf32> -> vector<8x8xf32>
    %cst_29 = arith.constant 5.000000e-01 : f32
    %54 = vector.broadcast %cst_29 : f32 to vector<8x8xf32>
    %55 = arith.mulf %54, %53 : vector<8x8xf32>
    %56 = arith.subf %52, %55 : vector<8x8xf32>
    %cst_30 = arith.constant dense<0.000000e+00> : vector<8x36xf32>
    %57 = tpu.matmul %56, %12, %cst_30 {dimension_numbers = #tpu.dot_dimension_numbers<[1], [0], [0], [1], [0, 0, 1, 1], [], []>} : vector<8x8xf32>, vector<8x36xf32>, vector<8x36xf32> -> vector<8x36xf32>
    %c0_31 = arith.constant 0 : index
    %c0_32 = arith.constant 0 : index
    %58 = vector.load %arg2[%c0_31, %c0_32] : memref<8x1xf32, #tpu.memory_space<vmem>>, vector<8x1xf32>
    %59 = vector.broadcast %58 : vector<8x1xf32> to vector<8x36xf32>
    %60 = arith.mulf %57, %59 : vector<8x36xf32>
    %cst_33 = arith.constant 1.41421354 : f32
    %61 = vector.broadcast %cst_33 : f32 to vector<8x36xf32>
    %62 = arith.mulf %60, %61 : vector<8x36xf32>
    %c0_34 = arith.constant 0 : index
    %c0_35 = arith.constant 0 : index
    %63 = vector.load %arg3[%c0_34, %c0_35] : memref<8x36xf32, #tpu.memory_space<vmem>>, vector<8x36xf32>
    tpu.vector_store %arg3[%c0_34, %c0_35], %62 {strides = array<i32>} : memref<8x36xf32, #tpu.memory_space<vmem>>, vector<8x36xf32>,
    return
  }
}

module attributes {stable_mosaic.version = 11 : i64} {
  func.func @kernel(%arg0: i32, %arg1: memref<1x4x16x16xf32, #tpu.memory_space<vmem>>, %arg2: memref<8x36xf32, #tpu.memory_space<vmem>>, %arg3: memref<8x1xf32, #tpu.memory_space<vmem>>, %arg4: memref<1x8x256xf32, #tpu.memory_space<vmem>>, %arg5: memref<4x18x18xf32, #tpu.memory_space<vmem>>) attributes {dimension_semantics = [#tpu.dimension_semantics<parallel>], iteration_bounds = array<i64: 2>, scalar_prefetch = 0 : i64, scratch_operands = 1 : i64, tpu.core_type = #tpu.core_type<tc>, window_params = [{transform_indices = @transform_0, window_bounds = array<i64: 1, 4, 16, 16>}, {pipeline_mode = #tpu.pipeline_mode<synchronous>, transform_indices = @transform_1, window_bounds = array<i64: 8, 36>}, {pipeline_mode = #tpu.pipeline_mode<synchronous>, transform_indices = @transform_2, window_bounds = array<i64: 8, 1>}, {transform_indices = @transform_3, window_bounds = array<i64: 1, 8, 256>}]} {
    %cst = arith.constant 0.000000e+00 : f32
    %0 = vector.broadcast %cst : f32 to vector<4x18x18xf32>
    %c0 = arith.constant 0 : index
    %c0_0 = arith.constant 0 : index
    %c0_1 = arith.constant 0 : index
    %1 = vector.load %arg5[%c0, %c0_0, %c0_1] : memref<4x18x18xf32, #tpu.memory_space<vmem>>, vector<4x18x18xf32>
    tpu.vector_store %arg5[%c0, %c0_0, %c0_1], %0 {strides = array<i32>} : memref<4x18x18xf32, #tpu.memory_space<vmem>>, vector<4x18x18xf32>,
    %c0_2 = arith.constant 0 : index
    %c0_3 = arith.constant 0 : index
    %c0_4 = arith.constant 0 : index
    %c0_5 = arith.constant 0 : index
    %2 = vector.load %arg1[%c0_2, %c0_3, %c0_4, %c0_5] : memref<1x4x16x16xf32, #tpu.memory_space<vmem>>, vector<1x4x16x16xf32>
    %3 = vector.shape_cast %2 : vector<1x4x16x16xf32> to vector<4x16x16xf32>
    %c0_6 = arith.constant 0 : index
    %c1 = arith.constant 1 : index
    %c1_7 = arith.constant 1 : index
    %4 = vector.load %arg5[%c0_6, %c1, %c1_7] : memref<4x18x18xf32, #tpu.memory_space<vmem>>, vector<4x16x16xf32>
    tpu.vector_store %arg5[%c0_6, %c1, %c1_7], %3 {strides = array<i32>} : memref<4x18x18xf32, #tpu.memory_space<vmem>>, vector<4x16x16xf32>,
    %c0_8 = arith.constant 0 : index
    %c0_9 = arith.constant 0 : index
    %c0_10 = arith.constant 0 : index
    %5 = vector.load %arg5[%c0_8, %c0_9, %c0_10] : memref<4x18x18xf32, #tpu.memory_space<vmem>>, vector<4x18x18xf32>
    %6 = vector.extract_strided_slice %5 {offsets = [0, 0, 0], sizes = [4, 16, 16], strides = [1, 1, 1]} : vector<4x18x18xf32> to vector<4x16x16xf32>
    %7 = vector.shape_cast %6 : vector<4x16x16xf32> to vector<4x256xf32>
    %8 = vector.extract_strided_slice %5 {offsets = [0, 0, 1], sizes = [4, 16, 16], strides = [1, 1, 1]} : vector<4x18x18xf32> to vector<4x16x16xf32>
    %9 = vector.shape_cast %8 : vector<4x16x16xf32> to vector<4x256xf32>
    %10 = vector.extract_strided_slice %5 {offsets = [0, 0, 2], sizes = [4, 16, 16], strides = [1, 1, 1]} : vector<4x18x18xf32> to vector<4x16x16xf32>
    %11 = vector.shape_cast %10 : vector<4x16x16xf32> to vector<4x256xf32>
    %12 = vector.extract_strided_slice %5 {offsets = [0, 1, 0], sizes = [4, 16, 16], strides = [1, 1, 1]} : vector<4x18x18xf32> to vector<4x16x16xf32>
    %13 = vector.shape_cast %12 : vector<4x16x16xf32> to vector<4x256xf32>
    %14 = vector.extract_strided_slice %5 {offsets = [0, 1, 1], sizes = [4, 16, 16], strides = [1, 1, 1]} : vector<4x18x18xf32> to vector<4x16x16xf32>
    %15 = vector.shape_cast %14 : vector<4x16x16xf32> to vector<4x256xf32>
    %16 = vector.extract_strided_slice %5 {offsets = [0, 1, 2], sizes = [4, 16, 16], strides = [1, 1, 1]} : vector<4x18x18xf32> to vector<4x16x16xf32>
    %17 = vector.shape_cast %16 : vector<4x16x16xf32> to vector<4x256xf32>
    %18 = vector.extract_strided_slice %5 {offsets = [0, 2, 0], sizes = [4, 16, 16], strides = [1, 1, 1]} : vector<4x18x18xf32> to vector<4x16x16xf32>
    %19 = vector.shape_cast %18 : vector<4x16x16xf32> to vector<4x256xf32>
    %20 = vector.extract_strided_slice %5 {offsets = [0, 2, 1], sizes = [4, 16, 16], strides = [1, 1, 1]} : vector<4x18x18xf32> to vector<4x16x16xf32>
    %21 = vector.shape_cast %20 : vector<4x16x16xf32> to vector<4x256xf32>
    %22 = vector.extract_strided_slice %5 {offsets = [0, 2, 2], sizes = [4, 16, 16], strides = [1, 1, 1]} : vector<4x18x18xf32> to vector<4x16x16xf32>
    %23 = vector.shape_cast %22 : vector<4x16x16xf32> to vector<4x256xf32>
    %24 = tpu.concatenate %7, %9, %11, %13, %15, %17, %19, %21, %23 in 0 : vector<4x256xf32>, vector<4x256xf32>, vector<4x256xf32>, vector<4x256xf32>, vector<4x256xf32>, vector<4x256xf32>, vector<4x256xf32>, vector<4x256xf32>, vector<4x256xf32> -> vector<36x256xf32>
    %c0_11 = arith.constant 0 : index
    %c0_12 = arith.constant 0 : index
    %25 = vector.load %arg2[%c0_11, %c0_12] : memref<8x36xf32, #tpu.memory_space<vmem>>, vector<8x36xf32>
    %cst_13 = arith.constant dense<0.000000e+00> : vector<8x256xf32>
    %26 = tpu.matmul %25, %24, %cst_13 {dimension_numbers = #tpu.dot_dimension_numbers<[1], [0], [0], [1], [0, 0, 1, 1], [], []>} : vector<8x36xf32>, vector<36x256xf32>, vector<8x256xf32> -> vector<8x256xf32>
    %c0_14 = arith.constant 0 : index
    %c0_15 = arith.constant 0 : index
    %27 = vector.load %arg3[%c0_14, %c0_15] : memref<8x1xf32, #tpu.memory_space<vmem>>, vector<8x1xf32>
    %28 = vector.broadcast %27 : vector<8x1xf32> to vector<8x256xf32>
    %29 = arith.addf %26, %28 : vector<8x256xf32>
    %c0_16 = arith.constant 0 : index
    %c0_17 = arith.constant 0 : index
    %c0_18 = arith.constant 0 : index
    %30 = vector.load %arg4[%c0_16, %c0_17, %c0_18] : memref<1x8x256xf32, #tpu.memory_space<vmem>>, vector<1x8x256xf32>
    %31 = vector.shape_cast %30 : vector<1x8x256xf32> to vector<8x256xf32>
    %32 = vector.shape_cast %29 : vector<8x256xf32> to vector<1x8x256xf32>
    tpu.vector_store %arg4[%c0_16, %c0_17, %c0_18], %32 {strides = array<i32>} : memref<1x8x256xf32, #tpu.memory_space<vmem>>, vector<1x8x256xf32>,
    return
  }
  func.func @transform_0(%arg0: i32) -> (i32, i32, i32, i32) {
    %c0_i32 = arith.constant 0 : i32
    %c0_i32_0 = arith.constant 0 : i32
    %c0_i32_1 = arith.constant 0 : i32
    %c0_i32_2 = arith.constant 0 : i32
    return %arg0, %c0_i32, %c0_i32_0, %c0_i32_1 : i32, i32, i32, i32
  }
  func.func @transform_1(%arg0: i32) -> (i32, i32) {
    %c0_i32 = arith.constant 0 : i32
    %c0_i32_0 = arith.constant 0 : i32
    %c0_i32_1 = arith.constant 0 : i32
    return %c0_i32, %c0_i32_0 : i32, i32
  }
  func.func @transform_2(%arg0: i32) -> (i32, i32) {
    %c0_i32 = arith.constant 0 : i32
    %c0_i32_0 = arith.constant 0 : i32
    %c0_i32_1 = arith.constant 0 : i32
    return %c0_i32, %c0_i32_0 : i32, i32
  }
  func.func @transform_3(%arg0: i32) -> (i32, i32, i32) {
    %c0_i32 = arith.constant 0 : i32
    %c0_i32_0 = arith.constant 0 : i32
    %c0_i32_1 = arith.constant 0 : i32
    return %arg0, %c0_i32, %c0_i32_0 : i32, i32, i32
  }
}

</mosaic_0001>

<llo_original>
// kernel: conv2d_oni_forward.2
$region0: #{conv2d_oni_forward.2}
  #allocation0 [shape = 'u32[]', space=smem, size = 0x4, offset = 0x4, fixed_abs, tag = 'smem constant byte address 0x4 - core index']
  #allocation1 [shape = 'u32[144,128]{1,0:T(1,128)}', space=vmem, size = 0x12000, scoped, tag = 'internal scratch']
  %s0 = inlined_call_operand.vmem [shape: f32[8,36], index: 0, kind: input, shape index: {}]
  %s1 = inlined_call_operand.hbm [shape: f32[36,36], index: 1, kind: input, shape index: {}]
  %s2 = inlined_call_operand.vmem [shape: f32[8,1], index: 2, kind: input, shape index: {}]
  %s3 = inlined_call_operand.vmem [shape: f32[8,36], index: 3, kind: output, shape index: {}]
  %s4 = sld [smem:[#allocation0]]
  $region26: #{conv2d_oni_forward.2} parent=0
    _
  %s6 = ssub.s32 1, %s4
  %s7 = scalar_select 0, %s6, %s4
  $region1: #{conv2d_oni_forward.2} parent=0
    #allocation2 [shape = 'u8[20480]{0}', space=vmem, size = 0x5000, scoped, tag = 'input window, operand 1, single buffered']
    #allocation3 [shape = 's32[1]{0}', space=sflag, size = 0x4, scoped, tag = 'scoped memory for conv2d_oni_forward.2']
    %8 = vsyncpa [#allocation3], 0
    // Predicated region
    $region2: #{conv2d_oni_forward.2} parent=1 // pred_check
      _
    $region3: #{conv2d_oni_forward.2} parent=1 // pred_check_branch
      %10 = sbr.rel (0) target = $region5
    $region4: #{conv2d_oni_forward.2} parent=1 // pred_region
      _
    $region5: #{conv2d_oni_forward.2} parent=1 // pred_fallthru
      _
    // Predicated region
    $region6: #{conv2d_oni_forward.2} parent=1 // pred_check
      _
    $region7: #{conv2d_oni_forward.2} parent=1 // pred_check_branch
      %12 = sbr.rel (0) target = $region9
    $region8: #{conv2d_oni_forward.2} parent=1 // pred_region
      %s14 = ssub.s32 640, 640
      %15 = vsyncadd [#allocation3], %s14
      %s16 = sshll.u32 [#allocation2], 4
      %s17 = int_to_ptr.vmem [resolvable:$true] %s16
      %22 = dma.hbm_to_vmem [thread:$0]  %s1, 640, %s17, [#allocation3], 128, 128, 8
    $region9: #{conv2d_oni_forward.2} parent=1 // pred_fallthru
      _
    // Predicated region
    $region10: #{conv2d_oni_forward.2} parent=1 // pred_check
      _
    $region11: #{conv2d_oni_forward.2} parent=1 // pred_check_branch
      %24 = sbr.rel (0) target = $region13
    $region12: #{conv2d_oni_forward.2} parent=1 // pred_region
      _
    $region13: #{conv2d_oni_forward.2} parent=1 // pred_fallthru
      _
    // Predicated region
    $region14: #{conv2d_oni_forward.2} parent=1 // pred_check
      _
    $region15: #{conv2d_oni_forward.2} parent=1 // pred_check_branch
      %26 = sbr.rel (0) target = $region17
    $region16: #{conv2d_oni_forward.2} parent=1 // pred_region
      %27 = dma.done [#allocation3], 640
    $region17: #{conv2d_oni_forward.2} parent=1 // pred_fallthru
      _
    %v28 = vld [vmem:[%s0] sm:$0xff]
    %v29 = vld [vmem:[#allocation2] sm:$0xff]
    %v30 = vld [vmem:[#allocation2 + $0x8] sm:$0xff]
    %v31 = vld [vmem:[#allocation2 + $0x10] sm:$0xff]
    %v32 = vld [vmem:[#allocation2 + $0x18] sm:$0xff]
    %v33 = vld [vmem:[#allocation2 + $0x20] sm:$0xf]
    %vm34 = vcmask 293888
    %v36 = vsel %vm34, %v28, 0
    %vm38 = vcmask 1043456
    %v40 = vsel %vm38, %v33, 0
    %42 = vmatprep.subr.mxu0 0.0
    %43 = vmatpush1.msra.mxu0 %v29
    %44 = vmatprep.subr.mxu0 0.0
    %45 = vmatpush1.msra.mxu0 %v30
    %46 = vmatprep.subr.mxu0 0.0
    %47 = vmatpush1.msra.mxu0 %v31
    %48 = vmatprep.subr.mxu0 0.0
    %49 = vmatpush1.msra.mxu0 %v32
    %50 = vmatprep.subr.mxu0 0.0
    %51 = vmatpush1.msra.mxu0 %v40
    %52 = vmatprep.subr.mxu0 0.0
    %53 = vmatpush1.msra.mxu0 0.0
    %54 = vmatprep.subr.mxu0 0.0
    %55 = vmatpush1.msra.mxu0 0.0
    %56 = vmatprep.subr.mxu0 0.0
    %57 = vmatpush1.msra.mxu0 0.0
    %58 = vmatprep.subr.mxu0 0.0
    %59 = vmatpush1.msra.mxu0 0.0
    %60 = vmatprep.subr.mxu0 0.0
    %61 = vmatpush1.msra.mxu0 0.0
    %62 = vmatprep.subr.mxu0 0.0
    %63 = vmatpush1.msra.mxu0 0.0
    %64 = vmatprep.subr.mxu0 0.0
    %65 = vmatpush1.msra.mxu0 0.0
    %66 = vmatprep.subr.mxu0 0.0
    %67 = vmatpush1.msra.mxu0 0.0
    %68 = vmatprep.subr.mxu0 0.0
    %69 = vmatpush1.msra.mxu0 0.0
    %70 = vmatprep.subr.mxu0 0.0
    %71 = vmatpush1.msra.mxu0 0.0
    %72 = vmatprep.subr.mxu0 0.0
    %73 = vmatpush1.msra.mxu0 0.0
    %74 = vmatprep.subr.mxu0 0.0
    %75 = vmatpush1.msra.mxu0 0.0
    %76 = vmatprep.subr.mxu0 0.0
    %77 = vmatpush1.msra.mxu0 0.0
    %78 = vmatprep.subr.mxu0 0.0
    %79 = vmatpush1.msra.mxu0 0.0
    %80 = vmatprep.subr.mxu0 0.0
    %81 = vmatpush1.msra.mxu0 0.0
    %82 = vmatprep.subr.mxu0 0.0
    %83 = vmatpush1.msra.mxu0 0.0
    %84 = vmatprep.subr.mxu0 0.0
    %85 = vmatpush1.msra.mxu0 0.0
    %86 = vmatprep.subr.mxu0 0.0
    %87 = vmatpush1.msra.mxu0 0.0
    %88 = vmatprep.subr.mxu0 0.0
    %89 = vmatpush1.msra.mxu0 0.0
    %90 = vmatprep.subr.mxu0 0.0
    %91 = vmatpush1.msra.mxu0 0.0
    %92 = vmatprep.subr.mxu0 0.0
    %93 = vmatpush1.msra.mxu0 0.0
    %94 = vmatprep.subr.mxu0 0.0
    %95 = vmatpush1.msra.mxu0 0.0
    %96 = vmatprep.subr.mxu0 0.0
    %97 = vmatpush1.msra.mxu0 0.0
    %98 = vmatprep.subr.mxu0 0.0
    %99 = vmatpush1.msra.mxu0 0.0
    %100 = vmatprep.subr.mxu0 0.0
    %101 = vmatpush1.msra.mxu0 0.0
    %102 = vmatprep.subr.mxu0 0.0
    %103 = vmatpush1.msra.mxu0 0.0
    %104 = vmatprep.subr.mxu0 0.0
    %105 = vmatpush1.msra.mxu0 0.0
    %106 = vmatprep.mubr.f32.mxu0 0.0
    %107 = vmatmul.mubr.f32.gmra.mrb[0].mxu0 %v36
    %v108 = vpop.f32.mrb[0].mxu0
    %v109 = vadd.f32 0.0, %v108
    %v110 = vpop.f32.mrb[0].mxu0
    %111 = vdwg.mxu0
    %v113 = vsel %vm34, %v109, 0
    %115 = vmatprep.subr.mxu0 0.0
    %116 = vmatpush1.xpose.msra.mxu0 %v113
    %117 = vmatprep.subr.mxu0 0.0
    %118 = vmatpush1.xpose.msra.mxu0 0.0
    %119 = vmatprep.subr.mxu0 0.0
    %120 = vmatpush1.xpose.msra.mxu0 0.0
    %121 = vmatprep.subr.mxu0 0.0
    %122 = vmatpush1.xpose.msra.mxu0 0.0
    %123 = vmatprep.subr.mxu0 0.0
    %124 = vmatpush1.xpose.msra.mxu0 0.0
    %125 = vmatprep.subr.mxu0 0.0
    %126 = vmatpush1.xpose.msra.mxu0 0.0
    %127 = vmatprep.subr.mxu0 0.0
    %128 = vmatpush1.xpose.msra.mxu0 0.0
    %129 = vmatprep.subr.mxu0 0.0
    %130 = vmatpush1.xpose.msra.mxu0 0.0
    %131 = vmatprep.subr.mxu0 0.0
    %132 = vmatpush1.xpose.msra.mxu0 0.0
    %133 = vmatprep.subr.mxu0 0.0
    %134 = vmatpush1.xpose.msra.mxu0 0.0
    %135 = vmatprep.subr.mxu0 0.0
    %136 = vmatpush1.xpose.msra.mxu0 0.0
    %137 = vmatprep.subr.mxu0 0.0
    %138 = vmatpush1.xpose.msra.mxu0 0.0
    %139 = vmatprep.subr.mxu0 0.0
    %140 = vmatpush1.xpose.msra.mxu0 0.0
    %141 = vmatprep.subr.mxu0 0.0
    %142 = vmatpush1.xpose.msra.mxu0 0.0
    %143 = vmatprep.subr.mxu0 0.0
    %144 = vmatpush1.xpose.msra.mxu0 0.0
    %145 = vmatprep.subr.mxu0 0.0
    %146 = vmatpush1.xpose.msra.mxu0 0.0
    %147 = vmatprep.subr.mxu0 0.0
    %148 = vmatpush1.xpose.msra.mxu0 0.0
    %149 = vmatprep.subr.mxu0 0.0
    %150 = vmatpush1.xpose.msra.mxu0 0.0
    %151 = vmatprep.subr.mxu0 0.0
    %152 = vmatpush1.xpose.msra.mxu0 0.0
    %153 = vmatprep.subr.mxu0 0.0
    %154 = vmatpush1.xpose.msra.mxu0 0.0
    %155 = vmatprep.subr.mxu0 0.0
    %156 = vmatpush1.xpose.msra.mxu0 0.0
    %157 = vmatprep.subr.mxu0 0.0
    %158 = vmatpush1.xpose.msra.mxu0 0.0
    %159 = vmatprep.subr.mxu0 0.0
    %160 = vmatpush1.xpose.msra.mxu0 0.0
    %161 = vmatprep.subr.mxu0 0.0
    %162 = vmatpush1.xpose.msra.mxu0 0.0
    %163 = vmatprep.subr.mxu0 0.0
    %164 = vmatpush1.xpose.msra.mxu0 0.0
    %165 = vmatprep.subr.mxu0 0.0
    %166 = vmatpush1.xpose.msra.mxu0 0.0
    %167 = vmatprep.subr.mxu0 0.0
    %168 = vmatpush1.xpose.msra.mxu0 0.0
    %169 = vmatprep.subr.mxu0 0.0
    %170 = vmatpush1.xpose.msra.mxu0 0.0
    %171 = vmatprep.subr.mxu0 0.0
    %172 = vmatpush1.xpose.msra.mxu0 0.0
    %173 = vmatprep.subr.mxu0 0.0
    %174 = vmatpush1.xpose.msra.mxu0 0.0
    %175 = vmatprep.subr.mxu0 0.0
    %176 = vmatpush1.xpose.msra.mxu0 0.0
    %177 = vmatprep.subr.mxu0 0.0
    %178 = vmatpush1.xpose.msra.mxu0 0.0
    %179 = vmatprep.mubr.f32.mxu0 0.0
    %180 = vmatmul.mubr.f32.gmra.mrb[0].mxu0 %v113
    %v181 = vpop.f32.mrb[0].mxu0
    %v182 = vadd.f32 0.0, %v181
    %v183 = vpop.f32.mrb[0].mxu0
    %184 = vdwg.mxu0
    %v185 = vmul.f32 %v182, %v182
    %vm186 = vcmask 64512
    %v187 = vsel %vm186, %v185, 0.0
    %188 = vadd.xlane.f32.xlu0 %v187
    %v189 = vpop.xlane.xlu0 %188
    %v190 = vrot.slane %v189, 4
    %v191 = vadd.f32 %v189, %v190
    %v192 = vrot.slane %v191, 2
    %v193 = vadd.f32 %v191, %v192
    %v194 = vrot.slane %v193, 1
    %v195 = vadd.f32 %v193, %v194
    %s196 = vtos %v195
    %v197 = vstv %s196
    %v198 = vrsqrt.pop %v197
    %v199 = vmul.f32 %v197, %v198
    %vm200 = vcmp.eq.f32.partialorder %v197, inf
    %v201 = vsel %vm200, %v197, %v199
    %vm202 = vcmp.eq.f32.partialorder %v197, 0.0
    %v203 = vand.u32 %v197, 2147483648
    %v204 = vsel %vm202, %v203, %v201
    %s205 = vtos %v204
    %v206 = vstv %s205
    %v207 = vrsqrt.pop %v206
    %s208 = vtos %v207
    %v209 = vstv %s208
    %v210 = vmul.f32 %v109, %v209
    %v212 = vsel %vm34, %v210, 0
    %214 = vmatprep.subr.mxu0 0.0
    %215 = vmatpush1.xpose.msra.mxu0 %v212
    %216 = vmatprep.subr.mxu0 0.0
    %217 = vmatpush1.xpose.msra.mxu0 0.0
    %218 = vmatprep.subr.mxu0 0.0
    %219 = vmatpush1.xpose.msra.mxu0 0.0
    %220 = vmatprep.subr.mxu0 0.0
    %221 = vmatpush1.xpose.msra.mxu0 0.0
    %222 = vmatprep.subr.mxu0 0.0
    %223 = vmatpush1.xpose.msra.mxu0 0.0
    %224 = vmatprep.subr.mxu0 0.0
    %225 = vmatpush1.xpose.msra.mxu0 0.0
    %226 = vmatprep.subr.mxu0 0.0
    %227 = vmatpush1.xpose.msra.mxu0 0.0
    %228 = vmatprep.subr.mxu0 0.0
    %229 = vmatpush1.xpose.msra.mxu0 0.0
    %230 = vmatprep.subr.mxu0 0.0
    %231 = vmatpush1.xpose.msra.mxu0 0.0
    %232 = vmatprep.subr.mxu0 0.0
    %233 = vmatpush1.xpose.msra.mxu0 0.0
    %234 = vmatprep.subr.mxu0 0.0
    %235 = vmatpush1.xpose.msra.mxu0 0.0
    %236 = vmatprep.subr.mxu0 0.0
    %237 = vmatpush1.xpose.msra.mxu0 0.0
    %238 = vmatprep.subr.mxu0 0.0
    %239 = vmatpush1.xpose.msra.mxu0 0.0
    %240 = vmatprep.subr.mxu0 0.0
    %241 = vmatpush1.xpose.msra.mxu0 0.0
    %242 = vmatprep.subr.mxu0 0.0
    %243 = vmatpush1.xpose.msra.mxu0 0.0
    %244 = vmatprep.subr.mxu0 0.0
    %245 = vmatpush1.xpose.msra.mxu0 0.0
    %246 = vmatprep.subr.mxu0 0.0
    %247 = vmatpush1.xpose.msra.mxu0 0.0
    %248 = vmatprep.subr.mxu0 0.0
    %249 = vmatpush1.xpose.msra.mxu0 0.0
    %250 = vmatprep.subr.mxu0 0.0
    %251 = vmatpush1.xpose.msra.mxu0 0.0
    %252 = vmatprep.subr.mxu0 0.0
    %253 = vmatpush1.xpose.msra.mxu0 0.0
    %254 = vmatprep.subr.mxu0 0.0
    %255 = vmatpush1.xpose.msra.mxu0 0.0
    %256 = vmatprep.subr.mxu0 0.0
    %257 = vmatpush1.xpose.msra.mxu0 0.0
    %258 = vmatprep.subr.mxu0 0.0
    %259 = vmatpush1.xpose.msra.mxu0 0.0
    %260 = vmatprep.subr.mxu0 0.0
    %261 = vmatpush1.xpose.msra.mxu0 0.0
    %262 = vmatprep.subr.mxu0 0.0
    %263 = vmatpush1.xpose.msra.mxu0 0.0
    %264 = vmatprep.subr.mxu0 0.0
    %265 = vmatpush1.xpose.msra.mxu0 0.0
    %266 = vmatprep.subr.mxu0 0.0
    %267 = vmatpush1.xpose.msra.mxu0 0.0
    %268 = vmatprep.subr.mxu0 0.0
    %269 = vmatpush1.xpose.msra.mxu0 0.0
    %270 = vmatprep.subr.mxu0 0.0
    %271 = vmatpush1.xpose.msra.mxu0 0.0
    %272 = vmatprep.subr.mxu0 0.0
    %273 = vmatpush1.xpose.msra.mxu0 0.0
    %274 = vmatprep.subr.mxu0 0.0
    %275 = vmatpush1.xpose.msra.mxu0 0.0
    %276 = vmatprep.subr.mxu0 0.0
    %277 = vmatpush1.xpose.msra.mxu0 0.0
    %278 = vmatprep.mubr.f32.mxu0 0.0
    %279 = vmatmul.mubr.f32.gmra.mrb[0].mxu0 %v212
    %v280 = vpop.f32.mrb[0].mxu0
    %v281 = vadd.f32 0.0, %v280
    %v282 = vpop.f32.mrb[0].mxu0
    %283 = vdwg.mxu0
    %v284 = vlaneseq
    %v285 = vshrl.u32 %v284, 7
    %v286 = vlaneseq
    %v287 = vand.u32 %v286, 127
    %vm288 = vcmp.eq.s32.totalorder %v285, %v287
    %v289 = vsel %vm288, 1.0, 0.0
    %v290 = vmul.f32 %v289, 3.0
    %v291 = vsub.f32 %v290, %v281
    %v292 = vmul.f32 %v291, 0.5
    %v294 = vsel %vm186, %v292, 0
    %296 = vmatprep.subr.mxu0 0.0
    %297 = vmatpush1.msra.mxu0 %v292
    %298 = vmatprep.subr.mxu0 0.0
    %299 = vmatpush1.msra.mxu0 0.0
    %300 = vmatprep.subr.mxu0 0.0
    %301 = vmatpush1.msra.mxu0 0.0
    %302 = vmatprep.subr.mxu0 0.0
    %303 = vmatpush1.msra.mxu0 0.0
    %304 = vmatprep.subr.mxu0 0.0
    %305 = vmatpush1.msra.mxu0 0.0
    %306 = vmatprep.subr.mxu0 0.0
    %307 = vmatpush1.msra.mxu0 0.0
    %308 = vmatprep.subr.mxu0 0.0
    %309 = vmatpush1.msra.mxu0 0.0
    %310 = vmatprep.subr.mxu0 0.0
    %311 = vmatpush1.msra.mxu0 0.0
    %312 = vmatprep.subr.mxu0 0.0
    %313 = vmatpush1.msra.mxu0 0.0
    %314 = vmatprep.subr.mxu0 0.0
    %315 = vmatpush1.msra.mxu0 0.0
    %316 = vmatprep.subr.mxu0 0.0
    %317 = vmatpush1.msra.mxu0 0.0
    %318 = vmatprep.subr.mxu0 0.0
    %319 = vmatpush1.msra.mxu0 0.0
    %320 = vmatprep.subr.mxu0 0.0
    %321 = vmatpush1.msra.mxu0 0.0
    %322 = vmatprep.subr.mxu0 0.0
    %323 = vmatpush1.msra.mxu0 0.0
    %324 = vmatprep.subr.mxu0 0.0
    %325 = vmatpush1.msra.mxu0 0.0
    %326 = vmatprep.subr.mxu0 0.0
    %327 = vmatpush1.msra.mxu0 0.0
    %328 = vmatprep.subr.mxu0 0.0
    %329 = vmatpush1.msra.mxu0 0.0
    %330 = vmatprep.subr.mxu0 0.0
    %331 = vmatpush1.msra.mxu0 0.0
    %332 = vmatprep.subr.mxu0 0.0
    %333 = vmatpush1.msra.mxu0 0.0
    %334 = vmatprep.subr.mxu0 0.0
    %335 = vmatpush1.msra.mxu0 0.0
    %336 = vmatprep.subr.mxu0 0.0
    %337 = vmatpush1.msra.mxu0 0.0
    %338 = vmatprep.subr.mxu0 0.0
    %339 = vmatpush1.msra.mxu0 0.0
    %340 = vmatprep.subr.mxu0 0.0
    %341 = vmatpush1.msra.mxu0 0.0
    %342 = vmatprep.subr.mxu0 0.0
    %343 = vmatpush1.msra.mxu0 0.0
    %344 = vmatprep.subr.mxu0 0.0
    %345 = vmatpush1.msra.mxu0 0.0
    %346 = vmatprep.subr.mxu0 0.0
    %347 = vmatpush1.msra.mxu0 0.0
    %348 = vmatprep.subr.mxu0 0.0
    %349 = vmatpush1.msra.mxu0 0.0
    %350 = vmatprep.subr.mxu0 0.0
    %351 = vmatpush1.msra.mxu0 0.0
    %352 = vmatprep.subr.mxu0 0.0
    %353 = vmatpush1.msra.mxu0 0.0
    %354 = vmatprep.subr.mxu0 0.0
    %355 = vmatpush1.msra.mxu0 0.0
    %356 = vmatprep.subr.mxu0 0.0
    %357 = vmatpush1.msra.mxu0 0.0
    %358 = vmatprep.subr.mxu0 0.0
    %359 = vmatpush1.msra.mxu0 0.0
    %360 = vmatprep.mubr.f32.mxu0 0.0
    %361 = vmatmul.mubr.f32.gmra.mrb[0].mxu0 %v294
    %v362 = vpop.f32.mrb[0].mxu0
    %v363 = vadd.f32 0.0, %v362
    %v364 = vpop.f32.mrb[0].mxu0
    %365 = vdwg.mxu0
    %366 = vmatprep.subr.mxu0 0.0
    %367 = vmatpush1.msra.mxu0 %v281
    %368 = vmatprep.subr.mxu0 0.0
    %369 = vmatpush1.msra.mxu0 0.0
    %370 = vmatprep.subr.mxu0 0.0
    %371 = vmatpush1.msra.mxu0 0.0
    %372 = vmatprep.subr.mxu0 0.0
    %373 = vmatpush1.msra.mxu0 0.0
    %374 = vmatprep.subr.mxu0 0.0
    %375 = vmatpush1.msra.mxu0 0.0
    %376 = vmatprep.subr.mxu0 0.0
    %377 = vmatpush1.msra.mxu0 0.0
    %378 = vmatprep.subr.mxu0 0.0
    %379 = vmatpush1.msra.mxu0 0.0
    %380 = vmatprep.subr.mxu0 0.0
    %381 = vmatpush1.msra.mxu0 0.0
    %382 = vmatprep.subr.mxu0 0.0
    %383 = vmatpush1.msra.mxu0 0.0
    %384 = vmatprep.subr.mxu0 0.0
    %385 = vmatpush1.msra.mxu0 0.0
    %386 = vmatprep.subr.mxu0 0.0
    %387 = vmatpush1.msra.mxu0 0.0
    %388 = vmatprep.subr.mxu0 0.0
    %389 = vmatpush1.msra.mxu0 0.0
    %390 = vmatprep.subr.mxu0 0.0
    %391 = vmatpush1.msra.mxu0 0.0
    %392 = vmatprep.subr.mxu0 0.0
    %393 = vmatpush1.msra.mxu0 0.0
    %394 = vmatprep.subr.mxu0 0.0
    %395 = vmatpush1.msra.mxu0 0.0
    %396 = vmatprep.subr.mxu0 0.0
    %397 = vmatpush1.msra.mxu0 0.0
    %398 = vmatprep.subr.mxu0 0.0
    %399 = vmatpush1.msra.mxu0 0.0
    %400 = vmatprep.subr.mxu0 0.0
    %401 = vmatpush1.msra.mxu0 0.0
    %402 = vmatprep.subr.mxu0 0.0
    %403 = vmatpush1.msra.mxu0 0.0
    %404 = vmatprep.subr.mxu0 0.0
    %405 = vmatpush1.msra.mxu0 0.0
    %406 = vmatprep.subr.mxu0 0.0
    %407 = vmatpush1.msra.mxu0 0.0
    %408 = vmatprep.subr.mxu0 0.0
    %409 = vmatpush1.msra.mxu0 0.0
    %410 = vmatprep.subr.mxu0 0.0
    %411 = vmatpush1.msra.mxu0 0.0
    %412 = vmatprep.subr.mxu0 0.0
    %413 = vmatpush1.msra.mxu0 0.0
    %414 = vmatprep.subr.mxu0 0.0
    %415 = vmatpush1.msra.mxu0 0.0
    %416 = vmatprep.subr.mxu0 0.0
    %417 = vmatpush1.msra.mxu0 0.0
    %418 = vmatprep.subr.mxu0 0.0
    %419 = vmatpush1.msra.mxu0 0.0
    %420 = vmatprep.subr.mxu0 0.0
    %421 = vmatpush1.msra.mxu0 0.0
    %422 = vmatprep.subr.mxu0 0.0
    %423 = vmatpush1.msra.mxu0 0.0
    %424 = vmatprep.subr.mxu0 0.0
    %425 = vmatpush1.msra.mxu0 0.0
    %426 = vmatprep.subr.mxu0 0.0
    %427 = vmatpush1.msra.mxu0 0.0
    %428 = vmatprep.subr.mxu0 0.0
    %429 = vmatpush1.msra.mxu0 0.0
    %430 = vmatprep.mubr.f32.mxu0 0.0
    %431 = vmatmul.mubr.f32.gmra.mrb[0].mxu0 %v294
    %v432 = vpop.f32.mrb[0].mxu0
    %v433 = vadd.f32 0.0, %v432
    %v434 = vpop.f32.mrb[0].mxu0
    %435 = vdwg.mxu0
    %v436 = vmul.f32 %v292, 1.5
    %v438 = vsel %vm186, %v363, 0
    %440 = vmatprep.subr.mxu0 0.0
    %441 = vmatpush1.msra.mxu0 %v433
    %442 = vmatprep.subr.mxu0 0.0
    %443 = vmatpush1.msra.mxu0 0.0
    %444 = vmatprep.subr.mxu0 0.0
    %445 = vmatpush1.msra.mxu0 0.0
    %446 = vmatprep.subr.mxu0 0.0
    %447 = vmatpush1.msra.mxu0 0.0
    %448 = vmatprep.subr.mxu0 0.0
    %449 = vmatpush1.msra.mxu0 0.0
    %450 = vmatprep.subr.mxu0 0.0
    %451 = vmatpush1.msra.mxu0 0.0
    %452 = vmatprep.subr.mxu0 0.0
    %453 = vmatpush1.msra.mxu0 0.0
    %454 = vmatprep.subr.mxu0 0.0
    %455 = vmatpush1.msra.mxu0 0.0
    %456 = vmatprep.subr.mxu0 0.0
    %457 = vmatpush1.msra.mxu0 0.0
    %458 = vmatprep.subr.mxu0 0.0
    %459 = vmatpush1.msra.mxu0 0.0
    %460 = vmatprep.subr.mxu0 0.0
    %461 = vmatpush1.msra.mxu0 0.0
    %462 = vmatprep.subr.mxu0 0.0
    %463 = vmatpush1.msra.mxu0 0.0
    %464 = vmatprep.subr.mxu0 0.0
    %465 = vmatpush1.msra.mxu0 0.0
    %466 = vmatprep.subr.mxu0 0.0
    %467 = vmatpush1.msra.mxu0 0.0
    %468 = vmatprep.subr.mxu0 0.0
    %469 = vmatpush1.msra.mxu0 0.0
    %470 = vmatprep.subr.mxu0 0.0
    %471 = vmatpush1.msra.mxu0 0.0
    %472 = vmatprep.subr.mxu0 0.0
    %473 = vmatpush1.msra.mxu0 0.0
    %474 = vmatprep.subr.mxu0 0.0
    %475 = vmatpush1.msra.mxu0 0.0
    %476 = vmatprep.subr.mxu0 0.0
    %477 = vmatpush1.msra.mxu0 0.0
    %478 = vmatprep.subr.mxu0 0.0
    %479 = vmatpush1.msra.mxu0 0.0
    %480 = vmatprep.subr.mxu0 0.0
    %481 = vmatpush1.msra.mxu0 0.0
    %482 = vmatprep.subr.mxu0 0.0
    %483 = vmatpush1.msra.mxu0 0.0
    %484 = vmatprep.subr.mxu0 0.0
    %485 = vmatpush1.msra.mxu0 0.0
    %486 = vmatprep.subr.mxu0 0.0
    %487 = vmatpush1.msra.mxu0 0.0
    %488 = vmatprep.subr.mxu0 0.0
    %489 = vmatpush1.msra.mxu0 0.0
    %490 = vmatprep.subr.mxu0 0.0
    %491 = vmatpush1.msra.mxu0 0.0
    %492 = vmatprep.subr.mxu0 0.0
    %493 = vmatpush1.msra.mxu0 0.0
    %494 = vmatprep.subr.mxu0 0.0
    %495 = vmatpush1.msra.mxu0 0.0
    %496 = vmatprep.subr.mxu0 0.0
    %497 = vmatpush1.msra.mxu0 0.0
    %498 = vmatprep.subr.mxu0 0.0
    %499 = vmatpush1.msra.mxu0 0.0
    %500 = vmatprep.subr.mxu0 0.0
    %501 = vmatpush1.msra.mxu0 0.0
    %502 = vmatprep.subr.mxu0 0.0
    %503 = vmatpush1.msra.mxu0 0.0
    %504 = vmatprep.mubr.f32.mxu0 0.0
    %505 = vmatmul.mubr.f32.gmra.mrb[0].mxu0 %v438
    %v506 = vpop.f32.mrb[0].mxu0
    %v507 = vadd.f32 0.0, %v506
    %v508 = vpop.f32.mrb[0].mxu0
    %509 = vdwg.mxu0
    %v510 = vmul.f32 %v507, 0.5
    %v511 = vsub.f32 %v436, %v510
    %v513 = vsel %vm186, %v511, 0
    %515 = vmatprep.subr.mxu0 0.0
    %516 = vmatpush1.msra.mxu0 %v511
    %517 = vmatprep.subr.mxu0 0.0
    %518 = vmatpush1.msra.mxu0 0.0
    %519 = vmatprep.subr.mxu0 0.0
    %520 = vmatpush1.msra.mxu0 0.0
    %521 = vmatprep.subr.mxu0 0.0
    %522 = vmatpush1.msra.mxu0 0.0
    %523 = vmatprep.subr.mxu0 0.0
    %524 = vmatpush1.msra.mxu0 0.0
    %525 = vmatprep.subr.mxu0 0.0
    %526 = vmatpush1.msra.mxu0 0.0
    %527 = vmatprep.subr.mxu0 0.0
    %528 = vmatpush1.msra.mxu0 0.0
    %529 = vmatprep.subr.mxu0 0.0
    %530 = vmatpush1.msra.mxu0 0.0
    %531 = vmatprep.subr.mxu0 0.0
    %532 = vmatpush1.msra.mxu0 0.0
    %533 = vmatprep.subr.mxu0 0.0
    %534 = vmatpush1.msra.mxu0 0.0
    %535 = vmatprep.subr.mxu0 0.0
    %536 = vmatpush1.msra.mxu0 0.0
    %537 = vmatprep.subr.mxu0 0.0
    %538 = vmatpush1.msra.mxu0 0.0
    %539 = vmatprep.subr.mxu0 0.0
    %540 = vmatpush1.msra.mxu0 0.0
    %541 = vmatprep.subr.mxu0 0.0
    %542 = vmatpush1.msra.mxu0 0.0
    %543 = vmatprep.subr.mxu0 0.0
    %544 = vmatpush1.msra.mxu0 0.0
    %545 = vmatprep.subr.mxu0 0.0
    %546 = vmatpush1.msra.mxu0 0.0
    %547 = vmatprep.subr.mxu0 0.0
    %548 = vmatpush1.msra.mxu0 0.0
    %549 = vmatprep.subr.mxu0 0.0
    %550 = vmatpush1.msra.mxu0 0.0
    %551 = vmatprep.subr.mxu0 0.0
    %552 = vmatpush1.msra.mxu0 0.0
    %553 = vmatprep.subr.mxu0 0.0
    %554 = vmatpush1.msra.mxu0 0.0
    %555 = vmatprep.subr.mxu0 0.0
    %556 = vmatpush1.msra.mxu0 0.0
    %557 = vmatprep.subr.mxu0 0.0
    %558 = vmatpush1.msra.mxu0 0.0
    %559 = vmatprep.subr.mxu0 0.0
    %560 = vmatpush1.msra.mxu0 0.0
    %561 = vmatprep.subr.mxu0 0.0
    %562 = vmatpush1.msra.mxu0 0.0
    %563 = vmatprep.subr.mxu0 0.0
    %564 = vmatpush1.msra.mxu0 0.0
    %565 = vmatprep.subr.mxu0 0.0
    %566 = vmatpush1.msra.mxu0 0.0
    %567 = vmatprep.subr.mxu0 0.0
    %568 = vmatpush1.msra.mxu0 0.0
    %569 = vmatprep.subr.mxu0 0.0
    %570 = vmatpush1.msra.mxu0 0.0
    %571 = vmatprep.subr.mxu0 0.0
    %572 = vmatpush1.msra.mxu0 0.0
    %573 = vmatprep.subr.mxu0 0.0
    %574 = vmatpush1.msra.mxu0 0.0
    %575 = vmatprep.subr.mxu0 0.0
    %576 = vmatpush1.msra.mxu0 0.0
    %577 = vmatprep.subr.mxu0 0.0
    %578 = vmatpush1.msra.mxu0 0.0
    %579 = vmatprep.mubr.f32.mxu0 0.0
    %580 = vmatmul.mubr.f32.gmra.mrb[0].mxu0 %v513
    %v581 = vpop.f32.mrb[0].mxu0
    %v582 = vadd.f32 0.0, %v581
    %v583 = vpop.f32.mrb[0].mxu0
    %584 = vdwg.mxu0
    %585 = vmatprep.subr.mxu0 0.0
    %586 = vmatpush1.msra.mxu0 %v281
    %587 = vmatprep.subr.mxu0 0.0
    %588 = vmatpush1.msra.mxu0 0.0
    %589 = vmatprep.subr.mxu0 0.0
    %590 = vmatpush1.msra.mxu0 0.0
    %591 = vmatprep.subr.mxu0 0.0
    %592 = vmatpush1.msra.mxu0 0.0
    %593 = vmatprep.subr.mxu0 0.0
    %594 = vmatpush1.msra.mxu0 0.0
    %595 = vmatprep.subr.mxu0 0.0
    %596 = vmatpush1.msra.mxu0 0.0
    %597 = vmatprep.subr.mxu0 0.0
    %598 = vmatpush1.msra.mxu0 0.0
    %599 = vmatprep.subr.mxu0 0.0
    %600 = vmatpush1.msra.mxu0 0.0
    %601 = vmatprep.subr.mxu0 0.0
    %602 = vmatpush1.msra.mxu0 0.0
    %603 = vmatprep.subr.mxu0 0.0
    %604 = vmatpush1.msra.mxu0 0.0
    %605 = vmatprep.subr.mxu0 0.0
    %606 = vmatpush1.msra.mxu0 0.0
    %607 = vmatprep.subr.mxu0 0.0
    %608 = vmatpush1.msra.mxu0 0.0
    %609 = vmatprep.subr.mxu0 0.0
    %610 = vmatpush1.msra.mxu0 0.0
    %611 = vmatprep.subr.mxu0 0.0
    %612 = vmatpush1.msra.mxu0 0.0
    %613 = vmatprep.subr.mxu0 0.0
    %614 = vmatpush1.msra.mxu0 0.0
    %615 = vmatprep.subr.mxu0 0.0
    %616 = vmatpush1.msra.mxu0 0.0
    %617 = vmatprep.subr.mxu0 0.0
    %618 = vmatpush1.msra.mxu0 0.0
    %619 = vmatprep.subr.mxu0 0.0
    %620 = vmatpush1.msra.mxu0 0.0
    %621 = vmatprep.subr.mxu0 0.0
    %622 = vmatpush1.msra.mxu0 0.0
    %623 = vmatprep.subr.mxu0 0.0
    %624 = vmatpush1.msra.mxu0 0.0
    %625 = vmatprep.subr.mxu0 0.0
    %626 = vmatpush1.msra.mxu0 0.0
    %627 = vmatprep.subr.mxu0 0.0
    %628 = vmatpush1.msra.mxu0 0.0
    %629 = vmatprep.subr.mxu0 0.0
    %630 = vmatpush1.msra.mxu0 0.0
    %631 = vmatprep.subr.mxu0 0.0
    %632 = vmatpush1.msra.mxu0 0.0
    %633 = vmatprep.subr.mxu0 0.0
    %634 = vmatpush1.msra.mxu0 0.0
    %635 = vmatprep.subr.mxu0 0.0
    %636 = vmatpush1.msra.mxu0 0.0
    %637 = vmatprep.subr.mxu0 0.0
    %638 = vmatpush1.msra.mxu0 0.0
    %639 = vmatprep.subr.mxu0 0.0
    %640 = vmatpush1.msra.mxu0 0.0
    %641 = vmatprep.subr.mxu0 0.0
    %642 = vmatpush1.msra.mxu0 0.0
    %643 = vmatprep.subr.mxu0 0.0
    %644 = vmatpush1.msra.mxu0 0.0
    %645 = vmatprep.subr.mxu0 0.0
    %646 = vmatpush1.msra.mxu0 0.0
    %647 = vmatprep.subr.mxu0 0.0
    %648 = vmatpush1.msra.mxu0 0.0
    %649 = vmatprep.mubr.f32.mxu0 0.0
    %650 = vmatmul.mubr.f32.gmra.mrb[0].mxu0 %v513
    %v651 = vpop.f32.mrb[0].mxu0
    %v652 = vadd.f32 0.0, %v651
    %v653 = vpop.f32.mrb[0].mxu0
    %654 = vdwg.mxu0
    %v655 = vmul.f32 %v511, 1.5
    %v657 = vsel %vm186, %v582, 0
    %659 = vmatprep.subr.mxu0 0.0
    %660 = vmatpush1.msra.mxu0 %v652
    %661 = vmatprep.subr.mxu0 0.0
    %662 = vmatpush1.msra.mxu0 0.0
    %663 = vmatprep.subr.mxu0 0.0
    %664 = vmatpush1.msra.mxu0 0.0
    %665 = vmatprep.subr.mxu0 0.0
    %666 = vmatpush1.msra.mxu0 0.0
    %667 = vmatprep.subr.mxu0 0.0
    %668 = vmatpush1.msra.mxu0 0.0
    %669 = vmatprep.subr.mxu0 0.0
    %670 = vmatpush1.msra.mxu0 0.0
    %671 = vmatprep.subr.mxu0 0.0
    %672 = vmatpush1.msra.mxu0 0.0
    %673 = vmatprep.subr.mxu0 0.0
    %674 = vmatpush1.msra.mxu0 0.0
    %675 = vmatprep.subr.mxu0 0.0
    %676 = vmatpush1.msra.mxu0 0.0
    %677 = vmatprep.subr.mxu0 0.0
    %678 = vmatpush1.msra.mxu0 0.0
    %679 = vmatprep.subr.mxu0 0.0
    %680 = vmatpush1.msra.mxu0 0.0
    %681 = vmatprep.subr.mxu0 0.0
    %682 = vmatpush1.msra.mxu0 0.0
    %683 = vmatprep.subr.mxu0 0.0
    %684 = vmatpush1.msra.mxu0 0.0
    %685 = vmatprep.subr.mxu0 0.0
    %686 = vmatpush1.msra.mxu0 0.0
    %687 = vmatprep.subr.mxu0 0.0
    %688 = vmatpush1.msra.mxu0 0.0
    %689 = vmatprep.subr.mxu0 0.0
    %690 = vmatpush1.msra.mxu0 0.0
    %691 = vmatprep.subr.mxu0 0.0
    %692 = vmatpush1.msra.mxu0 0.0
    %693 = vmatprep.subr.mxu0 0.0
    %694 = vmatpush1.msra.mxu0 0.0
    %695 = vmatprep.subr.mxu0 0.0
    %696 = vmatpush1.msra.mxu0 0.0
    %697 = vmatprep.subr.mxu0 0.0
    %698 = vmatpush1.msra.mxu0 0.0
    %699 = vmatprep.subr.mxu0 0.0
    %700 = vmatpush1.msra.mxu0 0.0
    %701 = vmatprep.subr.mxu0 0.0
    %702 = vmatpush1.msra.mxu0 0.0
    %703 = vmatprep.subr.mxu0 0.0
    %704 = vmatpush1.msra.mxu0 0.0
    %705 = vmatprep.subr.mxu0 0.0
    %706 = vmatpush1.msra.mxu0 0.0
    %707 = vmatprep.subr.mxu0 0.0
    %708 = vmatpush1.msra.mxu0 0.0
    %709 = vmatprep.subr.mxu0 0.0
    %710 = vmatpush1.msra.mxu0 0.0
    %711 = vmatprep.subr.mxu0 0.0
    %712 = vmatpush1.msra.mxu0 0.0
    %713 = vmatprep.subr.mxu0 0.0
    %714 = vmatpush1.msra.mxu0 0.0
    %715 = vmatprep.subr.mxu0 0.0
    %716 = vmatpush1.msra.mxu0 0.0
    %717 = vmatprep.subr.mxu0 0.0
    %718 = vmatpush1.msra.mxu0 0.0
    %719 = vmatprep.subr.mxu0 0.0
    %720 = vmatpush1.msra.mxu0 0.0
    %721 = vmatprep.subr.mxu0 0.0
    %722 = vmatpush1.msra.mxu0 0.0
    %723 = vmatprep.mubr.f32.mxu0 0.0
    %724 = vmatmul.mubr.f32.gmra.mrb[0].mxu0 %v657
    %v725 = vpop.f32.mrb[0].mxu0
    %v726 = vadd.f32 0.0, %v725
    %v727 = vpop.f32.mrb[0].mxu0
    %728 = vdwg.mxu0
    %v729 = vmul.f32 %v726, 0.5
    %v730 = vsub.f32 %v655, %v729
    %v732 = vsel %vm186, %v730, 0
    %734 = vmatprep.subr.mxu0 0.0
    %735 = vmatpush1.msra.mxu0 %v730
    %736 = vmatprep.subr.mxu0 0.0
    %737 = vmatpush1.msra.mxu0 0.0
    %738 = vmatprep.subr.mxu0 0.0
    %739 = vmatpush1.msra.mxu0 0.0
    %740 = vmatprep.subr.mxu0 0.0
    %741 = vmatpush1.msra.mxu0 0.0
    %742 = vmatprep.subr.mxu0 0.0
    %743 = vmatpush1.msra.mxu0 0.0
    %744 = vmatprep.subr.mxu0 0.0
    %745 = vmatpush1.msra.mxu0 0.0
    %746 = vmatprep.subr.mxu0 0.0
    %747 = vmatpush1.msra.mxu0 0.0
    %748 = vmatprep.subr.mxu0 0.0
    %749 = vmatpush1.msra.mxu0 0.0
    %750 = vmatprep.subr.mxu0 0.0
    %751 = vmatpush1.msra.mxu0 0.0
    %752 = vmatprep.subr.mxu0 0.0
    %753 = vmatpush1.msra.mxu0 0.0
    %754 = vmatprep.subr.mxu0 0.0
    %755 = vmatpush1.msra.mxu0 0.0
    %756 = vmatprep.subr.mxu0 0.0
    %757 = vmatpush1.msra.mxu0 0.0
    %758 = vmatprep.subr.mxu0 0.0
    %759 = vmatpush1.msra.mxu0 0.0
    %760 = vmatprep.subr.mxu0 0.0
    %761 = vmatpush1.msra.mxu0 0.0
    %762 = vmatprep.subr.mxu0 0.0
    %763 = vmatpush1.msra.mxu0 0.0
    %764 = vmatprep.subr.mxu0 0.0
    %765 = vmatpush1.msra.mxu0 0.0
    %766 = vmatprep.subr.mxu0 0.0
    %767 = vmatpush1.msra.mxu0 0.0
    %768 = vmatprep.subr.mxu0 0.0
    %769 = vmatpush1.msra.mxu0 0.0
    %770 = vmatprep.subr.mxu0 0.0
    %771 = vmatpush1.msra.mxu0 0.0
    %772 = vmatprep.subr.mxu0 0.0
    %773 = vmatpush1.msra.mxu0 0.0
    %774 = vmatprep.subr.mxu0 0.0
    %775 = vmatpush1.msra.mxu0 0.0
    %776 = vmatprep.subr.mxu0 0.0
    %777 = vmatpush1.msra.mxu0 0.0
    %778 = vmatprep.subr.mxu0 0.0
    %779 = vmatpush1.msra.mxu0 0.0
    %780 = vmatprep.subr.mxu0 0.0
    %781 = vmatpush1.msra.mxu0 0.0
    %782 = vmatprep.subr.mxu0 0.0
    %783 = vmatpush1.msra.mxu0 0.0
    %784 = vmatprep.subr.mxu0 0.0
    %785 = vmatpush1.msra.mxu0 0.0
    %786 = vmatprep.subr.mxu0 0.0
    %787 = vmatpush1.msra.mxu0 0.0
    %788 = vmatprep.subr.mxu0 0.0
    %789 = vmatpush1.msra.mxu0 0.0
    %790 = vmatprep.subr.mxu0 0.0
    %791 = vmatpush1.msra.mxu0 0.0
    %792 = vmatprep.subr.mxu0 0.0
    %793 = vmatpush1.msra.mxu0 0.0
    %794 = vmatprep.subr.mxu0 0.0
    %795 = vmatpush1.msra.mxu0 0.0
    %796 = vmatprep.subr.mxu0 0.0
    %797 = vmatpush1.msra.mxu0 0.0
    %798 = vmatprep.mubr.f32.mxu0 0.0
    %799 = vmatmul.mubr.f32.gmra.mrb[0].mxu0 %v732
    %v800 = vpop.f32.mrb[0].mxu0
    %v801 = vadd.f32 0.0, %v800
    %v802 = vpop.f32.mrb[0].mxu0
    %803 = vdwg.mxu0
    %804 = vmatprep.subr.mxu0 0.0
    %805 = vmatpush1.msra.mxu0 %v281
    %806 = vmatprep.subr.mxu0 0.0
    %807 = vmatpush1.msra.mxu0 0.0
    %808 = vmatprep.subr.mxu0 0.0
    %809 = vmatpush1.msra.mxu0 0.0
    %810 = vmatprep.subr.mxu0 0.0
    %811 = vmatpush1.msra.mxu0 0.0
    %812 = vmatprep.subr.mxu0 0.0
    %813 = vmatpush1.msra.mxu0 0.0
    %814 = vmatprep.subr.mxu0 0.0
    %815 = vmatpush1.msra.mxu0 0.0
    %816 = vmatprep.subr.mxu0 0.0
    %817 = vmatpush1.msra.mxu0 0.0
    %818 = vmatprep.subr.mxu0 0.0
    %819 = vmatpush1.msra.mxu0 0.0
    %820 = vmatprep.subr.mxu0 0.0
    %821 = vmatpush1.msra.mxu0 0.0
    %822 = vmatprep.subr.mxu0 0.0
    %823 = vmatpush1.msra.mxu0 0.0
    %824 = vmatprep.subr.mxu0 0.0
    %825 = vmatpush1.msra.mxu0 0.0
    %826 = vmatprep.subr.mxu0 0.0
    %827 = vmatpush1.msra.mxu0 0.0
    %828 = vmatprep.subr.mxu0 0.0
    %829 = vmatpush1.msra.mxu0 0.0
    %830 = vmatprep.subr.mxu0 0.0
    %831 = vmatpush1.msra.mxu0 0.0
    %832 = vmatprep.subr.mxu0 0.0
    %833 = vmatpush1.msra.mxu0 0.0
    %834 = vmatprep.subr.mxu0 0.0
    %835 = vmatpush1.msra.mxu0 0.0
    %836 = vmatprep.subr.mxu0 0.0
    %837 = vmatpush1.msra.mxu0 0.0
    %838 = vmatprep.subr.mxu0 0.0
    %839 = vmatpush1.msra.mxu0 0.0
    %840 = vmatprep.subr.mxu0 0.0
    %841 = vmatpush1.msra.mxu0 0.0
    %842 = vmatprep.subr.mxu0 0.0
    %843 = vmatpush1.msra.mxu0 0.0
    %844 = vmatprep.subr.mxu0 0.0
    %845 = vmatpush1.msra.mxu0 0.0
    %846 = vmatprep.subr.mxu0 0.0
    %847 = vmatpush1.msra.mxu0 0.0
    %848 = vmatprep.subr.mxu0 0.0
    %849 = vmatpush1.msra.mxu0 0.0
    %850 = vmatprep.subr.mxu0 0.0
    %851 = vmatpush1.msra.mxu0 0.0
    %852 = vmatprep.subr.mxu0 0.0
    %853 = vmatpush1.msra.mxu0 0.0
    %854 = vmatprep.subr.mxu0 0.0
    %855 = vmatpush1.msra.mxu0 0.0
    %856 = vmatprep.subr.mxu0 0.0
    %857 = vmatpush1.msra.mxu0 0.0
    %858 = vmatprep.subr.mxu0 0.0
    %859 = vmatpush1.msra.mxu0 0.0
    %860 = vmatprep.subr.mxu0 0.0
    %861 = vmatpush1.msra.mxu0 0.0
    %862 = vmatprep.subr.mxu0 0.0
    %863 = vmatpush1.msra.mxu0 0.0
    %864 = vmatprep.subr.mxu0 0.0
    %865 = vmatpush1.msra.mxu0 0.0
    %866 = vmatprep.subr.mxu0 0.0
    %867 = vmatpush1.msra.mxu0 0.0
    %868 = vmatprep.mubr.f32.mxu0 0.0
    %869 = vmatmul.mubr.f32.gmra.mrb[0].mxu0 %v732
    %v870 = vpop.f32.mrb[0].mxu0
    %v871 = vadd.f32 0.0, %v870
    %v872 = vpop.f32.mrb[0].mxu0
    %873 = vdwg.mxu0
    %v874 = vmul.f32 %v730, 1.5
    %v876 = vsel %vm186, %v801, 0
    %878 = vmatprep.subr.mxu0 0.0
    %879 = vmatpush1.msra.mxu0 %v871
    %880 = vmatprep.subr.mxu0 0.0
    %881 = vmatpush1.msra.mxu0 0.0
    %882 = vmatprep.subr.mxu0 0.0
    %883 = vmatpush1.msra.mxu0 0.0
    %884 = vmatprep.subr.mxu0 0.0
    %885 = vmatpush1.msra.mxu0 0.0
    %886 = vmatprep.subr.mxu0 0.0
    %887 = vmatpush1.msra.mxu0 0.0
    %888 = vmatprep.subr.mxu0 0.0
    %889 = vmatpush1.msra.mxu0 0.0
    %890 = vmatprep.subr.mxu0 0.0
    %891 = vmatpush1.msra.mxu0 0.0
    %892 = vmatprep.subr.mxu0 0.0
    %893 = vmatpush1.msra.mxu0 0.0
    %894 = vmatprep.subr.mxu0 0.0
    %895 = vmatpush1.msra.mxu0 0.0
    %896 = vmatprep.subr.mxu0 0.0
    %897 = vmatpush1.msra.mxu0 0.0
    %898 = vmatprep.subr.mxu0 0.0
    %899 = vmatpush1.msra.mxu0 0.0
    %900 = vmatprep.subr.mxu0 0.0
    %901 = vmatpush1.msra.mxu0 0.0
    %902 = vmatprep.subr.mxu0 0.0
    %903 = vmatpush1.msra.mxu0 0.0
    %904 = vmatprep.subr.mxu0 0.0
    %905 = vmatpush1.msra.mxu0 0.0
    %906 = vmatprep.subr.mxu0 0.0
    %907 = vmatpush1.msra.mxu0 0.0
    %908 = vmatprep.subr.mxu0 0.0
    %909 = vmatpush1.msra.mxu0 0.0
    %910 = vmatprep.subr.mxu0 0.0
    %911 = vmatpush1.msra.mxu0 0.0
    %912 = vmatprep.subr.mxu0 0.0
    %913 = vmatpush1.msra.mxu0 0.0
    %914 = vmatprep.subr.mxu0 0.0
    %915 = vmatpush1.msra.mxu0 0.0
    %916 = vmatprep.subr.mxu0 0.0
    %917 = vmatpush1.msra.mxu0 0.0
    %918 = vmatprep.subr.mxu0 0.0
    %919 = vmatpush1.msra.mxu0 0.0
    %920 = vmatprep.subr.mxu0 0.0
    %921 = vmatpush1.msra.mxu0 0.0
    %922 = vmatprep.subr.mxu0 0.0
    %923 = vmatpush1.msra.mxu0 0.0
    %924 = vmatprep.subr.mxu0 0.0
    %925 = vmatpush1.msra.mxu0 0.0
    %926 = vmatprep.subr.mxu0 0.0
    %927 = vmatpush1.msra.mxu0 0.0
    %928 = vmatprep.subr.mxu0 0.0
    %929 = vmatpush1.msra.mxu0 0.0
    %930 = vmatprep.subr.mxu0 0.0
    %931 = vmatpush1.msra.mxu0 0.0
    %932 = vmatprep.subr.mxu0 0.0
    %933 = vmatpush1.msra.mxu0 0.0
    %934 = vmatprep.subr.mxu0 0.0
    %935 = vmatpush1.msra.mxu0 0.0
    %936 = vmatprep.subr.mxu0 0.0
    %937 = vmatpush1.msra.mxu0 0.0
    %938 = vmatprep.subr.mxu0 0.0
    %939 = vmatpush1.msra.mxu0 0.0
    %940 = vmatprep.subr.mxu0 0.0
    %941 = vmatpush1.msra.mxu0 0.0
    %942 = vmatprep.mubr.f32.mxu0 0.0
    %943 = vmatmul.mubr.f32.gmra.mrb[0].mxu0 %v876
    %v944 = vpop.f32.mrb[0].mxu0
    %v945 = vadd.f32 0.0, %v944
    %v946 = vpop.f32.mrb[0].mxu0
    %947 = vdwg.mxu0
    %v948 = vmul.f32 %v945, 0.5
    %v949 = vsub.f32 %v874, %v948
    %v951 = vsel %vm186, %v949, 0
    %953 = vmatprep.subr.mxu0 0.0
    %954 = vmatpush1.msra.mxu0 %v949
    %955 = vmatprep.subr.mxu0 0.0
    %956 = vmatpush1.msra.mxu0 0.0
    %957 = vmatprep.subr.mxu0 0.0
    %958 = vmatpush1.msra.mxu0 0.0
    %959 = vmatprep.subr.mxu0 0.0
    %960 = vmatpush1.msra.mxu0 0.0
    %961 = vmatprep.subr.mxu0 0.0
    %962 = vmatpush1.msra.mxu0 0.0
    %963 = vmatprep.subr.mxu0 0.0
    %964 = vmatpush1.msra.mxu0 0.0
    %965 = vmatprep.subr.mxu0 0.0
    %966 = vmatpush1.msra.mxu0 0.0
    %967 = vmatprep.subr.mxu0 0.0
    %968 = vmatpush1.msra.mxu0 0.0
    %969 = vmatprep.subr.mxu0 0.0
    %970 = vmatpush1.msra.mxu0 0.0
    %971 = vmatprep.subr.mxu0 0.0
    %972 = vmatpush1.msra.mxu0 0.0
    %973 = vmatprep.subr.mxu0 0.0
    %974 = vmatpush1.msra.mxu0 0.0
    %975 = vmatprep.subr.mxu0 0.0
    %976 = vmatpush1.msra.mxu0 0.0
    %977 = vmatprep.subr.mxu0 0.0
    %978 = vmatpush1.msra.mxu0 0.0
    %979 = vmatprep.subr.mxu0 0.0
    %980 = vmatpush1.msra.mxu0 0.0
    %981 = vmatprep.subr.mxu0 0.0
    %982 = vmatpush1.msra.mxu0 0.0
    %983 = vmatprep.subr.mxu0 0.0
    %984 = vmatpush1.msra.mxu0 0.0
    %985 = vmatprep.subr.mxu0 0.0
    %986 = vmatpush1.msra.mxu0 0.0
    %987 = vmatprep.subr.mxu0 0.0
    %988 = vmatpush1.msra.mxu0 0.0
    %989 = vmatprep.subr.mxu0 0.0
    %990 = vmatpush1.msra.mxu0 0.0
    %991 = vmatprep.subr.mxu0 0.0
    %992 = vmatpush1.msra.mxu0 0.0
    %993 = vmatprep.subr.mxu0 0.0
    %994 = vmatpush1.msra.mxu0 0.0
    %995 = vmatprep.subr.mxu0 0.0
    %996 = vmatpush1.msra.mxu0 0.0
    %997 = vmatprep.subr.mxu0 0.0
    %998 = vmatpush1.msra.mxu0 0.0
    %999 = vmatprep.subr.mxu0 0.0
    %1000 = vmatpush1.msra.mxu0 0.0
    %1001 = vmatprep.subr.mxu0 0.0
    %1002 = vmatpush1.msra.mxu0 0.0
    %1003 = vmatprep.subr.mxu0 0.0
    %1004 = vmatpush1.msra.mxu0 0.0
    %1005 = vmatprep.subr.mxu0 0.0
    %1006 = vmatpush1.msra.mxu0 0.0
    %1007 = vmatprep.subr.mxu0 0.0
    %1008 = vmatpush1.msra.mxu0 0.0
    %1009 = vmatprep.subr.mxu0 0.0
    %1010 = vmatpush1.msra.mxu0 0.0
    %1011 = vmatprep.subr.mxu0 0.0
    %1012 = vmatpush1.msra.mxu0 0.0
    %1013 = vmatprep.subr.mxu0 0.0
    %1014 = vmatpush1.msra.mxu0 0.0
    %1015 = vmatprep.subr.mxu0 0.0
    %1016 = vmatpush1.msra.mxu0 0.0
    %1017 = vmatprep.mubr.f32.mxu0 0.0
    %1018 = vmatmul.mubr.f32.gmra.mrb[0].mxu0 %v951
    %v1019 = vpop.f32.mrb[0].mxu0
    %v1020 = vadd.f32 0.0, %v1019
    %v1021 = vpop.f32.mrb[0].mxu0
    %1022 = vdwg.mxu0
    %1023 = vmatprep.subr.mxu0 0.0
    %1024 = vmatpush1.msra.mxu0 %v281
    %1025 = vmatprep.subr.mxu0 0.0
    %1026 = vmatpush1.msra.mxu0 0.0
    %1027 = vmatprep.subr.mxu0 0.0
    %1028 = vmatpush1.msra.mxu0 0.0
    %1029 = vmatprep.subr.mxu0 0.0
    %1030 = vmatpush1.msra.mxu0 0.0
    %1031 = vmatprep.subr.mxu0 0.0
    %1032 = vmatpush1.msra.mxu0 0.0
    %1033 = vmatprep.subr.mxu0 0.0
    %1034 = vmatpush1.msra.mxu0 0.0
    %1035 = vmatprep.subr.mxu0 0.0
    %1036 = vmatpush1.msra.mxu0 0.0
    %1037 = vmatprep.subr.mxu0 0.0
    %1038 = vmatpush1.msra.mxu0 0.0
    %1039 = vmatprep.subr.mxu0 0.0
    %1040 = vmatpush1.msra.mxu0 0.0
    %1041 = vmatprep.subr.mxu0 0.0
    %1042 = vmatpush1.msra.mxu0 0.0
    %1043 = vmatprep.subr.mxu0 0.0
    %1044 = vmatpush1.msra.mxu0 0.0
    %1045 = vmatprep.subr.mxu0 0.0
    %1046 = vmatpush1.msra.mxu0 0.0
    %1047 = vmatprep.subr.mxu0 0.0
    %1048 = vmatpush1.msra.mxu0 0.0
    %1049 = vmatprep.subr.mxu0 0.0
    %1050 = vmatpush1.msra.mxu0 0.0
    %1051 = vmatprep.subr.mxu0 0.0
    %1052 = vmatpush1.msra.mxu0 0.0
    %1053 = vmatprep.subr.mxu0 0.0
    %1054 = vmatpush1.msra.mxu0 0.0
    %1055 = vmatprep.subr.mxu0 0.0
    %1056 = vmatpush1.msra.mxu0 0.0
    %1057 = vmatprep.subr.mxu0 0.0
    %1058 = vmatpush1.msra.mxu0 0.0
    %1059 = vmatprep.subr.mxu0 0.0
    %1060 = vmatpush1.msra.mxu0 0.0
    %1061 = vmatprep.subr.mxu0 0.0
    %1062 = vmatpush1.msra.mxu0 0.0
    %1063 = vmatprep.subr.mxu0 0.0
    %1064 = vmatpush1.msra.mxu0 0.0
    %1065 = vmatprep.subr.mxu0 0.0
    %1066 = vmatpush1.msra.mxu0 0.0
    %1067 = vmatprep.subr.mxu0 0.0
    %1068 = vmatpush1.msra.mxu0 0.0
    %1069 = vmatprep.subr.mxu0 0.0
    %1070 = vmatpush1.msra.mxu0 0.0
    %1071 = vmatprep.subr.mxu0 0.0
    %1072 = vmatpush1.msra.mxu0 0.0
    %1073 = vmatprep.subr.mxu0 0.0
    %1074 = vmatpush1.msra.mxu0 0.0
    %1075 = vmatprep.subr.mxu0 0.0
    %1076 = vmatpush1.msra.mxu0 0.0
    %1077 = vmatprep.subr.mxu0 0.0
    %1078 = vmatpush1.msra.mxu0 0.0
    %1079 = vmatprep.subr.mxu0 0.0
    %1080 = vmatpush1.msra.mxu0 0.0
    %1081 = vmatprep.subr.mxu0 0.0
    %1082 = vmatpush1.msra.mxu0 0.0
    %1083 = vmatprep.subr.mxu0 0.0
    %1084 = vmatpush1.msra.mxu0 0.0
    %1085 = vmatprep.subr.mxu0 0.0
    %1086 = vmatpush1.msra.mxu0 0.0
    %1087 = vmatprep.mubr.f32.mxu0 0.0
    %1088 = vmatmul.mubr.f32.gmra.mrb[0].mxu0 %v951
    %v1089 = vpop.f32.mrb[0].mxu0
    %v1090 = vadd.f32 0.0, %v1089
    %v1091 = vpop.f32.mrb[0].mxu0
    %1092 = vdwg.mxu0
    %v1093 = vmul.f32 %v949, 1.5
    %v1095 = vsel %vm186, %v1020, 0
    %1097 = vmatprep.subr.mxu0 0.0
    %1098 = vmatpush1.msra.mxu0 %v1090
    %1099 = vmatprep.subr.mxu0 0.0
    %1100 = vmatpush1.msra.mxu0 0.0
    %1101 = vmatprep.subr.mxu0 0.0
    %1102 = vmatpush1.msra.mxu0 0.0
    %1103 = vmatprep.subr.mxu0 0.0
    %1104 = vmatpush1.msra.mxu0 0.0
    %1105 = vmatprep.subr.mxu0 0.0
    %1106 = vmatpush1.msra.mxu0 0.0
    %1107 = vmatprep.subr.mxu0 0.0
    %1108 = vmatpush1.msra.mxu0 0.0
    %1109 = vmatprep.subr.mxu0 0.0
    %1110 = vmatpush1.msra.mxu0 0.0
    %1111 = vmatprep.subr.mxu0 0.0
    %1112 = vmatpush1.msra.mxu0 0.0
    %1113 = vmatprep.subr.mxu0 0.0
    %1114 = vmatpush1.msra.mxu0 0.0
    %1115 = vmatprep.subr.mxu0 0.0
    %1116 = vmatpush1.msra.mxu0 0.0
    %1117 = vmatprep.subr.mxu0 0.0
    %1118 = vmatpush1.msra.mxu0 0.0
    %1119 = vmatprep.subr.mxu0 0.0
    %1120 = vmatpush1.msra.mxu0 0.0
    %1121 = vmatprep.subr.mxu0 0.0
    %1122 = vmatpush1.msra.mxu0 0.0
    %1123 = vmatprep.subr.mxu0 0.0
    %1124 = vmatpush1.msra.mxu0 0.0
    %1125 = vmatprep.subr.mxu0 0.0
    %1126 = vmatpush1.msra.mxu0 0.0
    %1127 = vmatprep.subr.mxu0 0.0
    %1128 = vmatpush1.msra.mxu0 0.0
    %1129 = vmatprep.subr.mxu0 0.0
    %1130 = vmatpush1.msra.mxu0 0.0
    %1131 = vmatprep.subr.mxu0 0.0
    %1132 = vmatpush1.msra.mxu0 0.0
    %1133 = vmatprep.subr.mxu0 0.0
    %1134 = vmatpush1.msra.mxu0 0.0
    %1135 = vmatprep.subr.mxu0 0.0
    %1136 = vmatpush1.msra.mxu0 0.0
    %1137 = vmatprep.subr.mxu0 0.0
    %1138 = vmatpush1.msra.mxu0 0.0
    %1139 = vmatprep.subr.mxu0 0.0
    %1140 = vmatpush1.msra.mxu0 0.0
    %1141 = vmatprep.subr.mxu0 0.0
    %1142 = vmatpush1.msra.mxu0 0.0
    %1143 = vmatprep.subr.mxu0 0.0
    %1144 = vmatpush1.msra.mxu0 0.0
    %1145 = vmatprep.subr.mxu0 0.0
    %1146 = vmatpush1.msra.mxu0 0.0
    %1147 = vmatprep.subr.mxu0 0.0
    %1148 = vmatpush1.msra.mxu0 0.0
    %1149 = vmatprep.subr.mxu0 0.0
    %1150 = vmatpush1.msra.mxu0 0.0
    %1151 = vmatprep.subr.mxu0 0.0
    %1152 = vmatpush1.msra.mxu0 0.0
    %1153 = vmatprep.subr.mxu0 0.0
    %1154 = vmatpush1.msra.mxu0 0.0
    %1155 = vmatprep.subr.mxu0 0.0
    %1156 = vmatpush1.msra.mxu0 0.0
    %1157 = vmatprep.subr.mxu0 0.0
    %1158 = vmatpush1.msra.mxu0 0.0
    %1159 = vmatprep.subr.mxu0 0.0
    %1160 = vmatpush1.msra.mxu0 0.0
    %1161 = vmatprep.mubr.f32.mxu0 0.0
    %1162 = vmatmul.mubr.f32.gmra.mrb[0].mxu0 %v1095
    %v1163 = vpop.f32.mrb[0].mxu0
    %v1164 = vadd.f32 0.0, %v1163
    %v1165 = vpop.f32.mrb[0].mxu0
    %1166 = vdwg.mxu0
    %v1167 = vmul.f32 %v1164, 0.5
    %v1168 = vsub.f32 %v1093, %v1167
    %v1170 = vsel %vm186, %v1168, 0
    %1172 = vmatprep.subr.mxu0 0.0
    %1173 = vmatpush1.msra.mxu0 %v210
    %1174 = vmatprep.subr.mxu0 0.0
    %1175 = vmatpush1.msra.mxu0 0.0
    %1176 = vmatprep.subr.mxu0 0.0
    %1177 = vmatpush1.msra.mxu0 0.0
    %1178 = vmatprep.subr.mxu0 0.0
    %1179 = vmatpush1.msra.mxu0 0.0
    %1180 = vmatprep.subr.mxu0 0.0
    %1181 = vmatpush1.msra.mxu0 0.0
    %1182 = vmatprep.subr.mxu0 0.0
    %1183 = vmatpush1.msra.mxu0 0.0
    %1184 = vmatprep.subr.mxu0 0.0
    %1185 = vmatpush1.msra.mxu0 0.0
    %1186 = vmatprep.subr.mxu0 0.0
    %1187 = vmatpush1.msra.mxu0 0.0
    %1188 = vmatprep.subr.mxu0 0.0
    %1189 = vmatpush1.msra.mxu0 0.0
    %1190 = vmatprep.subr.mxu0 0.0
    %1191 = vmatpush1.msra.mxu0 0.0
    %1192 = vmatprep.subr.mxu0 0.0
    %1193 = vmatpush1.msra.mxu0 0.0
    %1194 = vmatprep.subr.mxu0 0.0
    %1195 = vmatpush1.msra.mxu0 0.0
    %1196 = vmatprep.subr.mxu0 0.0
    %1197 = vmatpush1.msra.mxu0 0.0
    %1198 = vmatprep.subr.mxu0 0.0
    %1199 = vmatpush1.msra.mxu0 0.0
    %1200 = vmatprep.subr.mxu0 0.0
    %1201 = vmatpush1.msra.mxu0 0.0
    %1202 = vmatprep.subr.mxu0 0.0
    %1203 = vmatpush1.msra.mxu0 0.0
    %1204 = vmatprep.subr.mxu0 0.0
    %1205 = vmatpush1.msra.mxu0 0.0
    %1206 = vmatprep.subr.mxu0 0.0
    %1207 = vmatpush1.msra.mxu0 0.0
    %1208 = vmatprep.subr.mxu0 0.0
    %1209 = vmatpush1.msra.mxu0 0.0
    %1210 = vmatprep.subr.mxu0 0.0
    %1211 = vmatpush1.msra.mxu0 0.0
    %1212 = vmatprep.subr.mxu0 0.0
    %1213 = vmatpush1.msra.mxu0 0.0
    %1214 = vmatprep.subr.mxu0 0.0
    %1215 = vmatpush1.msra.mxu0 0.0
    %1216 = vmatprep.subr.mxu0 0.0
    %1217 = vmatpush1.msra.mxu0 0.0
    %1218 = vmatprep.subr.mxu0 0.0
    %1219 = vmatpush1.msra.mxu0 0.0
    %1220 = vmatprep.subr.mxu0 0.0
    %1221 = vmatpush1.msra.mxu0 0.0
    %1222 = vmatprep.subr.mxu0 0.0
    %1223 = vmatpush1.msra.mxu0 0.0
    %1224 = vmatprep.subr.mxu0 0.0
    %1225 = vmatpush1.msra.mxu0 0.0
    %1226 = vmatprep.subr.mxu0 0.0
    %1227 = vmatpush1.msra.mxu0 0.0
    %1228 = vmatprep.subr.mxu0 0.0
    %1229 = vmatpush1.msra.mxu0 0.0
    %1230 = vmatprep.subr.mxu0 0.0
    %1231 = vmatpush1.msra.mxu0 0.0
    %1232 = vmatprep.subr.mxu0 0.0
    %1233 = vmatpush1.msra.mxu0 0.0
    %1234 = vmatprep.subr.mxu0 0.0
    %1235 = vmatpush1.msra.mxu0 0.0
    %1236 = vmatprep.mubr.f32.mxu0 0.0
    %1237 = vmatmul.mubr.f32.gmra.mrb[0].mxu0 %v1170
    %v1238 = vpop.f32.mrb[0].mxu0
    %v1239 = vadd.f32 0.0, %v1238
    %v1240 = vpop.f32.mrb[0].mxu0
    %1241 = vdwg.mxu0
    %v1242 = vld [vmem:[%s2] sm:$0xff]
    %1244 = vset.pattern.permute.xlu0 0
    %1245 = vperm.xlu0 %1244, %v1242
    %v1246 = vpop.permute.xlu0 %1245
    %v1248 = vmul.f32 %v1239, %v1246
    %v1249 = vmul.f32 %v1248, 1.4142135
    %1250 = vst.msk [vmem:[%s3] sm:$0xff] %vm34, %v1249
    // Predicated region
    $region18: #{conv2d_oni_forward.2} parent=1 // pred_check
      _
    $region19: #{conv2d_oni_forward.2} parent=1 // pred_check_branch
      %1252 = sbr.rel (0) target = $region21
    $region20: #{conv2d_oni_forward.2} parent=1 // pred_region
      _
    $region21: #{conv2d_oni_forward.2} parent=1 // pred_fallthru
      _
    // Predicated region
    $region22: #{conv2d_oni_forward.2} parent=1 // pred_check
      _
    $region23: #{conv2d_oni_forward.2} parent=1 // pred_check_branch
      %1254 = sbr.rel (0) target = $region25
    $region24: #{conv2d_oni_forward.2} parent=1 // pred_region
      _
    $region25: #{conv2d_oni_forward.2} parent=1 // pred_fallthru
      _
    %1255 = vsyncpa [#allocation3], 1

// kernel: conv2d_oni_forward.3
$region0: #{conv2d_oni_forward.3}
  #allocation0 [shape = 'u32[]', space=smem, size = 0x4, offset = 0x4, fixed_abs, tag = 'smem constant byte address 0x4 - core index']
  #allocation1 [shape = 'u32[144,128]{1,0:T(1,128)}', space=vmem, size = 0x12000, scoped, tag = 'internal scratch']
  #allocation2 [shape = 'f32[4,18,18]{2,1,0:T(8,128)}', space=vmem, size = 0xc000, scoped, tag = 'scratch operand']
  %s0 = inlined_call_operand.vmem [shape: f32[2,4,16,16], index: 0, kind: input, shape index: {}]
  %s1 = inlined_call_operand.vmem [shape: f32[8,36], index: 1, kind: input, shape index: {}]
  %s2 = inlined_call_operand.vmem [shape: f32[8,1], index: 2, kind: input, shape index: {}]
  %s3 = inlined_call_operand.vmem [shape: f32[2,8,256], index: 3, kind: output, shape index: {}]
  %s4 = sld [smem:[#allocation0]]
  $region45: #{conv2d_oni_forward.3} parent=0
    _
  %s6 = ssub.s32 1, %s4
  %s7 = scalar_select 0, %s6, %s4
  loop: start=0, step=1, limit=4
  $region2: #{conv2d_oni_forward.3} parent=0 // loop_pre_header
    _
  $region3: #{conv2d_oni_forward.3} parent=0 // loop_header
    %s9 = sphi 0, %s13
    %p10 = scmp.ge.s32.totalorder %s9, 4
    %s19 = sphi 0, %s21
    %s22 = sphi 0, %s19
    %s23 = sphi 0, %s22
    %s39 = sphi 0, %s23
    %s43 = sphi 0, %s43
    %s45 = sphi 0, %s43
    %s46 = sphi 0, %s45
    %s60 = sphi 0, %s46
    %s64 = sphi 0, %s64
    %s66 = sphi 0, %s64
    %s67 = sphi 0, %s66
    %s81 = sphi 0, %s67
    %s87 = sphi 0, %s89
    %s90 = sphi 0, %s87
    %s91 = sphi 0, %s90
    %s107 = sphi 0, %s91
  $region4: #{conv2d_oni_forward.3} parent=0 // loop_header_branch
    %12 = sbr.rel (%p10) target = $region8
  $region5: #{conv2d_oni_forward.3} parent=0 // loop_body
    %s14 = ssub.s32 %s9, 1
    %s15 = ssub.s32 %s9, 2
    %s16 = sadd.s32 %s9, 1
    %s17 = ssub.s32 %s9, %s16
    %p18 = scmp.eq.s32.totalorder %s17, 0
    %s20 = sadd.s32 %s19, 1
    %s21 = scalar_select %p18, %s19, %s20
    %p24 = pneg %p18
    %p25 = scmp.eq.s32.totalorder %s9, 1
    %p26 = por %p24, %p25
    %p27 = scmp.ne.s32.totalorder %s19, %s22
    %p28 = scmp.eq.s32.totalorder %s9, 0
    %p29 = por %p27, %p28
    %p30 = scmp.ne.s32.totalorder %s19, %s22
    %p31 = scmp.eq.s32.totalorder %s14, 1
    %p32 = por %p30, %p31
    %p33 = scmp.ne.s32.totalorder %s22, %s23
    %p34 = scmp.eq.s32.totalorder %s14, 0
    %p35 = por %p33, %p34
    %p36 = scmp.ne.s32.totalorder %s22, %s23
    %p37 = scmp.eq.s32.totalorder %s15, 1
    %p38 = por %p36, %p37
    %p40 = scmp.ne.s32.totalorder %s23, %s39
    %p41 = scmp.eq.s32.totalorder %s15, 0
    %p42 = por %p40, %p41
    %s44 = sadd.s32 %s43, 1
    %p47 = scmp.eq.s32.totalorder %s9, 1
    %p48 = scmp.ne.s32.totalorder %s43, %s45
    %p49 = scmp.eq.s32.totalorder %s9, 0
    %p50 = por %p48, %p49
    %p51 = scmp.ne.s32.totalorder %s43, %s45
    %p52 = scmp.eq.s32.totalorder %s14, 1
    %p53 = por %p51, %p52
    %p54 = scmp.ne.s32.totalorder %s45, %s46
    %p55 = scmp.eq.s32.totalorder %s14, 0
    %p56 = por %p54, %p55
    %p57 = scmp.ne.s32.totalorder %s45, %s46
    %p58 = scmp.eq.s32.totalorder %s15, 1
    %p59 = por %p57, %p58
    %p61 = scmp.ne.s32.totalorder %s46, %s60
    %p62 = scmp.eq.s32.totalorder %s15, 0
    %p63 = por %p61, %p62
    %s65 = sadd.s32 %s64, 1
    %p68 = scmp.eq.s32.totalorder %s9, 1
    %p69 = scmp.ne.s32.totalorder %s64, %s66
    %p70 = scmp.eq.s32.totalorder %s9, 0
    %p71 = por %p69, %p70
    %p72 = scmp.ne.s32.totalorder %s64, %s66
    %p73 = scmp.eq.s32.totalorder %s14, 1
    %p74 = por %p72, %p73
    %p75 = scmp.ne.s32.totalorder %s66, %s67
    %p76 = scmp.eq.s32.totalorder %s14, 0
    %p77 = por %p75, %p76
    %p78 = scmp.ne.s32.totalorder %s66, %s67
    %p79 = scmp.eq.s32.totalorder %s15, 1
    %p80 = por %p78, %p79
    %p82 = scmp.ne.s32.totalorder %s67, %s81
    %p83 = scmp.eq.s32.totalorder %s15, 0
    %p84 = por %p82, %p83
    %s85 = ssub.s32 %s9, %s16
    %p86 = scmp.eq.s32.totalorder %s85, 0
    %s88 = sadd.s32 %s87, 1
    %s89 = scalar_select %p86, %s87, %s88
    %p92 = pneg %p86
    %p93 = scmp.eq.s32.totalorder %s9, 1
    %p94 = por %p92, %p93
    %p95 = scmp.ne.s32.totalorder %s87, %s90
    %p96 = scmp.eq.s32.totalorder %s9, 0
    %p97 = por %p95, %p96
    %p98 = scmp.ne.s32.totalorder %s87, %s90
    %p99 = scmp.eq.s32.totalorder %s14, 1
    %p100 = por %p98, %p99
    %p101 = scmp.ne.s32.totalorder %s90, %s91
    %p102 = scmp.eq.s32.totalorder %s14, 0
    %p103 = por %p101, %p102
    %p104 = scmp.ne.s32.totalorder %s90, %s91
    %p105 = scmp.eq.s32.totalorder %s15, 1
    %p106 = por %p104, %p105
    %p108 = scmp.ne.s32.totalorder %s91, %s107
    %p109 = scmp.eq.s32.totalorder %s15, 0
    %p110 = por %p108, %p109
    %p111 = scmp.le.s32.totalorder 1, %s9
    %p112 = scmp.lt.s32.totalorder %s9, 3
    %p113 = pnand %p111, %p112
    %p114 = pneg %p113
    // Predicated region
    $region9: #{conv2d_oni_forward.3} parent=5 // pred_check
      _
    $region10: #{conv2d_oni_forward.3} parent=5 // pred_check_branch
      %116 = sbr.rel (%p113) target = $region12
    $region11: #{conv2d_oni_forward.3} parent=5 // pred_region
      %s117 = ssub.s32 %s9, 1
      // Predicated region
      $region13: #{conv2d_oni_forward.3} parent=11 // pred_check
        %p118 = pneg %p56
      $region14: #{conv2d_oni_forward.3} parent=11 // pred_check_branch
        %120 = sbr.rel (%p118) target = $region16
      $region15: #{conv2d_oni_forward.3} parent=11 // pred_region
        _
      $region16: #{conv2d_oni_forward.3} parent=11 // pred_fallthru
        _
      // Predicated region
      $region17: #{conv2d_oni_forward.3} parent=11 // pred_check
        %p121 = pneg %p77
      $region18: #{conv2d_oni_forward.3} parent=11 // pred_check_branch
        %123 = sbr.rel (%p121) target = $region20
      $region19: #{conv2d_oni_forward.3} parent=11 // pred_region
        _
      $region20: #{conv2d_oni_forward.3} parent=11 // pred_fallthru
        _
    $region12: #{conv2d_oni_forward.3} parent=5 // pred_fallthru
      _
    %p124 = scmp.lt.s32.totalorder %s9, 2
    // Predicated region
    $region21: #{conv2d_oni_forward.3} parent=5 // pred_check
      %p125 = pneg %p124
    $region22: #{conv2d_oni_forward.3} parent=5 // pred_check_branch
      %127 = sbr.rel (%p125) target = $region24
    $region23: #{conv2d_oni_forward.3} parent=5 // pred_region
      // Predicated region
      $region25: #{conv2d_oni_forward.3} parent=23 // pred_check
        %p128 = pneg %p29
      $region26: #{conv2d_oni_forward.3} parent=23 // pred_check_branch
        %130 = sbr.rel (%p128) target = $region28
      $region27: #{conv2d_oni_forward.3} parent=23 // pred_region
        %p131 = scmp.lt.s32.totalorder %s9, 1
        %s132 = scalar_select %p131, %s9, 1
        %s133 = smul.addr %s132, 8
        %s134 = smul.addr %s133, 8
        %s135 = scalar_lea.vmem %s0, %s134
      $region28: #{conv2d_oni_forward.3} parent=23 // pred_fallthru
        _
    $region24: #{conv2d_oni_forward.3} parent=5 // pred_fallthru
      _
    %p136 = scmp.le.s32.totalorder 1, %s9
    %p137 = scmp.lt.s32.totalorder %s9, 3
    %p138 = pnand %p136, %p137
    %p139 = pneg %p138
    // Predicated region
    $region29: #{conv2d_oni_forward.3} parent=5 // pred_check
      _
    $region30: #{conv2d_oni_forward.3} parent=5 // pred_check_branch
      %141 = sbr.rel (%p138) target = $region32
    $region31: #{conv2d_oni_forward.3} parent=5 // pred_region
      %s142 = ssub.s32 %s9, 1
      %p143 = scmp.lt.s32.totalorder %s14, 1
      %s144 = scalar_select %p143, %s14, 1
      %s145 = smul.addr %s144, 8
      %s146 = smul.addr %s145, 8
      %s147 = scalar_lea.vmem %s0, %s146
      %p148 = pneg %p35
      %p149 = pneg %p32
      %p150 = pneg %p56
      %p151 = pneg %p53
      %p152 = pneg %p77
      %p153 = pneg %p74
      %p154 = pneg %p103
      %p155 = pneg %p100
      %p156 = scmp.lt.s32.totalorder %s14, 1
      %s157 = scalar_select %p156, %s14, 1
      %s158 = smul.addr %s157, 2
      %s159 = smul.addr %s158, 8
      %s160 = scalar_lea.vmem %s3, %s159
      %p161 = scmp.lt.s32.totalorder %s14, 1
      %s162 = scalar_select %p161, %s14, 1
      %s163 = smul.addr %s162, 8
      %s164 = smul.addr %s163, 8
      %s165 = scalar_lea.vmem %s0, %s164
      %p166 = scmp.lt.s32.totalorder %s14, 1
      %s167 = scalar_select %p166, %s14, 1
      %s168 = smul.addr %s167, 2
      %s169 = smul.addr %s168, 8
      %s170 = scalar_lea.vmem %s3, %s169
      %vm171 = vcmask 146432
      %172 = vst.msk [vmem:[#allocation2] sm:$0xff] %vm171, 0.0
      %173 = vst.msk [vmem:[#allocation2 + $0x8] sm:$0xff] %vm171, 0.0
      %vm174 = vcmask 140288
      %175 = vst.msk [vmem:[#allocation2 + $0x10] sm:$0x3] %vm174, 0.0
      %176 = vst.msk [vmem:[#allocation2 + $0x18] sm:$0xff] %vm171, 0.0
      %177 = vst.msk [vmem:[#allocation2 + $0x20] sm:$0xff] %vm171, 0.0
      %178 = vst.msk [vmem:[#allocation2 + $0x28] sm:$0x3] %vm174, 0.0
      %179 = vst.msk [vmem:[#allocation2 + $0x30] sm:$0xff] %vm171, 0.0
      %180 = vst.msk [vmem:[#allocation2 + $0x38] sm:$0xff] %vm171, 0.0
      %181 = vst.msk [vmem:[#allocation2 + $0x40] sm:$0x3] %vm174, 0.0
      %182 = vst.msk [vmem:[#allocation2 + $0x48] sm:$0xff] %vm171, 0.0
      %183 = vst.msk [vmem:[#allocation2 + $0x50] sm:$0xff] %vm171, 0.0
      %184 = vst.msk [vmem:[#allocation2 + $0x58] sm:$0x3] %vm174, 0.0
      %v185 = vld [vmem:[%s165] sm:$0xff]
      %v186 = vld [vmem:[%s165 + $0x8] sm:$0xff]
      %v187 = vld [vmem:[%s165 + $0x10] sm:$0xff]
      %v188 = vld [vmem:[%s165 + $0x18] sm:$0xff]
      %v189 = vld [vmem:[%s165 + $0x20] sm:$0xff]
      %v190 = vld [vmem:[%s165 + $0x28] sm:$0xff]
      %v191 = vld [vmem:[%s165 + $0x30] sm:$0xff]
      %v192 = vld [vmem:[%s165 + $0x38] sm:$0xff]
      %201 = vrot.lane.b32.xlu0 %v185, 1
      %v202 = vpop.permute.xlu0 %201
      %203 = vrot.lane.b32.xlu0 %v186, 1
      %v204 = vpop.permute.xlu0 %203
      %205 = vrot.lane.b32.xlu0 %v187, 1
      %v206 = vpop.permute.xlu0 %205
      %207 = vrot.lane.b32.xlu0 %v188, 1
      %v208 = vpop.permute.xlu0 %207
      %209 = vrot.lane.b32.xlu0 %v189, 1
      %v210 = vpop.permute.xlu0 %209
      %211 = vrot.lane.b32.xlu0 %v190, 1
      %v212 = vpop.permute.xlu0 %211
      %213 = vrot.lane.b32.xlu0 %v191, 1
      %v214 = vpop.permute.xlu0 %213
      %215 = vrot.lane.b32.xlu0 %v192, 1
      %v216 = vpop.permute.xlu0 %215
      %vm225 = vcmask 138248
      %226 = vst.msk [vmem:[#allocation2 + $0x1] sm:$0xff] %vm225, %v202
      %227 = vst.msk [vmem:[#allocation2 + $0x9] sm:$0xff] %vm225, %v204
      %228 = vst.msk [vmem:[#allocation2 + $0x19] sm:$0xff] %vm225, %v206
      %229 = vst.msk [vmem:[#allocation2 + $0x21] sm:$0xff] %vm225, %v208
      %230 = vst.msk [vmem:[#allocation2 + $0x31] sm:$0xff] %vm225, %v210
      %231 = vst.msk [vmem:[#allocation2 + $0x39] sm:$0xff] %vm225, %v212
      %232 = vst.msk [vmem:[#allocation2 + $0x49] sm:$0xff] %vm225, %v214
      %233 = vst.msk [vmem:[#allocation2 + $0x51] sm:$0xff] %vm225, %v216
      %v234 = vld [vmem:[#allocation2] sm:$0xff]
      %v235 = vld [vmem:[#allocation2 + $0x8] sm:$0xff]
      %v236 = vld [vmem:[#allocation2 + $0x10] sm:$0x3]
      %v237 = vld [vmem:[#allocation2 + $0x18] sm:$0xff]
      %v238 = vld [vmem:[#allocation2 + $0x20] sm:$0xff]
      %v239 = vld [vmem:[#allocation2 + $0x28] sm:$0x3]
      %v240 = vld [vmem:[#allocation2 + $0x30] sm:$0xff]
      %v241 = vld [vmem:[#allocation2 + $0x38] sm:$0xff]
      %v242 = vld [vmem:[#allocation2 + $0x40] sm:$0x3]
      %v243 = vld [vmem:[#allocation2 + $0x48] sm:$0xff]
      %v244 = vld [vmem:[#allocation2 + $0x50] sm:$0xff]
      %v245 = vld [vmem:[#allocation2 + $0x58] sm:$0x3]
      %v246 = vcombine.low %v234, %v240
      %v247 = vcombine.high %v234, %v240
      %v249 = vunpack.c.l.s4 1983009808
      %v250 = vunpack.c.0.s8 %v249
      %v251 = vlaneseq
      %v252 = vshrl.u32 %v251, 7
      %v253 = vsub.s32 %v250, %v252
      %v254 = vrot.slane %v246, %v253
      %v256 = vunpack.c.l.s4 1983009808
      %v257 = vunpack.c.0.s8 %v256
      %v258 = vlaneseq
      %v259 = vshrl.u32 %v258, 7
      %v260 = vsub.s32 %v257, %v259
      %v261 = vrot.slane %v247, %v260
      %v262 = vcombine.low %v237, %v243
      %v263 = vcombine.high %v237, %v243
      %v265 = vunpack.c.l.s4 1983009808
      %v266 = vunpack.c.0.s8 %v265
      %v267 = vlaneseq
      %v268 = vshrl.u32 %v267, 7
      %v269 = vsub.s32 %v266, %v268
      %v270 = vrot.slane %v262, %v269
      %v272 = vunpack.c.l.s4 1983009808
      %v273 = vunpack.c.0.s8 %v272
      %v274 = vlaneseq
      %v275 = vshrl.u32 %v274, 7
      %v276 = vsub.s32 %v273, %v275
      %v277 = vrot.slane %v263, %v276
      %v278 = vcombine.low %v254, %v270
      %v279 = vcombine.high %v254, %v270
      %v281 = vunpack.c.l.s4 1934713408
      %v282 = vunpack.c.0.s8 %v281
      %v283 = vlaneseq
      %v284 = vshrl.u32 %v283, 7
      %v285 = vsub.s32 %v282, %v284
      %v286 = vrot.slane %v278, %v285
      %v288 = vunpack.c.l.s4 1934713408
      %v289 = vunpack.c.0.s8 %v288
      %v290 = vlaneseq
      %v291 = vshrl.u32 %v290, 7
      %v292 = vsub.s32 %v289, %v291
      %v293 = vrot.slane %v279, %v292
      %v294 = vcombine.low %v261, %v277
      %v295 = vcombine.high %v261, %v277
      %v297 = vunpack.c.l.s4 1934713408
      %v298 = vunpack.c.0.s8 %v297
      %v299 = vlaneseq
      %v300 = vshrl.u32 %v299, 7
      %v301 = vsub.s32 %v298, %v300
      %v302 = vrot.slane %v294, %v301
      %v304 = vunpack.c.l.s4 1934713408
      %v305 = vunpack.c.0.s8 %v304
      %v306 = vlaneseq
      %v307 = vshrl.u32 %v306, 7
      %v308 = vsub.s32 %v305, %v307
      %v309 = vrot.slane %v295, %v308
      %v310 = vcombine.high %v286, 0.0
      %v311 = vcombine.high %v293, 0.0
      %v312 = vcombine.high %v302, 0.0
      %v313 = vcombine.high %v309, 0.0
      %v314 = vcombine.low %v235, %v241
      %v315 = vcombine.high %v235, %v241
      %v317 = vunpack.c.l.s4 1983009808
      %v318 = vunpack.c.0.s8 %v317
      %v319 = vlaneseq
      %v320 = vshrl.u32 %v319, 7
      %v321 = vsub.s32 %v318, %v320
      %v322 = vrot.slane %v314, %v321
      %v324 = vunpack.c.l.s4 1983009808
      %v325 = vunpack.c.0.s8 %v324
      %v326 = vlaneseq
      %v327 = vshrl.u32 %v326, 7
      %v328 = vsub.s32 %v325, %v327
      %v329 = vrot.slane %v315, %v328
      %v330 = vcombine.low %v238, %v244
      %v331 = vcombine.high %v238, %v244
      %v333 = vunpack.c.l.s4 1983009808
      %v334 = vunpack.c.0.s8 %v333
      %v335 = vlaneseq
      %v336 = vshrl.u32 %v335, 7
      %v337 = vsub.s32 %v334, %v336
      %v338 = vrot.slane %v330, %v337
      %v340 = vunpack.c.l.s4 1983009808
      %v341 = vunpack.c.0.s8 %v340
      %v342 = vlaneseq
      %v343 = vshrl.u32 %v342, 7
      %v344 = vsub.s32 %v341, %v343
      %v345 = vrot.slane %v331, %v344
      %v346 = vcombine.low %v322, %v338
      %v347 = vcombine.high %v322, %v338
      %v349 = vunpack.c.l.s4 1934713408
      %v350 = vunpack.c.0.s8 %v349
      %v351 = vlaneseq
      %v352 = vshrl.u32 %v351, 7
      %v353 = vsub.s32 %v350, %v352
      %v354 = vrot.slane %v346, %v353
      %v356 = vunpack.c.l.s4 1934713408
      %v357 = vunpack.c.0.s8 %v356
      %v358 = vlaneseq
      %v359 = vshrl.u32 %v358, 7
      %v360 = vsub.s32 %v357, %v359
      %v361 = vrot.slane %v347, %v360
      %v362 = vcombine.low %v329, %v345
      %v363 = vcombine.high %v329, %v345
      %v365 = vunpack.c.l.s4 1934713408
      %v366 = vunpack.c.0.s8 %v365
      %v367 = vlaneseq
      %v368 = vshrl.u32 %v367, 7
      %v369 = vsub.s32 %v366, %v368
      %v370 = vrot.slane %v362, %v369
      %v372 = vunpack.c.l.s4 1934713408
      %v373 = vunpack.c.0.s8 %v372
      %v374 = vlaneseq
      %v375 = vshrl.u32 %v374, 7
      %v376 = vsub.s32 %v373, %v375
      %v377 = vrot.slane %v363, %v376
      %v378 = vcombine.high %v354, 0.0
      %v379 = vcombine.high %v361, 0.0
      %v380 = vcombine.high %v370, 0.0
      %v381 = vcombine.high %v377, 0.0
      %383 = vrot.lane.b32.xlu0 %v310, 16
      %v384 = vpop.permute.xlu0 %383
      %387 = vrot.lane.b32.xlu0 %v293, 32
      %v388 = vpop.permute.xlu0 %387
      %391 = vrot.lane.b32.xlu0 %v311, 48
      %v392 = vpop.permute.xlu0 %391
      %395 = vrot.lane.b32.xlu0 %v302, 64
      %v396 = vpop.permute.xlu0 %395
      %399 = vrot.lane.b32.xlu0 %v312, 80
      %v400 = vpop.permute.xlu0 %399
      %403 = vrot.lane.b32.xlu0 %v309, 96
      %v404 = vpop.permute.xlu0 %403
      %407 = vrot.lane.b32.xlu0 %v313, 112
      %v408 = vpop.permute.xlu0 %407
      %411 = vrot.lane.b32.xlu0 %v378, 16
      %v412 = vpop.permute.xlu0 %411
      %415 = vrot.lane.b32.xlu0 %v361, 32
      %v416 = vpop.permute.xlu0 %415
      %419 = vrot.lane.b32.xlu0 %v379, 48
      %v420 = vpop.permute.xlu0 %419
      %423 = vrot.lane.b32.xlu0 %v370, 64
      %v424 = vpop.permute.xlu0 %423
      %427 = vrot.lane.b32.xlu0 %v380, 80
      %v428 = vpop.permute.xlu0 %427
      %431 = vrot.lane.b32.xlu0 %v377, 96
      %v432 = vpop.permute.xlu0 %431
      %435 = vrot.lane.b32.xlu0 %v381, 112
      %v436 = vpop.permute.xlu0 %435
      %vm438 = vcmask 130048
      %v439 = vsel %vm438, %v286, %v384
      %vm440 = vcmask 261120
      %v441 = vsel %vm440, %v439, %v388
      %vm442 = vcmask 392192
      %v443 = vsel %vm442, %v441, %v392
      %vm444 = vcmask 523264
      %v445 = vsel %vm444, %v443, %v396
      %vm446 = vcmask 654336
      %v447 = vsel %vm446, %v445, %v400
      %vm448 = vcmask 785408
      %v449 = vsel %vm448, %v447, %v404
      %vm450 = vcmask 916480
      %v451 = vsel %vm450, %v449, %v408
      %v452 = vsel %vm438, %v354, %v412
      %v453 = vsel %vm440, %v452, %v416
      %v454 = vsel %vm442, %v453, %v420
      %v455 = vsel %vm444, %v454, %v424
      %v456 = vsel %vm446, %v455, %v428
      %v457 = vsel %vm448, %v456, %v432
      %v458 = vsel %vm450, %v457, %v436
      %467 = vrot.lane.b32.xlu0 %v234, 127
      %v468 = vpop.permute.xlu0 %467
      %469 = vrot.lane.b32.xlu0 %v235, 127
      %v470 = vpop.permute.xlu0 %469
      %471 = vrot.lane.b32.xlu0 %v237, 127
      %v472 = vpop.permute.xlu0 %471
      %473 = vrot.lane.b32.xlu0 %v238, 127
      %v474 = vpop.permute.xlu0 %473
      %475 = vrot.lane.b32.xlu0 %v240, 127
      %v476 = vpop.permute.xlu0 %475
      %477 = vrot.lane.b32.xlu0 %v241, 127
      %v478 = vpop.permute.xlu0 %477
      %479 = vrot.lane.b32.xlu0 %v243, 127
      %v480 = vpop.permute.xlu0 %479
      %481 = vrot.lane.b32.xlu0 %v244, 127
      %v482 = vpop.permute.xlu0 %481
      %v491 = vcombine.low %v468, %v476
      %v492 = vcombine.high %v468, %v476
      %v494 = vunpack.c.l.s4 1983009808
      %v495 = vunpack.c.0.s8 %v494
      %v496 = vlaneseq
      %v497 = vshrl.u32 %v496, 7
      %v498 = vsub.s32 %v495, %v497
      %v499 = vrot.slane %v491, %v498
      %v501 = vunpack.c.l.s4 1983009808
      %v502 = vunpack.c.0.s8 %v501
      %v503 = vlaneseq
      %v504 = vshrl.u32 %v503, 7
      %v505 = vsub.s32 %v502, %v504
      %v506 = vrot.slane %v492, %v505
      %v507 = vcombine.low %v472, %v480
      %v508 = vcombine.high %v472, %v480
      %v510 = vunpack.c.l.s4 1983009808
      %v511 = vunpack.c.0.s8 %v510
      %v512 = vlaneseq
      %v513 = vshrl.u32 %v512, 7
      %v514 = vsub.s32 %v511, %v513
      %v515 = vrot.slane %v507, %v514
      %v517 = vunpack.c.l.s4 1983009808
      %v518 = vunpack.c.0.s8 %v517
      %v519 = vlaneseq
      %v520 = vshrl.u32 %v519, 7
      %v521 = vsub.s32 %v518, %v520
      %v522 = vrot.slane %v508, %v521
      %v523 = vcombine.low %v499, %v515
      %v524 = vcombine.high %v499, %v515
      %v526 = vunpack.c.l.s4 1934713408
      %v527 = vunpack.c.0.s8 %v526
      %v528 = vlaneseq
      %v529 = vshrl.u32 %v528, 7
      %v530 = vsub.s32 %v527, %v529
      %v531 = vrot.slane %v523, %v530
      %v533 = vunpack.c.l.s4 1934713408
      %v534 = vunpack.c.0.s8 %v533
      %v535 = vlaneseq
      %v536 = vshrl.u32 %v535, 7
      %v537 = vsub.s32 %v534, %v536
      %v538 = vrot.slane %v524, %v537
      %v539 = vcombine.low %v506, %v522
      %v540 = vcombine.high %v506, %v522
      %v542 = vunpack.c.l.s4 1934713408
      %v543 = vunpack.c.0.s8 %v542
      %v544 = vlaneseq
      %v545 = vshrl.u32 %v544, 7
      %v546 = vsub.s32 %v543, %v545
      %v547 = vrot.slane %v539, %v546
      %v549 = vunpack.c.l.s4 1934713408
      %v550 = vunpack.c.0.s8 %v549
      %v551 = vlaneseq
      %v552 = vshrl.u32 %v551, 7
      %v553 = vsub.s32 %v550, %v552
      %v554 = vrot.slane %v540, %v553
      %v555 = vcombine.high %v531, 0.0
      %v556 = vcombine.high %v538, 0.0
      %v557 = vcombine.high %v547, 0.0
      %v558 = vcombine.high %v554, 0.0
      %v559 = vcombine.low %v470, %v478
      %v560 = vcombine.high %v470, %v478
      %v562 = vunpack.c.l.s4 1983009808
      %v563 = vunpack.c.0.s8 %v562
      %v564 = vlaneseq
      %v565 = vshrl.u32 %v564, 7
      %v566 = vsub.s32 %v563, %v565
      %v567 = vrot.slane %v559, %v566
      %v569 = vunpack.c.l.s4 1983009808
      %v570 = vunpack.c.0.s8 %v569
      %v571 = vlaneseq
      %v572 = vshrl.u32 %v571, 7
      %v573 = vsub.s32 %v570, %v572
      %v574 = vrot.slane %v560, %v573
      %v575 = vcombine.low %v474, %v482
      %v576 = vcombine.high %v474, %v482
      %v578 = vunpack.c.l.s4 1983009808
      %v579 = vunpack.c.0.s8 %v578
      %v580 = vlaneseq
      %v581 = vshrl.u32 %v580, 7
      %v582 = vsub.s32 %v579, %v581
      %v583 = vrot.slane %v575, %v582
      %v585 = vunpack.c.l.s4 1983009808
      %v586 = vunpack.c.0.s8 %v585
      %v587 = vlaneseq
      %v588 = vshrl.u32 %v587, 7
      %v589 = vsub.s32 %v586, %v588
      %v590 = vrot.slane %v576, %v589
      %v591 = vcombine.low %v567, %v583
      %v592 = vcombine.high %v567, %v583
      %v594 = vunpack.c.l.s4 1934713408
      %v595 = vunpack.c.0.s8 %v594
      %v596 = vlaneseq
      %v597 = vshrl.u32 %v596, 7
      %v598 = vsub.s32 %v595, %v597
      %v599 = vrot.slane %v591, %v598
      %v601 = vunpack.c.l.s4 1934713408
      %v602 = vunpack.c.0.s8 %v601
      %v603 = vlaneseq
      %v604 = vshrl.u32 %v603, 7
      %v605 = vsub.s32 %v602, %v604
      %v606 = vrot.slane %v592, %v605
      %v607 = vcombine.low %v574, %v590
      %v608 = vcombine.high %v574, %v590
      %v610 = vunpack.c.l.s4 1934713408
      %v611 = vunpack.c.0.s8 %v610
      %v612 = vlaneseq
      %v613 = vshrl.u32 %v612, 7
      %v614 = vsub.s32 %v611, %v613
      %v615 = vrot.slane %v607, %v614
      %v617 = vunpack.c.l.s4 1934713408
      %v618 = vunpack.c.0.s8 %v617
      %v619 = vlaneseq
      %v620 = vshrl.u32 %v619, 7
      %v621 = vsub.s32 %v618, %v620
      %v622 = vrot.slane %v608, %v621
      %v623 = vcombine.high %v599, 0.0
      %v624 = vcombine.high %v606, 0.0
      %v625 = vcombine.high %v615, 0.0
      %v626 = vcombine.high %v622, 0.0
      %628 = vrot.lane.b32.xlu0 %v555, 16
      %v629 = vpop.permute.xlu0 %628
      %632 = vrot.lane.b32.xlu0 %v538, 32
      %v633 = vpop.permute.xlu0 %632
      %636 = vrot.lane.b32.xlu0 %v556, 48
      %v637 = vpop.permute.xlu0 %636
      %640 = vrot.lane.b32.xlu0 %v547, 64
      %v641 = vpop.permute.xlu0 %640
      %644 = vrot.lane.b32.xlu0 %v557, 80
      %v645 = vpop.permute.xlu0 %644
      %648 = vrot.lane.b32.xlu0 %v554, 96
      %v649 = vpop.permute.xlu0 %648
      %652 = vrot.lane.b32.xlu0 %v558, 112
      %v653 = vpop.permute.xlu0 %652
      %656 = vrot.lane.b32.xlu0 %v623, 16
      %v657 = vpop.permute.xlu0 %656
      %660 = vrot.lane.b32.xlu0 %v606, 32
      %v661 = vpop.permute.xlu0 %660
      %664 = vrot.lane.b32.xlu0 %v624, 48
      %v665 = vpop.permute.xlu0 %664
      %668 = vrot.lane.b32.xlu0 %v615, 64
      %v669 = vpop.permute.xlu0 %668
      %672 = vrot.lane.b32.xlu0 %v625, 80
      %v673 = vpop.permute.xlu0 %672
      %676 = vrot.lane.b32.xlu0 %v622, 96
      %v677 = vpop.permute.xlu0 %676
      %680 = vrot.lane.b32.xlu0 %v626, 112
      %v681 = vpop.permute.xlu0 %680
      %v683 = vsel %vm438, %v531, %v629
      %v684 = vsel %vm440, %v683, %v633
      %v685 = vsel %vm442, %v684, %v637
      %v686 = vsel %vm444, %v685, %v641
      %v687 = vsel %vm446, %v686, %v645
      %v688 = vsel %vm448, %v687, %v649
      %v689 = vsel %vm450, %v688, %v653
      %v690 = vsel %vm438, %v599, %v657
      %v691 = vsel %vm440, %v690, %v661
      %v692 = vsel %vm442, %v691, %v665
      %v693 = vsel %vm444, %v692, %v669
      %v694 = vsel %vm446, %v693, %v673
      %v695 = vsel %vm448, %v694, %v677
      %v696 = vsel %vm450, %v695, %v681
      %697 = vrot.lane.b32.xlu0 %v234, 126
      %v698 = vpop.permute.xlu0 %697
      %699 = vrot.lane.b32.xlu0 %v235, 126
      %v700 = vpop.permute.xlu0 %699
      %701 = vrot.lane.b32.xlu0 %v237, 126
      %v702 = vpop.permute.xlu0 %701
      %703 = vrot.lane.b32.xlu0 %v238, 126
      %v704 = vpop.permute.xlu0 %703
      %705 = vrot.lane.b32.xlu0 %v240, 126
      %v706 = vpop.permute.xlu0 %705
      %707 = vrot.lane.b32.xlu0 %v241, 126
      %v708 = vpop.permute.xlu0 %707
      %709 = vrot.lane.b32.xlu0 %v243, 126
      %v710 = vpop.permute.xlu0 %709
      %711 = vrot.lane.b32.xlu0 %v244, 126
      %v712 = vpop.permute.xlu0 %711
      %v721 = vcombine.low %v698, %v706
      %v722 = vcombine.high %v698, %v706
      %v724 = vunpack.c.l.s4 1983009808
      %v725 = vunpack.c.0.s8 %v724
      %v726 = vlaneseq
      %v727 = vshrl.u32 %v726, 7
      %v728 = vsub.s32 %v725, %v727
      %v729 = vrot.slane %v721, %v728
      %v731 = vunpack.c.l.s4 1983009808
      %v732 = vunpack.c.0.s8 %v731
      %v733 = vlaneseq
      %v734 = vshrl.u32 %v733, 7
      %v735 = vsub.s32 %v732, %v734
      %v736 = vrot.slane %v722, %v735
      %v737 = vcombine.low %v702, %v710
      %v738 = vcombine.high %v702, %v710
      %v740 = vunpack.c.l.s4 1983009808
      %v741 = vunpack.c.0.s8 %v740
      %v742 = vlaneseq
      %v743 = vshrl.u32 %v742, 7
      %v744 = vsub.s32 %v741, %v743
      %v745 = vrot.slane %v737, %v744
      %v747 = vunpack.c.l.s4 1983009808
      %v748 = vunpack.c.0.s8 %v747
      %v749 = vlaneseq
      %v750 = vshrl.u32 %v749, 7
      %v751 = vsub.s32 %v748, %v750
      %v752 = vrot.slane %v738, %v751
      %v753 = vcombine.low %v729, %v745
      %v754 = vcombine.high %v729, %v745
      %v756 = vunpack.c.l.s4 1934713408
      %v757 = vunpack.c.0.s8 %v756
      %v758 = vlaneseq
      %v759 = vshrl.u32 %v758, 7
      %v760 = vsub.s32 %v757, %v759
      %v761 = vrot.slane %v753, %v760
      %v763 = vunpack.c.l.s4 1934713408
      %v764 = vunpack.c.0.s8 %v763
      %v765 = vlaneseq
      %v766 = vshrl.u32 %v765, 7
      %v767 = vsub.s32 %v764, %v766
      %v768 = vrot.slane %v754, %v767
      %v769 = vcombine.low %v736, %v752
      %v770 = vcombine.high %v736, %v752
      %v772 = vunpack.c.l.s4 1934713408
      %v773 = vunpack.c.0.s8 %v772
      %v774 = vlaneseq
      %v775 = vshrl.u32 %v774, 7
      %v776 = vsub.s32 %v773, %v775
      %v777 = vrot.slane %v769, %v776
      %v779 = vunpack.c.l.s4 1934713408
      %v780 = vunpack.c.0.s8 %v779
      %v781 = vlaneseq
      %v782 = vshrl.u32 %v781, 7
      %v783 = vsub.s32 %v780, %v782
      %v784 = vrot.slane %v770, %v783
      %v785 = vcombine.high %v761, 0.0
      %v786 = vcombine.high %v768, 0.0
      %v787 = vcombine.high %v777, 0.0
      %v788 = vcombine.high %v784, 0.0
      %v789 = vcombine.low %v700, %v708
      %v790 = vcombine.high %v700, %v708
      %v792 = vunpack.c.l.s4 1983009808
      %v793 = vunpack.c.0.s8 %v792
      %v794 = vlaneseq
      %v795 = vshrl.u32 %v794, 7
      %v796 = vsub.s32 %v793, %v795
      %v797 = vrot.slane %v789, %v796
      %v799 = vunpack.c.l.s4 1983009808
      %v800 = vunpack.c.0.s8 %v799
      %v801 = vlaneseq
      %v802 = vshrl.u32 %v801, 7
      %v803 = vsub.s32 %v800, %v802
      %v804 = vrot.slane %v790, %v803
      %v805 = vcombine.low %v704, %v712
      %v806 = vcombine.high %v704, %v712
      %v808 = vunpack.c.l.s4 1983009808
      %v809 = vunpack.c.0.s8 %v808
      %v810 = vlaneseq
      %v811 = vshrl.u32 %v810, 7
      %v812 = vsub.s32 %v809, %v811
      %v813 = vrot.slane %v805, %v812
      %v815 = vunpack.c.l.s4 1983009808
      %v816 = vunpack.c.0.s8 %v815
      %v817 = vlaneseq
      %v818 = vshrl.u32 %v817, 7
      %v819 = vsub.s32 %v816, %v818
      %v820 = vrot.slane %v806, %v819
      %v821 = vcombine.low %v797, %v813
      %v822 = vcombine.high %v797, %v813
      %v824 = vunpack.c.l.s4 1934713408
      %v825 = vunpack.c.0.s8 %v824
      %v826 = vlaneseq
      %v827 = vshrl.u32 %v826, 7
      %v828 = vsub.s32 %v825, %v827
      %v829 = vrot.slane %v821, %v828
      %v831 = vunpack.c.l.s4 1934713408
      %v832 = vunpack.c.0.s8 %v831
      %v833 = vlaneseq
      %v834 = vshrl.u32 %v833, 7
      %v835 = vsub.s32 %v832, %v834
      %v836 = vrot.slane %v822, %v835
      %v837 = vcombine.low %v804, %v820
      %v838 = vcombine.high %v804, %v820
      %v840 = vunpack.c.l.s4 1934713408
      %v841 = vunpack.c.0.s8 %v840
      %v842 = vlaneseq
      %v843 = vshrl.u32 %v842, 7
      %v844 = vsub.s32 %v841, %v843
      %v845 = vrot.slane %v837, %v844
      %v847 = vunpack.c.l.s4 1934713408
      %v848 = vunpack.c.0.s8 %v847
      %v849 = vlaneseq
      %v850 = vshrl.u32 %v849, 7
      %v851 = vsub.s32 %v848, %v850
      %v852 = vrot.slane %v838, %v851
      %v853 = vcombine.high %v829, 0.0
      %v854 = vcombine.high %v836, 0.0
      %v855 = vcombine.high %v845, 0.0
      %v856 = vcombine.high %v852, 0.0
      %858 = vrot.lane.b32.xlu0 %v785, 16
      %v859 = vpop.permute.xlu0 %858
      %862 = vrot.lane.b32.xlu0 %v768, 32
      %v863 = vpop.permute.xlu0 %862
      %866 = vrot.lane.b32.xlu0 %v786, 48
      %v867 = vpop.permute.xlu0 %866
      %870 = vrot.lane.b32.xlu0 %v777, 64
      %v871 = vpop.permute.xlu0 %870
      %874 = vrot.lane.b32.xlu0 %v787, 80
      %v875 = vpop.permute.xlu0 %874
      %878 = vrot.lane.b32.xlu0 %v784, 96
      %v879 = vpop.permute.xlu0 %878
      %882 = vrot.lane.b32.xlu0 %v788, 112
      %v883 = vpop.permute.xlu0 %882
      %886 = vrot.lane.b32.xlu0 %v853, 16
      %v887 = vpop.permute.xlu0 %886
      %890 = vrot.lane.b32.xlu0 %v836, 32
      %v891 = vpop.permute.xlu0 %890
      %894 = vrot.lane.b32.xlu0 %v854, 48
      %v895 = vpop.permute.xlu0 %894
      %898 = vrot.lane.b32.xlu0 %v845, 64
      %v899 = vpop.permute.xlu0 %898
      %902 = vrot.lane.b32.xlu0 %v855, 80
      %v903 = vpop.permute.xlu0 %902
      %906 = vrot.lane.b32.xlu0 %v852, 96
      %v907 = vpop.permute.xlu0 %906
      %910 = vrot.lane.b32.xlu0 %v856, 112
      %v911 = vpop.permute.xlu0 %910
      %v913 = vsel %vm438, %v761, %v859
      %v914 = vsel %vm440, %v913, %v863
      %v915 = vsel %vm442, %v914, %v867
      %v916 = vsel %vm444, %v915, %v871
      %v917 = vsel %vm446, %v916, %v875
      %v918 = vsel %vm448, %v917, %v879
      %v919 = vsel %vm450, %v918, %v883
      %v920 = vsel %vm438, %v829, %v887
      %v921 = vsel %vm440, %v920, %v891
      %v922 = vsel %vm442, %v921, %v895
      %v923 = vsel %vm444, %v922, %v899
      %v924 = vsel %vm446, %v923, %v903
      %v925 = vsel %vm448, %v924, %v907
      %v926 = vsel %vm450, %v925, %v911
      %vm931 = vcmask 1046528
      %v932 = vrot.slane %v234, 1
      %v933 = vrot.slane %v235, 1
      %v934 = vsel %vm931, %v932, %v933
      %v935 = vrot.slane %v236, 1
      %v936 = vsel %vm931, %v933, %v935
      %v937 = vrot.slane %v237, 1
      %v938 = vrot.slane %v238, 1
      %v939 = vsel %vm931, %v937, %v938
      %v940 = vrot.slane %v239, 1
      %v941 = vsel %vm931, %v938, %v940
      %v942 = vrot.slane %v240, 1
      %v943 = vrot.slane %v241, 1
      %v944 = vsel %vm931, %v942, %v943
      %v945 = vrot.slane %v242, 1
      %v946 = vsel %vm931, %v943, %v945
      %v947 = vrot.slane %v243, 1
      %v948 = vrot.slane %v244, 1
      %v949 = vsel %vm931, %v947, %v948
      %v950 = vrot.slane %v245, 1
      %v951 = vsel %vm931, %v948, %v950
      %v960 = vcombine.low %v934, %v944
      %v961 = vcombine.high %v934, %v944
      %v963 = vunpack.c.l.s4 1983009808
      %v964 = vunpack.c.0.s8 %v963
      %v965 = vlaneseq
      %v966 = vshrl.u32 %v965, 7
      %v967 = vsub.s32 %v964, %v966
      %v968 = vrot.slane %v960, %v967
      %v970 = vunpack.c.l.s4 1983009808
      %v971 = vunpack.c.0.s8 %v970
      %v972 = vlaneseq
      %v973 = vshrl.u32 %v972, 7
      %v974 = vsub.s32 %v971, %v973
      %v975 = vrot.slane %v961, %v974
      %v976 = vcombine.low %v939, %v949
      %v977 = vcombine.high %v939, %v949
      %v979 = vunpack.c.l.s4 1983009808
      %v980 = vunpack.c.0.s8 %v979
      %v981 = vlaneseq
      %v982 = vshrl.u32 %v981, 7
      %v983 = vsub.s32 %v980, %v982
      %v984 = vrot.slane %v976, %v983
      %v986 = vunpack.c.l.s4 1983009808
      %v987 = vunpack.c.0.s8 %v986
      %v988 = vlaneseq
      %v989 = vshrl.u32 %v988, 7
      %v990 = vsub.s32 %v987, %v989
      %v991 = vrot.slane %v977, %v990
      %v992 = vcombine.low %v968, %v984
      %v993 = vcombine.high %v968, %v984
      %v995 = vunpack.c.l.s4 1934713408
      %v996 = vunpack.c.0.s8 %v995
      %v997 = vlaneseq
      %v998 = vshrl.u32 %v997, 7
      %v999 = vsub.s32 %v996, %v998
      %v1000 = vrot.slane %v992, %v999
      %v1002 = vunpack.c.l.s4 1934713408
      %v1003 = vunpack.c.0.s8 %v1002
      %v1004 = vlaneseq
      %v1005 = vshrl.u32 %v1004, 7
      %v1006 = vsub.s32 %v1003, %v1005
      %v1007 = vrot.slane %v993, %v1006
      %v1008 = vcombine.low %v975, %v991
      %v1009 = vcombine.high %v975, %v991
      %v1011 = vunpack.c.l.s4 1934713408
      %v1012 = vunpack.c.0.s8 %v1011
      %v1013 = vlaneseq
      %v1014 = vshrl.u32 %v1013, 7
      %v1015 = vsub.s32 %v1012, %v1014
      %v1016 = vrot.slane %v1008, %v1015
      %v1018 = vunpack.c.l.s4 1934713408
      %v1019 = vunpack.c.0.s8 %v1018
      %v1020 = vlaneseq
      %v1021 = vshrl.u32 %v1020, 7
      %v1022 = vsub.s32 %v1019, %v1021
      %v1023 = vrot.slane %v1009, %v1022
      %v1024 = vcombine.high %v1000, 0.0
      %v1025 = vcombine.high %v1007, 0.0
      %v1026 = vcombine.high %v1016, 0.0
      %v1027 = vcombine.high %v1023, 0.0
      %v1028 = vcombine.low %v936, %v946
      %v1029 = vcombine.high %v936, %v946
      %v1031 = vunpack.c.l.s4 1983009808
      %v1032 = vunpack.c.0.s8 %v1031
      %v1033 = vlaneseq
      %v1034 = vshrl.u32 %v1033, 7
      %v1035 = vsub.s32 %v1032, %v1034
      %v1036 = vrot.slane %v1028, %v1035
      %v1038 = vunpack.c.l.s4 1983009808
      %v1039 = vunpack.c.0.s8 %v1038
      %v1040 = vlaneseq
      %v1041 = vshrl.u32 %v1040, 7
      %v1042 = vsub.s32 %v1039, %v1041
      %v1043 = vrot.slane %v1029, %v1042
      %v1044 = vcombine.low %v941, %v951
      %v1045 = vcombine.high %v941, %v951
      %v1047 = vunpack.c.l.s4 1983009808
      %v1048 = vunpack.c.0.s8 %v1047
      %v1049 = vlaneseq
      %v1050 = vshrl.u32 %v1049, 7
      %v1051 = vsub.s32 %v1048, %v1050
      %v1052 = vrot.slane %v1044, %v1051
      %v1054 = vunpack.c.l.s4 1983009808
      %v1055 = vunpack.c.0.s8 %v1054
      %v1056 = vlaneseq
      %v1057 = vshrl.u32 %v1056, 7
      %v1058 = vsub.s32 %v1055, %v1057
      %v1059 = vrot.slane %v1045, %v1058
      %v1060 = vcombine.low %v1036, %v1052
      %v1061 = vcombine.high %v1036, %v1052
      %v1063 = vunpack.c.l.s4 1934713408
      %v1064 = vunpack.c.0.s8 %v1063
      %v1065 = vlaneseq
      %v1066 = vshrl.u32 %v1065, 7
      %v1067 = vsub.s32 %v1064, %v1066
      %v1068 = vrot.slane %v1060, %v1067
      %v1070 = vunpack.c.l.s4 1934713408
      %v1071 = vunpack.c.0.s8 %v1070
      %v1072 = vlaneseq
      %v1073 = vshrl.u32 %v1072, 7
      %v1074 = vsub.s32 %v1071, %v1073
      %v1075 = vrot.slane %v1061, %v1074
      %v1076 = vcombine.low %v1043, %v1059
      %v1077 = vcombine.high %v1043, %v1059
      %v1079 = vunpack.c.l.s4 1934713408
      %v1080 = vunpack.c.0.s8 %v1079
      %v1081 = vlaneseq
      %v1082 = vshrl.u32 %v1081, 7
      %v1083 = vsub.s32 %v1080, %v1082
      %v1084 = vrot.slane %v1076, %v1083
      %v1086 = vunpack.c.l.s4 1934713408
      %v1087 = vunpack.c.0.s8 %v1086
      %v1088 = vlaneseq
      %v1089 = vshrl.u32 %v1088, 7
      %v1090 = vsub.s32 %v1087, %v1089
      %v1091 = vrot.slane %v1077, %v1090
      %v1092 = vcombine.high %v1068, 0.0
      %v1093 = vcombine.high %v1075, 0.0
      %v1094 = vcombine.high %v1084, 0.0
      %v1095 = vcombine.high %v1091, 0.0
      %1097 = vrot.lane.b32.xlu0 %v1024, 16
      %v1098 = vpop.permute.xlu0 %1097
      %1101 = vrot.lane.b32.xlu0 %v1007, 32
      %v1102 = vpop.permute.xlu0 %1101
      %1105 = vrot.lane.b32.xlu0 %v1025, 48
      %v1106 = vpop.permute.xlu0 %1105
      %1109 = vrot.lane.b32.xlu0 %v1016, 64
      %v1110 = vpop.permute.xlu0 %1109
      %1113 = vrot.lane.b32.xlu0 %v1026, 80
      %v1114 = vpop.permute.xlu0 %1113
      %1117 = vrot.lane.b32.xlu0 %v1023, 96
      %v1118 = vpop.permute.xlu0 %1117
      %1121 = vrot.lane.b32.xlu0 %v1027, 112
      %v1122 = vpop.permute.xlu0 %1121
      %1125 = vrot.lane.b32.xlu0 %v1092, 16
      %v1126 = vpop.permute.xlu0 %1125
      %1129 = vrot.lane.b32.xlu0 %v1075, 32
      %v1130 = vpop.permute.xlu0 %1129
      %1133 = vrot.lane.b32.xlu0 %v1093, 48
      %v1134 = vpop.permute.xlu0 %1133
      %1137 = vrot.lane.b32.xlu0 %v1084, 64
      %v1138 = vpop.permute.xlu0 %1137
      %1141 = vrot.lane.b32.xlu0 %v1094, 80
      %v1142 = vpop.permute.xlu0 %1141
      %1145 = vrot.lane.b32.xlu0 %v1091, 96
      %v1146 = vpop.permute.xlu0 %1145
      %1149 = vrot.lane.b32.xlu0 %v1095, 112
      %v1150 = vpop.permute.xlu0 %1149
      %v1152 = vsel %vm438, %v1000, %v1098
      %v1153 = vsel %vm440, %v1152, %v1102
      %v1154 = vsel %vm442, %v1153, %v1106
      %v1155 = vsel %vm444, %v1154, %v1110
      %v1156 = vsel %vm446, %v1155, %v1114
      %v1157 = vsel %vm448, %v1156, %v1118
      %v1158 = vsel %vm450, %v1157, %v1122
      %v1159 = vsel %vm438, %v1068, %v1126
      %v1160 = vsel %vm440, %v1159, %v1130
      %v1161 = vsel %vm442, %v1160, %v1134
      %v1162 = vsel %vm444, %v1161, %v1138
      %v1163 = vsel %vm446, %v1162, %v1142
      %v1164 = vsel %vm448, %v1163, %v1146
      %v1165 = vsel %vm450, %v1164, %v1150
      %1166 = vrot.lane.b32.xlu0 %v934, 127
      %v1167 = vpop.permute.xlu0 %1166
      %1168 = vrot.lane.b32.xlu0 %v936, 127
      %v1169 = vpop.permute.xlu0 %1168
      %1170 = vrot.lane.b32.xlu0 %v939, 127
      %v1171 = vpop.permute.xlu0 %1170
      %1172 = vrot.lane.b32.xlu0 %v941, 127
      %v1173 = vpop.permute.xlu0 %1172
      %1174 = vrot.lane.b32.xlu0 %v944, 127
      %v1175 = vpop.permute.xlu0 %1174
      %1176 = vrot.lane.b32.xlu0 %v946, 127
      %v1177 = vpop.permute.xlu0 %1176
      %1178 = vrot.lane.b32.xlu0 %v949, 127
      %v1179 = vpop.permute.xlu0 %1178
      %1180 = vrot.lane.b32.xlu0 %v951, 127
      %v1181 = vpop.permute.xlu0 %1180
      %v1190 = vcombine.low %v1167, %v1175
      %v1191 = vcombine.high %v1167, %v1175
      %v1193 = vunpack.c.l.s4 1983009808
      %v1194 = vunpack.c.0.s8 %v1193
      %v1195 = vlaneseq
      %v1196 = vshrl.u32 %v1195, 7
      %v1197 = vsub.s32 %v1194, %v1196
      %v1198 = vrot.slane %v1190, %v1197
      %v1200 = vunpack.c.l.s4 1983009808
      %v1201 = vunpack.c.0.s8 %v1200
      %v1202 = vlaneseq
      %v1203 = vshrl.u32 %v1202, 7
      %v1204 = vsub.s32 %v1201, %v1203
      %v1205 = vrot.slane %v1191, %v1204
      %v1206 = vcombine.low %v1171, %v1179
      %v1207 = vcombine.high %v1171, %v1179
      %v1209 = vunpack.c.l.s4 1983009808
      %v1210 = vunpack.c.0.s8 %v1209
      %v1211 = vlaneseq
      %v1212 = vshrl.u32 %v1211, 7
      %v1213 = vsub.s32 %v1210, %v1212
      %v1214 = vrot.slane %v1206, %v1213
      %v1216 = vunpack.c.l.s4 1983009808
      %v1217 = vunpack.c.0.s8 %v1216
      %v1218 = vlaneseq
      %v1219 = vshrl.u32 %v1218, 7
      %v1220 = vsub.s32 %v1217, %v1219
      %v1221 = vrot.slane %v1207, %v1220
      %v1222 = vcombine.low %v1198, %v1214
      %v1223 = vcombine.high %v1198, %v1214
      %v1225 = vunpack.c.l.s4 1934713408
      %v1226 = vunpack.c.0.s8 %v1225
      %v1227 = vlaneseq
      %v1228 = vshrl.u32 %v1227, 7
      %v1229 = vsub.s32 %v1226, %v1228
      %v1230 = vrot.slane %v1222, %v1229
      %v1232 = vunpack.c.l.s4 1934713408
      %v1233 = vunpack.c.0.s8 %v1232
      %v1234 = vlaneseq
      %v1235 = vshrl.u32 %v1234, 7
      %v1236 = vsub.s32 %v1233, %v1235
      %v1237 = vrot.slane %v1223, %v1236
      %v1238 = vcombine.low %v1205, %v1221
      %v1239 = vcombine.high %v1205, %v1221
      %v1241 = vunpack.c.l.s4 1934713408
      %v1242 = vunpack.c.0.s8 %v1241
      %v1243 = vlaneseq
      %v1244 = vshrl.u32 %v1243, 7
      %v1245 = vsub.s32 %v1242, %v1244
      %v1246 = vrot.slane %v1238, %v1245
      %v1248 = vunpack.c.l.s4 1934713408
      %v1249 = vunpack.c.0.s8 %v1248
      %v1250 = vlaneseq
      %v1251 = vshrl.u32 %v1250, 7
      %v1252 = vsub.s32 %v1249, %v1251
      %v1253 = vrot.slane %v1239, %v1252
      %v1254 = vcombine.high %v1230, 0.0
      %v1255 = vcombine.high %v1237, 0.0
      %v1256 = vcombine.high %v1246, 0.0
      %v1257 = vcombine.high %v1253, 0.0
      %v1258 = vcombine.low %v1169, %v1177
      %v1259 = vcombine.high %v1169, %v1177
      %v1261 = vunpack.c.l.s4 1983009808
      %v1262 = vunpack.c.0.s8 %v1261
      %v1263 = vlaneseq
      %v1264 = vshrl.u32 %v1263, 7
      %v1265 = vsub.s32 %v1262, %v1264
      %v1266 = vrot.slane %v1258, %v1265
      %v1268 = vunpack.c.l.s4 1983009808
      %v1269 = vunpack.c.0.s8 %v1268
      %v1270 = vlaneseq
      %v1271 = vshrl.u32 %v1270, 7
      %v1272 = vsub.s32 %v1269, %v1271
      %v1273 = vrot.slane %v1259, %v1272
      %v1274 = vcombine.low %v1173, %v1181
      %v1275 = vcombine.high %v1173, %v1181
      %v1277 = vunpack.c.l.s4 1983009808
      %v1278 = vunpack.c.0.s8 %v1277
      %v1279 = vlaneseq
      %v1280 = vshrl.u32 %v1279, 7
      %v1281 = vsub.s32 %v1278, %v1280
      %v1282 = vrot.slane %v1274, %v1281
      %v1284 = vunpack.c.l.s4 1983009808
      %v1285 = vunpack.c.0.s8 %v1284
      %v1286 = vlaneseq
      %v1287 = vshrl.u32 %v1286, 7
      %v1288 = vsub.s32 %v1285, %v1287
      %v1289 = vrot.slane %v1275, %v1288
      %v1290 = vcombine.low %v1266, %v1282
      %v1291 = vcombine.high %v1266, %v1282
      %v1293 = vunpack.c.l.s4 1934713408
      %v1294 = vunpack.c.0.s8 %v1293
      %v1295 = vlaneseq
      %v1296 = vshrl.u32 %v1295, 7
      %v1297 = vsub.s32 %v1294, %v1296
      %v1298 = vrot.slane %v1290, %v1297
      %v1300 = vunpack.c.l.s4 1934713408
      %v1301 = vunpack.c.0.s8 %v1300
      %v1302 = vlaneseq
      %v1303 = vshrl.u32 %v1302, 7
      %v1304 = vsub.s32 %v1301, %v1303
      %v1305 = vrot.slane %v1291, %v1304
      %v1306 = vcombine.low %v1273, %v1289
      %v1307 = vcombine.high %v1273, %v1289
      %v1309 = vunpack.c.l.s4 1934713408
      %v1310 = vunpack.c.0.s8 %v1309
      %v1311 = vlaneseq
      %v1312 = vshrl.u32 %v1311, 7
      %v1313 = vsub.s32 %v1310, %v1312
      %v1314 = vrot.slane %v1306, %v1313
      %v1316 = vunpack.c.l.s4 1934713408
      %v1317 = vunpack.c.0.s8 %v1316
      %v1318 = vlaneseq
      %v1319 = vshrl.u32 %v1318, 7
      %v1320 = vsub.s32 %v1317, %v1319
      %v1321 = vrot.slane %v1307, %v1320
      %v1322 = vcombine.high %v1298, 0.0
      %v1323 = vcombine.high %v1305, 0.0
      %v1324 = vcombine.high %v1314, 0.0
      %v1325 = vcombine.high %v1321, 0.0
      %1327 = vrot.lane.b32.xlu0 %v1254, 16
      %v1328 = vpop.permute.xlu0 %1327
      %1331 = vrot.lane.b32.xlu0 %v1237, 32
      %v1332 = vpop.permute.xlu0 %1331
      %1335 = vrot.lane.b32.xlu0 %v1255, 48
      %v1336 = vpop.permute.xlu0 %1335
      %1339 = vrot.lane.b32.xlu0 %v1246, 64
      %v1340 = vpop.permute.xlu0 %1339
      %1343 = vrot.lane.b32.xlu0 %v1256, 80
      %v1344 = vpop.permute.xlu0 %1343
      %1347 = vrot.lane.b32.xlu0 %v1253, 96
      %v1348 = vpop.permute.xlu0 %1347
      %1351 = vrot.lane.b32.xlu0 %v1257, 112
      %v1352 = vpop.permute.xlu0 %1351
      %1355 = vrot.lane.b32.xlu0 %v1322, 16
      %v1356 = vpop.permute.xlu0 %1355
      %1359 = vrot.lane.b32.xlu0 %v1305, 32
      %v1360 = vpop.permute.xlu0 %1359
      %1363 = vrot.lane.b32.xlu0 %v1323, 48
      %v1364 = vpop.permute.xlu0 %1363
      %1367 = vrot.lane.b32.xlu0 %v1314, 64
      %v1368 = vpop.permute.xlu0 %1367
      %1371 = vrot.lane.b32.xlu0 %v1324, 80
      %v1372 = vpop.permute.xlu0 %1371
      %1375 = vrot.lane.b32.xlu0 %v1321, 96
      %v1376 = vpop.permute.xlu0 %1375
      %1379 = vrot.lane.b32.xlu0 %v1325, 112
      %v1380 = vpop.permute.xlu0 %1379
      %v1382 = vsel %vm438, %v1230, %v1328
      %v1383 = vsel %vm440, %v1382, %v1332
      %v1384 = vsel %vm442, %v1383, %v1336
      %v1385 = vsel %vm444, %v1384, %v1340
      %v1386 = vsel %vm446, %v1385, %v1344
      %v1387 = vsel %vm448, %v1386, %v1348
      %v1388 = vsel %vm450, %v1387, %v1352
      %v1389 = vsel %vm438, %v1298, %v1356
      %v1390 = vsel %vm440, %v1389, %v1360
      %v1391 = vsel %vm442, %v1390, %v1364
      %v1392 = vsel %vm444, %v1391, %v1368
      %v1393 = vsel %vm446, %v1392, %v1372
      %v1394 = vsel %vm448, %v1393, %v1376
      %v1395 = vsel %vm450, %v1394, %v1380
      %1396 = vrot.lane.b32.xlu0 %v934, 126
      %v1397 = vpop.permute.xlu0 %1396
      %1398 = vrot.lane.b32.xlu0 %v936, 126
      %v1399 = vpop.permute.xlu0 %1398
      %1400 = vrot.lane.b32.xlu0 %v939, 126
      %v1401 = vpop.permute.xlu0 %1400
      %1402 = vrot.lane.b32.xlu0 %v941, 126
      %v1403 = vpop.permute.xlu0 %1402
      %1404 = vrot.lane.b32.xlu0 %v944, 126
      %v1405 = vpop.permute.xlu0 %1404
      %1406 = vrot.lane.b32.xlu0 %v946, 126
      %v1407 = vpop.permute.xlu0 %1406
      %1408 = vrot.lane.b32.xlu0 %v949, 126
      %v1409 = vpop.permute.xlu0 %1408
      %1410 = vrot.lane.b32.xlu0 %v951, 126
      %v1411 = vpop.permute.xlu0 %1410
      %v1420 = vcombine.low %v1397, %v1405
      %v1421 = vcombine.high %v1397, %v1405
      %v1423 = vunpack.c.l.s4 1983009808
      %v1424 = vunpack.c.0.s8 %v1423
      %v1425 = vlaneseq
      %v1426 = vshrl.u32 %v1425, 7
      %v1427 = vsub.s32 %v1424, %v1426
      %v1428 = vrot.slane %v1420, %v1427
      %v1430 = vunpack.c.l.s4 1983009808
      %v1431 = vunpack.c.0.s8 %v1430
      %v1432 = vlaneseq
      %v1433 = vshrl.u32 %v1432, 7
      %v1434 = vsub.s32 %v1431, %v1433
      %v1435 = vrot.slane %v1421, %v1434
      %v1436 = vcombine.low %v1401, %v1409
      %v1437 = vcombine.high %v1401, %v1409
      %v1439 = vunpack.c.l.s4 1983009808
      %v1440 = vunpack.c.0.s8 %v1439
      %v1441 = vlaneseq
      %v1442 = vshrl.u32 %v1441, 7
      %v1443 = vsub.s32 %v1440, %v1442
      %v1444 = vrot.slane %v1436, %v1443
      %v1446 = vunpack.c.l.s4 1983009808
      %v1447 = vunpack.c.0.s8 %v1446
      %v1448 = vlaneseq
      %v1449 = vshrl.u32 %v1448, 7
      %v1450 = vsub.s32 %v1447, %v1449
      %v1451 = vrot.slane %v1437, %v1450
      %v1452 = vcombine.low %v1428, %v1444
      %v1453 = vcombine.high %v1428, %v1444
      %v1455 = vunpack.c.l.s4 1934713408
      %v1456 = vunpack.c.0.s8 %v1455
      %v1457 = vlaneseq
      %v1458 = vshrl.u32 %v1457, 7
      %v1459 = vsub.s32 %v1456, %v1458
      %v1460 = vrot.slane %v1452, %v1459
      %v1462 = vunpack.c.l.s4 1934713408
      %v1463 = vunpack.c.0.s8 %v1462
      %v1464 = vlaneseq
      %v1465 = vshrl.u32 %v1464, 7
      %v1466 = vsub.s32 %v1463, %v1465
      %v1467 = vrot.slane %v1453, %v1466
      %v1468 = vcombine.low %v1435, %v1451
      %v1469 = vcombine.high %v1435, %v1451
      %v1471 = vunpack.c.l.s4 1934713408
      %v1472 = vunpack.c.0.s8 %v1471
      %v1473 = vlaneseq
      %v1474 = vshrl.u32 %v1473, 7
      %v1475 = vsub.s32 %v1472, %v1474
      %v1476 = vrot.slane %v1468, %v1475
      %v1478 = vunpack.c.l.s4 1934713408
      %v1479 = vunpack.c.0.s8 %v1478
      %v1480 = vlaneseq
      %v1481 = vshrl.u32 %v1480, 7
      %v1482 = vsub.s32 %v1479, %v1481
      %v1483 = vrot.slane %v1469, %v1482
      %v1484 = vcombine.high %v1460, 0.0
      %v1485 = vcombine.high %v1467, 0.0
      %v1486 = vcombine.high %v1476, 0.0
      %v1487 = vcombine.high %v1483, 0.0
      %v1488 = vcombine.low %v1399, %v1407
      %v1489 = vcombine.high %v1399, %v1407
      %v1491 = vunpack.c.l.s4 1983009808
      %v1492 = vunpack.c.0.s8 %v1491
      %v1493 = vlaneseq
      %v1494 = vshrl.u32 %v1493, 7
      %v1495 = vsub.s32 %v1492, %v1494
      %v1496 = vrot.slane %v1488, %v1495
      %v1498 = vunpack.c.l.s4 1983009808
      %v1499 = vunpack.c.0.s8 %v1498
      %v1500 = vlaneseq
      %v1501 = vshrl.u32 %v1500, 7
      %v1502 = vsub.s32 %v1499, %v1501
      %v1503 = vrot.slane %v1489, %v1502
      %v1504 = vcombine.low %v1403, %v1411
      %v1505 = vcombine.high %v1403, %v1411
      %v1507 = vunpack.c.l.s4 1983009808
      %v1508 = vunpack.c.0.s8 %v1507
      %v1509 = vlaneseq
      %v1510 = vshrl.u32 %v1509, 7
      %v1511 = vsub.s32 %v1508, %v1510
      %v1512 = vrot.slane %v1504, %v1511
      %v1514 = vunpack.c.l.s4 1983009808
      %v1515 = vunpack.c.0.s8 %v1514
      %v1516 = vlaneseq
      %v1517 = vshrl.u32 %v1516, 7
      %v1518 = vsub.s32 %v1515, %v1517
      %v1519 = vrot.slane %v1505, %v1518
      %v1520 = vcombine.low %v1496, %v1512
      %v1521 = vcombine.high %v1496, %v1512
      %v1523 = vunpack.c.l.s4 1934713408
      %v1524 = vunpack.c.0.s8 %v1523
      %v1525 = vlaneseq
      %v1526 = vshrl.u32 %v1525, 7
      %v1527 = vsub.s32 %v1524, %v1526
      %v1528 = vrot.slane %v1520, %v1527
      %v1530 = vunpack.c.l.s4 1934713408
      %v1531 = vunpack.c.0.s8 %v1530
      %v1532 = vlaneseq
      %v1533 = vshrl.u32 %v1532, 7
      %v1534 = vsub.s32 %v1531, %v1533
      %v1535 = vrot.slane %v1521, %v1534
      %v1536 = vcombine.low %v1503, %v1519
      %v1537 = vcombine.high %v1503, %v1519
      %v1539 = vunpack.c.l.s4 1934713408
      %v1540 = vunpack.c.0.s8 %v1539
      %v1541 = vlaneseq
      %v1542 = vshrl.u32 %v1541, 7
      %v1543 = vsub.s32 %v1540, %v1542
      %v1544 = vrot.slane %v1536, %v1543
      %v1546 = vunpack.c.l.s4 1934713408
      %v1547 = vunpack.c.0.s8 %v1546
      %v1548 = vlaneseq
      %v1549 = vshrl.u32 %v1548, 7
      %v1550 = vsub.s32 %v1547, %v1549
      %v1551 = vrot.slane %v1537, %v1550
      %v1552 = vcombine.high %v1528, 0.0
      %v1553 = vcombine.high %v1535, 0.0
      %v1554 = vcombine.high %v1544, 0.0
      %v1555 = vcombine.high %v1551, 0.0
      %1557 = vrot.lane.b32.xlu0 %v1484, 16
      %v1558 = vpop.permute.xlu0 %1557
      %1561 = vrot.lane.b32.xlu0 %v1467, 32
      %v1562 = vpop.permute.xlu0 %1561
      %1565 = vrot.lane.b32.xlu0 %v1485, 48
      %v1566 = vpop.permute.xlu0 %1565
      %1569 = vrot.lane.b32.xlu0 %v1476, 64
      %v1570 = vpop.permute.xlu0 %1569
      %1573 = vrot.lane.b32.xlu0 %v1486, 80
      %v1574 = vpop.permute.xlu0 %1573
      %1577 = vrot.lane.b32.xlu0 %v1483, 96
      %v1578 = vpop.permute.xlu0 %1577
      %1581 = vrot.lane.b32.xlu0 %v1487, 112
      %v1582 = vpop.permute.xlu0 %1581
      %1585 = vrot.lane.b32.xlu0 %v1552, 16
      %v1586 = vpop.permute.xlu0 %1585
      %1589 = vrot.lane.b32.xlu0 %v1535, 32
      %v1590 = vpop.permute.xlu0 %1589
      %1593 = vrot.lane.b32.xlu0 %v1553, 48
      %v1594 = vpop.permute.xlu0 %1593
      %1597 = vrot.lane.b32.xlu0 %v1544, 64
      %v1598 = vpop.permute.xlu0 %1597
      %1601 = vrot.lane.b32.xlu0 %v1554, 80
      %v1602 = vpop.permute.xlu0 %1601
      %1605 = vrot.lane.b32.xlu0 %v1551, 96
      %v1606 = vpop.permute.xlu0 %1605
      %1609 = vrot.lane.b32.xlu0 %v1555, 112
      %v1610 = vpop.permute.xlu0 %1609
      %v1612 = vsel %vm438, %v1460, %v1558
      %v1613 = vsel %vm440, %v1612, %v1562
      %v1614 = vsel %vm442, %v1613, %v1566
      %v1615 = vsel %vm444, %v1614, %v1570
      %v1616 = vsel %vm446, %v1615, %v1574
      %v1617 = vsel %vm448, %v1616, %v1578
      %v1618 = vsel %vm450, %v1617, %v1582
      %v1619 = vsel %vm438, %v1528, %v1586
      %v1620 = vsel %vm440, %v1619, %v1590
      %v1621 = vsel %vm442, %v1620, %v1594
      %v1622 = vsel %vm444, %v1621, %v1598
      %v1623 = vsel %vm446, %v1622, %v1602
      %v1624 = vsel %vm448, %v1623, %v1606
      %v1625 = vsel %vm450, %v1624, %v1610
      %vm1626 = vcmask 1045504
      %v1627 = vrot.slane %v234, 2
      %v1628 = vrot.slane %v235, 2
      %v1629 = vsel %vm1626, %v1627, %v1628
      %v1630 = vrot.slane %v236, 2
      %v1631 = vsel %vm1626, %v1628, %v1630
      %v1632 = vrot.slane %v237, 2
      %v1633 = vrot.slane %v238, 2
      %v1634 = vsel %vm1626, %v1632, %v1633
      %v1635 = vrot.slane %v239, 2
      %v1636 = vsel %vm1626, %v1633, %v1635
      %v1637 = vrot.slane %v240, 2
      %v1638 = vrot.slane %v241, 2
      %v1639 = vsel %vm1626, %v1637, %v1638
      %v1640 = vrot.slane %v242, 2
      %v1641 = vsel %vm1626, %v1638, %v1640
      %v1642 = vrot.slane %v243, 2
      %v1643 = vrot.slane %v244, 2
      %v1644 = vsel %vm1626, %v1642, %v1643
      %v1645 = vrot.slane %v245, 2
      %v1646 = vsel %vm1626, %v1643, %v1645
      %v1655 = vcombine.low %v1629, %v1639
      %v1656 = vcombine.high %v1629, %v1639
      %v1658 = vunpack.c.l.s4 1983009808
      %v1659 = vunpack.c.0.s8 %v1658
      %v1660 = vlaneseq
      %v1661 = vshrl.u32 %v1660, 7
      %v1662 = vsub.s32 %v1659, %v1661
      %v1663 = vrot.slane %v1655, %v1662
      %v1665 = vunpack.c.l.s4 1983009808
      %v1666 = vunpack.c.0.s8 %v1665
      %v1667 = vlaneseq
      %v1668 = vshrl.u32 %v1667, 7
      %v1669 = vsub.s32 %v1666, %v1668
      %v1670 = vrot.slane %v1656, %v1669
      %v1671 = vcombine.low %v1634, %v1644
      %v1672 = vcombine.high %v1634, %v1644
      %v1674 = vunpack.c.l.s4 1983009808
      %v1675 = vunpack.c.0.s8 %v1674
      %v1676 = vlaneseq
      %v1677 = vshrl.u32 %v1676, 7
      %v1678 = vsub.s32 %v1675, %v1677
      %v1679 = vrot.slane %v1671, %v1678
      %v1681 = vunpack.c.l.s4 1983009808
      %v1682 = vunpack.c.0.s8 %v1681
      %v1683 = vlaneseq
      %v1684 = vshrl.u32 %v1683, 7
      %v1685 = vsub.s32 %v1682, %v1684
      %v1686 = vrot.slane %v1672, %v1685
      %v1687 = vcombine.low %v1663, %v1679
      %v1688 = vcombine.high %v1663, %v1679
      %v1690 = vunpack.c.l.s4 1934713408
      %v1691 = vunpack.c.0.s8 %v1690
      %v1692 = vlaneseq
      %v1693 = vshrl.u32 %v1692, 7
      %v1694 = vsub.s32 %v1691, %v1693
      %v1695 = vrot.slane %v1687, %v1694
      %v1697 = vunpack.c.l.s4 1934713408
      %v1698 = vunpack.c.0.s8 %v1697
      %v1699 = vlaneseq
      %v1700 = vshrl.u32 %v1699, 7
      %v1701 = vsub.s32 %v1698, %v1700
      %v1702 = vrot.slane %v1688, %v1701
      %v1703 = vcombine.low %v1670, %v1686
      %v1704 = vcombine.high %v1670, %v1686
      %v1706 = vunpack.c.l.s4 1934713408
      %v1707 = vunpack.c.0.s8 %v1706
      %v1708 = vlaneseq
      %v1709 = vshrl.u32 %v1708, 7
      %v1710 = vsub.s32 %v1707, %v1709
      %v1711 = vrot.slane %v1703, %v1710
      %v1713 = vunpack.c.l.s4 1934713408
      %v1714 = vunpack.c.0.s8 %v1713
      %v1715 = vlaneseq
      %v1716 = vshrl.u32 %v1715, 7
      %v1717 = vsub.s32 %v1714, %v1716
      %v1718 = vrot.slane %v1704, %v1717
      %v1719 = vcombine.high %v1695, 0.0
      %v1720 = vcombine.high %v1702, 0.0
      %v1721 = vcombine.high %v1711, 0.0
      %v1722 = vcombine.high %v1718, 0.0
      %v1723 = vcombine.low %v1631, %v1641
      %v1724 = vcombine.high %v1631, %v1641
      %v1726 = vunpack.c.l.s4 1983009808
      %v1727 = vunpack.c.0.s8 %v1726
      %v1728 = vlaneseq
      %v1729 = vshrl.u32 %v1728, 7
      %v1730 = vsub.s32 %v1727, %v1729
      %v1731 = vrot.slane %v1723, %v1730
      %v1733 = vunpack.c.l.s4 1983009808
      %v1734 = vunpack.c.0.s8 %v1733
      %v1735 = vlaneseq
      %v1736 = vshrl.u32 %v1735, 7
      %v1737 = vsub.s32 %v1734, %v1736
      %v1738 = vrot.slane %v1724, %v1737
      %v1739 = vcombine.low %v1636, %v1646
      %v1740 = vcombine.high %v1636, %v1646
      %v1742 = vunpack.c.l.s4 1983009808
      %v1743 = vunpack.c.0.s8 %v1742
      %v1744 = vlaneseq
      %v1745 = vshrl.u32 %v1744, 7
      %v1746 = vsub.s32 %v1743, %v1745
      %v1747 = vrot.slane %v1739, %v1746
      %v1749 = vunpack.c.l.s4 1983009808
      %v1750 = vunpack.c.0.s8 %v1749
      %v1751 = vlaneseq
      %v1752 = vshrl.u32 %v1751, 7
      %v1753 = vsub.s32 %v1750, %v1752
      %v1754 = vrot.slane %v1740, %v1753
      %v1755 = vcombine.low %v1731, %v1747
      %v1756 = vcombine.high %v1731, %v1747
      %v1758 = vunpack.c.l.s4 1934713408
      %v1759 = vunpack.c.0.s8 %v1758
      %v1760 = vlaneseq
      %v1761 = vshrl.u32 %v1760, 7
      %v1762 = vsub.s32 %v1759, %v1761
      %v1763 = vrot.slane %v1755, %v1762
      %v1765 = vunpack.c.l.s4 1934713408
      %v1766 = vunpack.c.0.s8 %v1765
      %v1767 = vlaneseq
      %v1768 = vshrl.u32 %v1767, 7
      %v1769 = vsub.s32 %v1766, %v1768
      %v1770 = vrot.slane %v1756, %v1769
      %v1771 = vcombine.low %v1738, %v1754
      %v1772 = vcombine.high %v1738, %v1754
      %v1774 = vunpack.c.l.s4 1934713408
      %v1775 = vunpack.c.0.s8 %v1774
      %v1776 = vlaneseq
      %v1777 = vshrl.u32 %v1776, 7
      %v1778 = vsub.s32 %v1775, %v1777
      %v1779 = vrot.slane %v1771, %v1778
      %v1781 = vunpack.c.l.s4 1934713408
      %v1782 = vunpack.c.0.s8 %v1781
      %v1783 = vlaneseq
      %v1784 = vshrl.u32 %v1783, 7
      %v1785 = vsub.s32 %v1782, %v1784
      %v1786 = vrot.slane %v1772, %v1785
      %v1787 = vcombine.high %v1763, 0.0
      %v1788 = vcombine.high %v1770, 0.0
      %v1789 = vcombine.high %v1779, 0.0
      %v1790 = vcombine.high %v1786, 0.0
      %1792 = vrot.lane.b32.xlu0 %v1719, 16
      %v1793 = vpop.permute.xlu0 %1792
      %1796 = vrot.lane.b32.xlu0 %v1702, 32
      %v1797 = vpop.permute.xlu0 %1796
      %1800 = vrot.lane.b32.xlu0 %v1720, 48
      %v1801 = vpop.permute.xlu0 %1800
      %1804 = vrot.lane.b32.xlu0 %v1711, 64
      %v1805 = vpop.permute.xlu0 %1804
      %1808 = vrot.lane.b32.xlu0 %v1721, 80
      %v1809 = vpop.permute.xlu0 %1808
      %1812 = vrot.lane.b32.xlu0 %v1718, 96
      %v1813 = vpop.permute.xlu0 %1812
      %1816 = vrot.lane.b32.xlu0 %v1722, 112
      %v1817 = vpop.permute.xlu0 %1816
      %1820 = vrot.lane.b32.xlu0 %v1787, 16
      %v1821 = vpop.permute.xlu0 %1820
      %1824 = vrot.lane.b32.xlu0 %v1770, 32
      %v1825 = vpop.permute.xlu0 %1824
      %1828 = vrot.lane.b32.xlu0 %v1788, 48
      %v1829 = vpop.permute.xlu0 %1828
      %1832 = vrot.lane.b32.xlu0 %v1779, 64
      %v1833 = vpop.permute.xlu0 %1832
      %1836 = vrot.lane.b32.xlu0 %v1789, 80
      %v1837 = vpop.permute.xlu0 %1836
      %1840 = vrot.lane.b32.xlu0 %v1786, 96
      %v1841 = vpop.permute.xlu0 %1840
      %1844 = vrot.lane.b32.xlu0 %v1790, 112
      %v1845 = vpop.permute.xlu0 %1844
      %v1847 = vsel %vm438, %v1695, %v1793
      %v1848 = vsel %vm440, %v1847, %v1797
      %v1849 = vsel %vm442, %v1848, %v1801
      %v1850 = vsel %vm444, %v1849, %v1805
      %v1851 = vsel %vm446, %v1850, %v1809
      %v1852 = vsel %vm448, %v1851, %v1813
      %v1853 = vsel %vm450, %v1852, %v1817
      %v1854 = vsel %vm438, %v1763, %v1821
      %v1855 = vsel %vm440, %v1854, %v1825
      %v1856 = vsel %vm442, %v1855, %v1829
      %v1857 = vsel %vm444, %v1856, %v1833
      %v1858 = vsel %vm446, %v1857, %v1837
      %v1859 = vsel %vm448, %v1858, %v1841
      %v1860 = vsel %vm450, %v1859, %v1845
      %1861 = vrot.lane.b32.xlu0 %v1629, 127
      %v1862 = vpop.permute.xlu0 %1861
      %1863 = vrot.lane.b32.xlu0 %v1631, 127
      %v1864 = vpop.permute.xlu0 %1863
      %1865 = vrot.lane.b32.xlu0 %v1634, 127
      %v1866 = vpop.permute.xlu0 %1865
      %1867 = vrot.lane.b32.xlu0 %v1636, 127
      %v1868 = vpop.permute.xlu0 %1867
      %1869 = vrot.lane.b32.xlu0 %v1639, 127
      %v1870 = vpop.permute.xlu0 %1869
      %1871 = vrot.lane.b32.xlu0 %v1641, 127
      %v1872 = vpop.permute.xlu0 %1871
      %1873 = vrot.lane.b32.xlu0 %v1644, 127
      %v1874 = vpop.permute.xlu0 %1873
      %1875 = vrot.lane.b32.xlu0 %v1646, 127
      %v1876 = vpop.permute.xlu0 %1875
      %v1885 = vcombine.low %v1862, %v1870
      %v1886 = vcombine.high %v1862, %v1870
      %v1888 = vunpack.c.l.s4 1983009808
      %v1889 = vunpack.c.0.s8 %v1888
      %v1890 = vlaneseq
      %v1891 = vshrl.u32 %v1890, 7
      %v1892 = vsub.s32 %v1889, %v1891
      %v1893 = vrot.slane %v1885, %v1892
      %v1895 = vunpack.c.l.s4 1983009808
      %v1896 = vunpack.c.0.s8 %v1895
      %v1897 = vlaneseq
      %v1898 = vshrl.u32 %v1897, 7
      %v1899 = vsub.s32 %v1896, %v1898
      %v1900 = vrot.slane %v1886, %v1899
      %v1901 = vcombine.low %v1866, %v1874
      %v1902 = vcombine.high %v1866, %v1874
      %v1904 = vunpack.c.l.s4 1983009808
      %v1905 = vunpack.c.0.s8 %v1904
      %v1906 = vlaneseq
      %v1907 = vshrl.u32 %v1906, 7
      %v1908 = vsub.s32 %v1905, %v1907
      %v1909 = vrot.slane %v1901, %v1908
      %v1911 = vunpack.c.l.s4 1983009808
      %v1912 = vunpack.c.0.s8 %v1911
      %v1913 = vlaneseq
      %v1914 = vshrl.u32 %v1913, 7
      %v1915 = vsub.s32 %v1912, %v1914
      %v1916 = vrot.slane %v1902, %v1915
      %v1917 = vcombine.low %v1893, %v1909
      %v1918 = vcombine.high %v1893, %v1909
      %v1920 = vunpack.c.l.s4 1934713408
      %v1921 = vunpack.c.0.s8 %v1920
      %v1922 = vlaneseq
      %v1923 = vshrl.u32 %v1922, 7
      %v1924 = vsub.s32 %v1921, %v1923
      %v1925 = vrot.slane %v1917, %v1924
      %v1927 = vunpack.c.l.s4 1934713408
      %v1928 = vunpack.c.0.s8 %v1927
      %v1929 = vlaneseq
      %v1930 = vshrl.u32 %v1929, 7
      %v1931 = vsub.s32 %v1928, %v1930
      %v1932 = vrot.slane %v1918, %v1931
      %v1933 = vcombine.low %v1900, %v1916
      %v1934 = vcombine.high %v1900, %v1916
      %v1936 = vunpack.c.l.s4 1934713408
      %v1937 = vunpack.c.0.s8 %v1936
      %v1938 = vlaneseq
      %v1939 = vshrl.u32 %v1938, 7
      %v1940 = vsub.s32 %v1937, %v1939
      %v1941 = vrot.slane %v1933, %v1940
      %v1943 = vunpack.c.l.s4 1934713408
      %v1944 = vunpack.c.0.s8 %v1943
      %v1945 = vlaneseq
      %v1946 = vshrl.u32 %v1945, 7
      %v1947 = vsub.s32 %v1944, %v1946
      %v1948 = vrot.slane %v1934, %v1947
      %v1949 = vcombine.high %v1925, 0.0
      %v1950 = vcombine.high %v1932, 0.0
      %v1951 = vcombine.high %v1941, 0.0
      %v1952 = vcombine.high %v1948, 0.0
      %v1953 = vcombine.low %v1864, %v1872
      %v1954 = vcombine.high %v1864, %v1872
      %v1956 = vunpack.c.l.s4 1983009808
      %v1957 = vunpack.c.0.s8 %v1956
      %v1958 = vlaneseq
      %v1959 = vshrl.u32 %v1958, 7
      %v1960 = vsub.s32 %v1957, %v1959
      %v1961 = vrot.slane %v1953, %v1960
      %v1963 = vunpack.c.l.s4 1983009808
      %v1964 = vunpack.c.0.s8 %v1963
      %v1965 = vlaneseq
      %v1966 = vshrl.u32 %v1965, 7
      %v1967 = vsub.s32 %v1964, %v1966
      %v1968 = vrot.slane %v1954, %v1967
      %v1969 = vcombine.low %v1868, %v1876
      %v1970 = vcombine.high %v1868, %v1876
      %v1972 = vunpack.c.l.s4 1983009808
      %v1973 = vunpack.c.0.s8 %v1972
      %v1974 = vlaneseq
      %v1975 = vshrl.u32 %v1974, 7
      %v1976 = vsub.s32 %v1973, %v1975
      %v1977 = vrot.slane %v1969, %v1976
      %v1979 = vunpack.c.l.s4 1983009808
      %v1980 = vunpack.c.0.s8 %v1979
      %v1981 = vlaneseq
      %v1982 = vshrl.u32 %v1981, 7
      %v1983 = vsub.s32 %v1980, %v1982
      %v1984 = vrot.slane %v1970, %v1983
      %v1985 = vcombine.low %v1961, %v1977
      %v1986 = vcombine.high %v1961, %v1977
      %v1988 = vunpack.c.l.s4 1934713408
      %v1989 = vunpack.c.0.s8 %v1988
      %v1990 = vlaneseq
      %v1991 = vshrl.u32 %v1990, 7
      %v1992 = vsub.s32 %v1989, %v1991
      %v1993 = vrot.slane %v1985, %v1992
      %v1995 = vunpack.c.l.s4 1934713408
      %v1996 = vunpack.c.0.s8 %v1995
      %v1997 = vlaneseq
      %v1998 = vshrl.u32 %v1997, 7
      %v1999 = vsub.s32 %v1996, %v1998
      %v2000 = vrot.slane %v1986, %v1999
      %v2001 = vcombine.low %v1968, %v1984
      %v2002 = vcombine.high %v1968, %v1984
      %v2004 = vunpack.c.l.s4 1934713408
      %v2005 = vunpack.c.0.s8 %v2004
      %v2006 = vlaneseq
      %v2007 = vshrl.u32 %v2006, 7
      %v2008 = vsub.s32 %v2005, %v2007
      %v2009 = vrot.slane %v2001, %v2008
      %v2011 = vunpack.c.l.s4 1934713408
      %v2012 = vunpack.c.0.s8 %v2011
      %v2013 = vlaneseq
      %v2014 = vshrl.u32 %v2013, 7
      %v2015 = vsub.s32 %v2012, %v2014
      %v2016 = vrot.slane %v2002, %v2015
      %v2017 = vcombine.high %v1993, 0.0
      %v2018 = vcombine.high %v2000, 0.0
      %v2019 = vcombine.high %v2009, 0.0
      %v2020 = vcombine.high %v2016, 0.0
      %2022 = vrot.lane.b32.xlu0 %v1949, 16
      %v2023 = vpop.permute.xlu0 %2022
      %2026 = vrot.lane.b32.xlu0 %v1932, 32
      %v2027 = vpop.permute.xlu0 %2026
      %2030 = vrot.lane.b32.xlu0 %v1950, 48
      %v2031 = vpop.permute.xlu0 %2030
      %2034 = vrot.lane.b32.xlu0 %v1941, 64
      %v2035 = vpop.permute.xlu0 %2034
      %2038 = vrot.lane.b32.xlu0 %v1951, 80
      %v2039 = vpop.permute.xlu0 %2038
      %2042 = vrot.lane.b32.xlu0 %v1948, 96
      %v2043 = vpop.permute.xlu0 %2042
      %2046 = vrot.lane.b32.xlu0 %v1952, 112
      %v2047 = vpop.permute.xlu0 %2046
      %2050 = vrot.lane.b32.xlu0 %v2017, 16
      %v2051 = vpop.permute.xlu0 %2050
      %2054 = vrot.lane.b32.xlu0 %v2000, 32
      %v2055 = vpop.permute.xlu0 %2054
      %2058 = vrot.lane.b32.xlu0 %v2018, 48
      %v2059 = vpop.permute.xlu0 %2058
      %2062 = vrot.lane.b32.xlu0 %v2009, 64
      %v2063 = vpop.permute.xlu0 %2062
      %2066 = vrot.lane.b32.xlu0 %v2019, 80
      %v2067 = vpop.permute.xlu0 %2066
      %2070 = vrot.lane.b32.xlu0 %v2016, 96
      %v2071 = vpop.permute.xlu0 %2070
      %2074 = vrot.lane.b32.xlu0 %v2020, 112
      %v2075 = vpop.permute.xlu0 %2074
      %v2077 = vsel %vm438, %v1925, %v2023
      %v2078 = vsel %vm440, %v2077, %v2027
      %v2079 = vsel %vm442, %v2078, %v2031
      %v2080 = vsel %vm444, %v2079, %v2035
      %v2081 = vsel %vm446, %v2080, %v2039
      %v2082 = vsel %vm448, %v2081, %v2043
      %v2083 = vsel %vm450, %v2082, %v2047
      %v2084 = vsel %vm438, %v1993, %v2051
      %v2085 = vsel %vm440, %v2084, %v2055
      %v2086 = vsel %vm442, %v2085, %v2059
      %v2087 = vsel %vm444, %v2086, %v2063
      %v2088 = vsel %vm446, %v2087, %v2067
      %v2089 = vsel %vm448, %v2088, %v2071
      %v2090 = vsel %vm450, %v2089, %v2075
      %2091 = vrot.lane.b32.xlu0 %v1629, 126
      %v2092 = vpop.permute.xlu0 %2091
      %2093 = vrot.lane.b32.xlu0 %v1631, 126
      %v2094 = vpop.permute.xlu0 %2093
      %2095 = vrot.lane.b32.xlu0 %v1634, 126
      %v2096 = vpop.permute.xlu0 %2095
      %2097 = vrot.lane.b32.xlu0 %v1636, 126
      %v2098 = vpop.permute.xlu0 %2097
      %2099 = vrot.lane.b32.xlu0 %v1639, 126
      %v2100 = vpop.permute.xlu0 %2099
      %2101 = vrot.lane.b32.xlu0 %v1641, 126
      %v2102 = vpop.permute.xlu0 %2101
      %2103 = vrot.lane.b32.xlu0 %v1644, 126
      %v2104 = vpop.permute.xlu0 %2103
      %2105 = vrot.lane.b32.xlu0 %v1646, 126
      %v2106 = vpop.permute.xlu0 %2105
      %v2115 = vcombine.low %v2092, %v2100
      %v2116 = vcombine.high %v2092, %v2100
      %v2118 = vunpack.c.l.s4 1983009808
      %v2119 = vunpack.c.0.s8 %v2118
      %v2120 = vlaneseq
      %v2121 = vshrl.u32 %v2120, 7
      %v2122 = vsub.s32 %v2119, %v2121
      %v2123 = vrot.slane %v2115, %v2122
      %v2125 = vunpack.c.l.s4 1983009808
      %v2126 = vunpack.c.0.s8 %v2125
      %v2127 = vlaneseq
      %v2128 = vshrl.u32 %v2127, 7
      %v2129 = vsub.s32 %v2126, %v2128
      %v2130 = vrot.slane %v2116, %v2129
      %v2131 = vcombine.low %v2096, %v2104
      %v2132 = vcombine.high %v2096, %v2104
      %v2134 = vunpack.c.l.s4 1983009808
      %v2135 = vunpack.c.0.s8 %v2134
      %v2136 = vlaneseq
      %v2137 = vshrl.u32 %v2136, 7
      %v2138 = vsub.s32 %v2135, %v2137
      %v2139 = vrot.slane %v2131, %v2138
      %v2141 = vunpack.c.l.s4 1983009808
      %v2142 = vunpack.c.0.s8 %v2141
      %v2143 = vlaneseq
      %v2144 = vshrl.u32 %v2143, 7
      %v2145 = vsub.s32 %v2142, %v2144
      %v2146 = vrot.slane %v2132, %v2145
      %v2147 = vcombine.low %v2123, %v2139
      %v2148 = vcombine.high %v2123, %v2139
      %v2150 = vunpack.c.l.s4 1934713408
      %v2151 = vunpack.c.0.s8 %v2150
      %v2152 = vlaneseq
      %v2153 = vshrl.u32 %v2152, 7
      %v2154 = vsub.s32 %v2151, %v2153
      %v2155 = vrot.slane %v2147, %v2154
      %v2157 = vunpack.c.l.s4 1934713408
      %v2158 = vunpack.c.0.s8 %v2157
      %v2159 = vlaneseq
      %v2160 = vshrl.u32 %v2159, 7
      %v2161 = vsub.s32 %v2158, %v2160
      %v2162 = vrot.slane %v2148, %v2161
      %v2163 = vcombine.low %v2130, %v2146
      %v2164 = vcombine.high %v2130, %v2146
      %v2166 = vunpack.c.l.s4 1934713408
      %v2167 = vunpack.c.0.s8 %v2166
      %v2168 = vlaneseq
      %v2169 = vshrl.u32 %v2168, 7
      %v2170 = vsub.s32 %v2167, %v2169
      %v2171 = vrot.slane %v2163, %v2170
      %v2173 = vunpack.c.l.s4 1934713408
      %v2174 = vunpack.c.0.s8 %v2173
      %v2175 = vlaneseq
      %v2176 = vshrl.u32 %v2175, 7
      %v2177 = vsub.s32 %v2174, %v2176
      %v2178 = vrot.slane %v2164, %v2177
      %v2179 = vcombine.high %v2155, 0.0
      %v2180 = vcombine.high %v2162, 0.0
      %v2181 = vcombine.high %v2171, 0.0
      %v2182 = vcombine.high %v2178, 0.0
      %v2183 = vcombine.low %v2094, %v2102
      %v2184 = vcombine.high %v2094, %v2102
      %v2186 = vunpack.c.l.s4 1983009808
      %v2187 = vunpack.c.0.s8 %v2186
      %v2188 = vlaneseq
      %v2189 = vshrl.u32 %v2188, 7
      %v2190 = vsub.s32 %v2187, %v2189
      %v2191 = vrot.slane %v2183, %v2190
      %v2193 = vunpack.c.l.s4 1983009808
      %v2194 = vunpack.c.0.s8 %v2193
      %v2195 = vlaneseq
      %v2196 = vshrl.u32 %v2195, 7
      %v2197 = vsub.s32 %v2194, %v2196
      %v2198 = vrot.slane %v2184, %v2197
      %v2199 = vcombine.low %v2098, %v2106
      %v2200 = vcombine.high %v2098, %v2106
      %v2202 = vunpack.c.l.s4 1983009808
      %v2203 = vunpack.c.0.s8 %v2202
      %v2204 = vlaneseq
      %v2205 = vshrl.u32 %v2204, 7
      %v2206 = vsub.s32 %v2203, %v2205
      %v2207 = vrot.slane %v2199, %v2206
      %v2209 = vunpack.c.l.s4 1983009808
      %v2210 = vunpack.c.0.s8 %v2209
      %v2211 = vlaneseq
      %v2212 = vshrl.u32 %v2211, 7
      %v2213 = vsub.s32 %v2210, %v2212
      %v2214 = vrot.slane %v2200, %v2213
      %v2215 = vcombine.low %v2191, %v2207
      %v2216 = vcombine.high %v2191, %v2207
      %v2218 = vunpack.c.l.s4 1934713408
      %v2219 = vunpack.c.0.s8 %v2218
      %v2220 = vlaneseq
      %v2221 = vshrl.u32 %v2220, 7
      %v2222 = vsub.s32 %v2219, %v2221
      %v2223 = vrot.slane %v2215, %v2222
      %v2225 = vunpack.c.l.s4 1934713408
      %v2226 = vunpack.c.0.s8 %v2225
      %v2227 = vlaneseq
      %v2228 = vshrl.u32 %v2227, 7
      %v2229 = vsub.s32 %v2226, %v2228
      %v2230 = vrot.slane %v2216, %v2229
      %v2231 = vcombine.low %v2198, %v2214
      %v2232 = vcombine.high %v2198, %v2214
      %v2234 = vunpack.c.l.s4 1934713408
      %v2235 = vunpack.c.0.s8 %v2234
      %v2236 = vlaneseq
      %v2237 = vshrl.u32 %v2236, 7
      %v2238 = vsub.s32 %v2235, %v2237
      %v2239 = vrot.slane %v2231, %v2238
      %v2241 = vunpack.c.l.s4 1934713408
      %v2242 = vunpack.c.0.s8 %v2241
      %v2243 = vlaneseq
      %v2244 = vshrl.u32 %v2243, 7
      %v2245 = vsub.s32 %v2242, %v2244
      %v2246 = vrot.slane %v2232, %v2245
      %v2247 = vcombine.high %v2223, 0.0
      %v2248 = vcombine.high %v2230, 0.0
      %v2249 = vcombine.high %v2239, 0.0
      %v2250 = vcombine.high %v2246, 0.0
      %2252 = vrot.lane.b32.xlu0 %v2179, 16
      %v2253 = vpop.permute.xlu0 %2252
      %2256 = vrot.lane.b32.xlu0 %v2162, 32
      %v2257 = vpop.permute.xlu0 %2256
      %2260 = vrot.lane.b32.xlu0 %v2180, 48
      %v2261 = vpop.permute.xlu0 %2260
      %2264 = vrot.lane.b32.xlu0 %v2171, 64
      %v2265 = vpop.permute.xlu0 %2264
      %2268 = vrot.lane.b32.xlu0 %v2181, 80
      %v2269 = vpop.permute.xlu0 %2268
      %2272 = vrot.lane.b32.xlu0 %v2178, 96
      %v2273 = vpop.permute.xlu0 %2272
      %2276 = vrot.lane.b32.xlu0 %v2182, 112
      %v2277 = vpop.permute.xlu0 %2276
      %2280 = vrot.lane.b32.xlu0 %v2247, 16
      %v2281 = vpop.permute.xlu0 %2280
      %2284 = vrot.lane.b32.xlu0 %v2230, 32
      %v2285 = vpop.permute.xlu0 %2284
      %2288 = vrot.lane.b32.xlu0 %v2248, 48
      %v2289 = vpop.permute.xlu0 %2288
      %2292 = vrot.lane.b32.xlu0 %v2239, 64
      %v2293 = vpop.permute.xlu0 %2292
      %2296 = vrot.lane.b32.xlu0 %v2249, 80
      %v2297 = vpop.permute.xlu0 %2296
      %2300 = vrot.lane.b32.xlu0 %v2246, 96
      %v2301 = vpop.permute.xlu0 %2300
      %2304 = vrot.lane.b32.xlu0 %v2250, 112
      %v2305 = vpop.permute.xlu0 %2304
      %v2307 = vsel %vm438, %v2155, %v2253
      %v2308 = vsel %vm440, %v2307, %v2257
      %v2309 = vsel %vm442, %v2308, %v2261
      %v2310 = vsel %vm444, %v2309, %v2265
      %v2311 = vsel %vm446, %v2310, %v2269
      %v2312 = vsel %vm448, %v2311, %v2273
      %v2313 = vsel %vm450, %v2312, %v2277
      %v2314 = vsel %vm438, %v2223, %v2281
      %v2315 = vsel %vm440, %v2314, %v2285
      %v2316 = vsel %vm442, %v2315, %v2289
      %v2317 = vsel %vm444, %v2316, %v2293
      %v2318 = vsel %vm446, %v2317, %v2297
      %v2319 = vsel %vm448, %v2318, %v2301
      %v2320 = vsel %vm450, %v2319, %v2305
      %v2323 = vrot.slane %v689, 4
      %v2324 = vrot.slane %v696, 4
      %v2329 = vrot.slane %v1158, 4
      %v2330 = vrot.slane %v1165, 4
      %v2335 = vrot.slane %v1618, 4
      %v2336 = vrot.slane %v1625, 4
      %v2341 = vrot.slane %v2083, 4
      %v2342 = vrot.slane %v2090, 4
      %vm2345 = vcmask 1043456
      %v2346 = vsel %vm2345, %v451, %v2323
      %v2347 = vsel %vm2345, %v458, %v2324
      %v2348 = vsel %vm2345, %v919, %v2329
      %v2349 = vsel %vm2345, %v926, %v2330
      %v2350 = vsel %vm2345, %v1388, %v2335
      %v2351 = vsel %vm2345, %v1395, %v2336
      %v2352 = vsel %vm2345, %v1853, %v2341
      %v2353 = vsel %vm2345, %v1860, %v2342
      %v2354 = vld [vmem:[%s1] sm:$0xff]
      %v2355 = vld [vmem:[%s2] sm:$0xff]
      %2357 = vset.pattern.permute.xlu0 0
      %2358 = vperm.xlu0 %2357, %v2355
      %v2359 = vpop.permute.xlu0 %2358
      %vm2361 = vcmask 293888
      %v2363 = vsel %vm2361, %v2354, 0
      %v2366 = vsel %vm2345, %v2313, 0
      %v2369 = vsel %vm2345, %v2320, 0
      %2371 = vmatprep.subr.mxu0 %v2347
      %2372 = vmatpush1.msra.mxu0 %v2346
      %2373 = vmatprep.subr.mxu0 %v2349
      %2374 = vmatpush1.msra.mxu0 %v2348
      %2375 = vmatprep.subr.mxu0 %v2351
      %2376 = vmatpush1.msra.mxu0 %v2350
      %2377 = vmatprep.subr.mxu0 %v2353
      %2378 = vmatpush1.msra.mxu0 %v2352
      %2379 = vmatprep.subr.mxu0 %v2369
      %2380 = vmatpush1.msra.mxu0 %v2366
      %2381 = vmatprep.subr.mxu0 0.0
      %2382 = vmatpush1.msra.mxu0 0.0
      %2383 = vmatprep.subr.mxu0 0.0
      %2384 = vmatpush1.msra.mxu0 0.0
      %2385 = vmatprep.subr.mxu0 0.0
      %2386 = vmatpush1.msra.mxu0 0.0
      %2387 = vmatprep.subr.mxu0 0.0
      %2388 = vmatpush1.msra.mxu0 0.0
      %2389 = vmatprep.subr.mxu0 0.0
      %2390 = vmatpush1.msra.mxu0 0.0
      %2391 = vmatprep.subr.mxu0 0.0
      %2392 = vmatpush1.msra.mxu0 0.0
      %2393 = vmatprep.subr.mxu0 0.0
      %2394 = vmatpush1.msra.mxu0 0.0
      %2395 = vmatprep.subr.mxu0 0.0
      %2396 = vmatpush1.msra.mxu0 0.0
      %2397 = vmatprep.subr.mxu0 0.0
      %2398 = vmatpush1.msra.mxu0 0.0
      %2399 = vmatprep.subr.mxu0 0.0
      %2400 = vmatpush1.msra.mxu0 0.0
      %2401 = vmatprep.subr.mxu0 0.0
      %2402 = vmatpush1.msra.mxu0 0.0
      %2403 = vmatprep.subr.mxu0 0.0
      %2404 = vmatpush1.msra.mxu0 0.0
      %2405 = vmatprep.subr.mxu0 0.0
      %2406 = vmatpush1.msra.mxu0 0.0
      %2407 = vmatprep.subr.mxu0 0.0
      %2408 = vmatpush1.msra.mxu0 0.0
      %2409 = vmatprep.subr.mxu0 0.0
      %2410 = vmatpush1.msra.mxu0 0.0
      %2411 = vmatprep.subr.mxu0 0.0
      %2412 = vmatpush1.msra.mxu0 0.0
      %2413 = vmatprep.subr.mxu0 0.0
      %2414 = vmatpush1.msra.mxu0 0.0
      %2415 = vmatprep.subr.mxu0 0.0
      %2416 = vmatpush1.msra.mxu0 0.0
      %2417 = vmatprep.subr.mxu0 0.0
      %2418 = vmatpush1.msra.mxu0 0.0
      %2419 = vmatprep.subr.mxu0 0.0
      %2420 = vmatpush1.msra.mxu0 0.0
      %2421 = vmatprep.subr.mxu0 0.0
      %2422 = vmatpush1.msra.mxu0 0.0
      %2423 = vmatprep.subr.mxu0 0.0
      %2424 = vmatpush1.msra.mxu0 0.0
      %2425 = vmatprep.subr.mxu0 0.0
      %2426 = vmatpush1.msra.mxu0 0.0
      %2427 = vmatprep.subr.mxu0 0.0
      %2428 = vmatpush1.msra.mxu0 0.0
      %2429 = vmatprep.subr.mxu0 0.0
      %2430 = vmatpush1.msra.mxu0 0.0
      %2431 = vmatprep.subr.mxu0 0.0
      %2432 = vmatpush1.msra.mxu0 0.0
      %2433 = vmatprep.subr.mxu0 0.0
      %2434 = vmatpush1.msra.mxu0 0.0
      %2435 = vmatprep.mubr.f32.mxu0 0.0
      %2436 = vmatmul.mubr.f32.gmra.mrb[0].mxu0 %v2363
      %v2437 = vpop.f32.mrb[0].mxu0
      %v2438 = vadd.f32 %v2359, %v2437
      %v2439 = vpop.f32.mrb[0].mxu0
      %v2440 = vadd.f32 %v2359, %v2439
      %2441 = vdwg.mxu0
      %2442 = vst [vmem:[%s170] sm:$0xff] %v2438
      %2443 = vst [vmem:[%s170 + $0x8] sm:$0xff] %v2440
      %p2444 = scmp.lt.s32.totalorder %s14, 1
      %s2445 = scalar_select %p2444, %s14, 1
      %s2446 = smul.addr %s2445, 2
      %s2447 = smul.addr %s2446, 8
      %s2448 = scalar_lea.vmem %s3, %s2447
      // Predicated region
      $region33: #{conv2d_oni_forward.3} parent=31 // pred_check
        %p2449 = pneg %p100
      $region34: #{conv2d_oni_forward.3} parent=31 // pred_check_branch
        %2451 = sbr.rel (%p2449) target = $region36
      $region35: #{conv2d_oni_forward.3} parent=31 // pred_region
        _
      $region36: #{conv2d_oni_forward.3} parent=31 // pred_fallthru
        _
    $region32: #{conv2d_oni_forward.3} parent=5 // pred_fallthru
      _
    %p2452 = scmp.le.s32.totalorder 2, %s9
    // Predicated region
    $region37: #{conv2d_oni_forward.3} parent=5 // pred_check
      %p2453 = pneg %p2452
    $region38: #{conv2d_oni_forward.3} parent=5 // pred_check_branch
      %2455 = sbr.rel (%p2453) target = $region40
    $region39: #{conv2d_oni_forward.3} parent=5 // pred_region
      %s2456 = ssub.s32 %s9, 2
      // Predicated region
      $region41: #{conv2d_oni_forward.3} parent=39 // pred_check
        %p2457 = pneg %p106
      $region42: #{conv2d_oni_forward.3} parent=39 // pred_check_branch
        %2459 = sbr.rel (%p2457) target = $region44
      $region43: #{conv2d_oni_forward.3} parent=39 // pred_region
        %p2460 = scmp.lt.s32.totalorder %s15, 1
        %s2461 = scalar_select %p2460, %s15, 1
        %s2462 = smul.addr %s2461, 2
        %s2463 = smul.addr %s2462, 8
        %s2464 = scalar_lea.vmem %s3, %s2463
      $region44: #{conv2d_oni_forward.3} parent=39 // pred_fallthru
        _
    $region40: #{conv2d_oni_forward.3} parent=5 // pred_fallthru
      _
  $region6: #{conv2d_oni_forward.3} parent=0 // loop_footer
    %s13 = sadd.s32 1, %s9
  $region7: #{conv2d_oni_forward.3} parent=0 // loop_footer_branch
    %8 = sbr.rel target = $region3
  $region8: #{conv2d_oni_forward.3} parent=0 // loop_exit
    _

</llo_original>
